<compile_context>
chip_gen: v6e
topology: v6e:2x2x1
jax: 0.10.0
libtpu: 0.0.40
codegen_flags: <defaults>
</compile_context>

<pallas_src>
import functools

import numpy as np
import jax
import jax.numpy as jnp
from jax.experimental import pallas as pl
from jax.experimental.pallas import tpu as pltpu


def _round_up(x: int, m: int) -> int:
    return ((x + m - 1) // m) * m


# ------------------------------ Pallas kernel --------------------------------
def _make_dssm_kernel(hidden: int, sub: int, n_sub: int):
    """Per grid step (one TB-row batch tile):
      bias_ref : SMEM (1,)        f32   top-level scalar bias
      x_ref    : VMEM (TB, SumF)  bf16  fused activation tile (banner|user feats)
      w_ref    : VMEM (SumF, 2H)  bf16  resident stacked block-diag weight
      bvec_ref : VMEM (1, 2H)     f32   fused [alpha*banner_bias | user_bias]
      out_ref  : VMEM (1, TB)     f32   lane-dense output tile
    """
    def kernel(bias_ref, x_ref, w_ref, bvec_ref, out_ref):
        w = w_ref[...]            # (SumF, 2H) bf16, tiny & VMEM-resident
        bvec = bvec_ref[...]      # (1, 2H) f32
        bias = bias_ref[0]        # scalar from SMEM

        # Unrolled sub-tile loop with static offsets: decouples the DMA tile
        # (TB rows) from the compute tile (SUB rows) so intermediates stay at
        # (SUB, 2H) f32 (<< vreg file) and the sublane->lane output relayout
        # is spread across sub-tiles instead of piling into an epilogue.
        for s in range(n_sub):
            base = s * sub
            x = x_ref[pl.ds(base, sub), :].astype(jnp.bfloat16)   # no-op if bf16
            # One fused banner+user MXU pass: [xb | xu] @ blockdiag(alpha*Wb, Wu)
            y = jnp.dot(x, w, preferred_element_type=jnp.float32) + bvec
            row = jnp.sum(y[:, :hidden] * y[:, hidden:], axis=1)  # (SUB,) f32
            out_ref[:, pl.ds(base, sub)] = (row + bias).reshape(1, sub)
    return kernel


# --------------------------------- Wrapper ------------------------------------
@functools.partial(jax.jit, static_argnames=("tb", "sub"))
def dssm_pallas(x, w_stack, bvec_row, bias, *, tb=2048, sub=256):
    """x: (B, SumF) bf16/f32 fused activations (banner feats then user feats);
    w_stack: (SumF, 2H) bf16; bvec_row: (1, 2H) f32; bias: (1,) f32.
    Returns (B,) f32."""
    b, sum_f = x.shape
    two_h = bvec_row.shape[1]

    # Tile sizing: big TB to amortize ~0.35us/step overhead, but capped so v7x
    # gets >=2 (preferably even) balanced batch tiles across its 2 TensorCores.
    tb_eff = max(sub, min(_round_up(tb, sub), _round_up(pl.cdiv(b, 2), sub)))
    grid_n = pl.cdiv(b, tb_eff)
    if grid_n > 1 and grid_n % 2:                       # prefer an even tile count
        tb_eff = max(sub, _round_up(pl.cdiv(b, grid_n + 1), sub))
        grid_n = pl.cdiv(b, tb_eff)
    n_sub = tb_eff // sub
    b_pad = grid_n * tb_eff                             # output buffer only; no input pad

    out = pl.pallas_call(
        _make_dssm_kernel(two_h // 2, sub, n_sub),
        out_shape=jax.ShapeDtypeStruct((1, b_pad), jnp.float32),
        grid=(grid_n,),
        in_specs=[
            pl.BlockSpec(memory_space=pltpu.MemorySpace.SMEM),          # bias scalar
            pl.BlockSpec((tb_eff, sum_f), lambda i: (i, 0)),            # activations
            pl.BlockSpec(w_stack.shape, lambda i: (0, 0)),              # resident weight
            pl.BlockSpec((1, two_h), lambda i: (0, 0)),                 # resident bias vec
        ],
        out_specs=pl.BlockSpec((1, tb_eff), lambda i: (0, i)),          # lane-dense out
        compiler_params=pltpu.CompilerParams(
            dimension_semantics=("parallel",),          # shard batch tiles across TCs
            vmem_limit_bytes=32 * 1024 * 1024),         # << 64 MiB v7x physical
    )(bias, x, w_stack, bvec_row)
    return out[0, :b]


# -------------------------- Host-side input/param prep -------------------------
def fuse_features(embedded_inputs, banner_ids, user_ids, dtype=jnp.bfloat16):
    """FeatureOrderHolder selection + torch.cat + bf16 cast for the kernel input.
    # TODO(synk): in production, fuse this select/concat/cast into the upstream
    # embedding producer so the kernel reads a single bf16 matrix straight from HBM
    # (a standalone XLA concat/cast is an extra HBM round trip)."""
    feats = [embedded_inputs[i] for i in banner_ids] + [embedded_inputs[i] for i in user_ids]
    return jnp.concatenate(feats, axis=1).astype(dtype)


def fuse_dssm_params(wb, bb, wu, bu, alpha, top_bias, n_banner_rows, multiout_dims):
    """Transpose PyTorch (out,in) weights, fold the constant MultiOutputNetwork
    columns into the banner bias (exact, float64), fold alpha into the banner half,
    and stack the fused block-diagonal weight into a single bf16 (SumF, 2H) matrix."""
    wb = np.asarray(wb, np.float64); bb = np.asarray(bb, np.float64)
    wu = np.asarray(wu, np.float64); bu = np.asarray(bu, np.float64)
    h = wb.shape[0]
    wb_t, wu_t = wb.T, wu.T                            # (Din_b, H), (Din_u, H)

    # MultiOutputNetwork.forward: full((B, dim), dim) per name, sorted-name order.
    const_vals = []
    for name in sorted(multiout_dims.keys()):
        const_vals.extend([float(multiout_dims[name])] * multiout_dims[name])
    const_row = np.asarray(const_vals, np.float64).reshape(1, -1)
    bb_eff = bb + (const_row @ wb_t[n_banner_rows:, :]).reshape(-1)   # exact f64 fold

    din_u = wu_t.shape[0]
    w_stack = np.zeros((n_banner_rows + din_u, 2 * h), np.float64)
    w_stack[:n_banner_rows, :h] = alpha * wb_t[:n_banner_rows, :]     # [alpha*Wb | 0]
    w_stack[n_banner_rows:, h:] = wu_t                                # [0 | Wu]

    bvec = np.concatenate([alpha * bb_eff, bu]).reshape(1, 2 * h)
    return (jnp.asarray(w_stack, jnp.bfloat16),
            jnp.asarray(bvec, jnp.float32),
            jnp.asarray([float(top_bias)], jnp.float32))


# ------------------------------------ Demo ------------------------------------
if __name__ == "__main__":
    B, FEAT_DIM, H = 600, 16, 32                   # 600 -> 2 batch tiles of 512, no pad
    MULTIOUT_DIMS = {"a": 4, "b": 3}
    banner_ids, user_ids = [0, 1], [2, 3]          # FeatureOrderHolder name->index result

    din_b = FEAT_DIM * len(banner_ids) + sum(MULTIOUT_DIMS.values())   # 39
    din_u = FEAT_DIM * len(user_ids)                                   # 32

    key = jax.random.PRNGKey(0)
    keys = jax.random.split(key, 8)
    embedded = [jax.random.normal(keys[i], (B, FEAT_DIM), jnp.float32) for i in range(4)]

    # PyTorch Linear stores weight as (out_features, in_features).
    wb = 0.1 * jax.random.normal(keys[4], (H, din_b), jnp.float32)
    bb = 0.1 * jax.random.normal(keys[5], (H,), jnp.float32)
    wu = 0.1 * jax.random.normal(keys[6], (H, din_u), jnp.float32)
    bu = 0.1 * jax.random.normal(keys[7], (H,), jnp.float32)
    alpha, top_bias = 0.75, 0.3   # _TopLevelModel parameters (non-trivial values)

    w_stack, bvec, bias_arr = fuse_dssm_params(
        wb, bb, wu, bu, alpha, top_bias,
        n_banner_rows=FEAT_DIM * len(banner_ids), multiout_dims=MULTIOUT_DIMS)

    # "Producer" output: single fused bf16 activation matrix (banner feats | user feats).
    x_fused = fuse_features(embedded, banner_ids, user_ids, dtype=jnp.bfloat16)

    out = dssm_pallas(x_fused, w_stack, bvec, bias_arr, tb=2048, sub=256)
    out = jax.block_until_ready(out)

    # --- bf16-MXU-emulated reference (tight check, same math as the kernel) ---
    x_f32 = x_fused.astype(jnp.float32)
    w_f32 = w_stack.astype(jnp.float32)
    y_ref = jnp.dot(x_f32, w_f32, precision=jax.lax.Precision.HIGHEST) + bvec
    ref_emu = jnp.sum(y_ref[:, :H] * y_ref[:, H:], axis=1) + top_bias

    # --- exact f32 reference of the original PyTorch forward (loose check) ----
    consts = [jnp.full((B, MULTIOUT_DIMS[n]), float(MULTIOUT_DIMS[n]), jnp.float32)
              for n in sorted(MULTIOUT_DIMS)]
    xb = jnp.concatenate([embedded[i] for i in banner_ids] + consts, axis=1)
    xu = jnp.concatenate([embedded[i] for i in user_ids], axis=1)
    banner_ref = jnp.dot(xb, wb.T, precision=jax.lax.Precision.HIGHEST) + bb
    user_ref = jnp.dot(xu, wu.T, precision=jax.lax.Precision.HIGHEST) + bu
    ref_f32 = alpha * jnp.sum(banner_ref * user_ref, axis=1) + top_bias

    assert out.shape == (B,)
    assert jnp.allclose(out, ref_emu, rtol=1e-3, atol=1e-3), \
        float(jnp.max(jnp.abs(out - ref_emu)))
    assert jnp.allclose(out, ref_f32, rtol=1e-1, atol=1e-1), \
        float(jnp.max(jnp.abs(out - ref_f32)))

    print("KERNEL_OK")
</pallas_src>

<mosaic_0001>
module attributes {stable_mosaic.version = 11 : i64} {
  func.func @kernel(%arg0: i32, %arg1: memref<1xf32, #tpu.memory_space<smem>>, %arg2: memref<512x64xbf16, #tpu.memory_space<vmem>>, %arg3: memref<64x64xbf16, #tpu.memory_space<vmem>>, %arg4: memref<1x64xf32, #tpu.memory_space<vmem>>, %arg5: memref<1x512xf32, #tpu.memory_space<vmem>>) attributes {dimension_semantics = [#tpu.dimension_semantics<parallel>], iteration_bounds = array<i64: 2>, scalar_prefetch = 0 : i64, scratch_operands = 0 : i64, tpu.core_type = #tpu.core_type<tc>, window_params = [{transform_indices = @transform_0, window_bounds = array<i64: 1>}, {transform_indices = @transform_1, window_bounds = array<i64: 512, 64>}, {pipeline_mode = #tpu.pipeline_mode<synchronous>, transform_indices = @transform_2, window_bounds = array<i64: 64, 64>}, {pipeline_mode = #tpu.pipeline_mode<synchronous>, transform_indices = @transform_3, window_bounds = array<i64: 1, 64>}, {transform_indices = @transform_4, window_bounds = array<i64: 1, 512>}]} {
    %c0 = arith.constant 0 : index
    %c0_0 = arith.constant 0 : index
    %0 = vector.load %arg3[%c0, %c0_0] : memref<64x64xbf16, #tpu.memory_space<vmem>>, vector<64x64xbf16>
    %c0_1 = arith.constant 0 : index
    %c0_2 = arith.constant 0 : index
    %1 = vector.load %arg4[%c0_1, %c0_2] : memref<1x64xf32, #tpu.memory_space<vmem>>, vector<1x64xf32>
    %c0_3 = arith.constant 0 : index
    %2 = memref.load %arg1[%c0_3] : memref<1xf32, #tpu.memory_space<smem>>
    %c0_4 = arith.constant 0 : index
    %c0_5 = arith.constant 0 : index
    %3 = vector.load %arg2[%c0_4, %c0_5] : memref<512x64xbf16, #tpu.memory_space<vmem>>, vector<256x64xbf16>
    %cst = arith.constant dense<0.000000e+00> : vector<256x64xf32>
    %4 = tpu.matmul %3, %0, %cst {dimension_numbers = #tpu.dot_dimension_numbers<[1], [0], [0], [1], [0, 0, 1, 1], [], []>} : vector<256x64xbf16>, vector<64x64xbf16>, vector<256x64xf32> -> vector<256x64xf32>
    %5 = vector.broadcast %1 : vector<1x64xf32> to vector<256x64xf32>
    %6 = arith.addf %4, %5 : vector<256x64xf32>
    %7 = vector.extract_strided_slice %6 {offsets = [0, 0], sizes = [256, 32], strides = [1, 1]} : vector<256x64xf32> to vector<256x32xf32>
    %8 = vector.extract_strided_slice %6 {offsets = [0, 32], sizes = [256, 32], strides = [1, 1]} : vector<256x64xf32> to vector<256x32xf32>
    %9 = arith.mulf %7, %8 : vector<256x32xf32>
    %cst_6 = arith.constant dense<0.000000e+00> : vector<256xf32>
    %10 = vector.multi_reduction <add>, %9, %cst_6 [1] : vector<256x32xf32> to vector<256xf32>
    %11 = vector.broadcast %2 : f32 to vector<256xf32>
    %12 = arith.addf %10, %11 : vector<256xf32>
    %13 = vector.shape_cast %12 : vector<256xf32> to vector<1x256xf32>
    %c0_7 = arith.constant 0 : index
    %c0_8 = arith.constant 0 : index
    %14 = vector.load %arg5[%c0_7, %c0_8] : memref<1x512xf32, #tpu.memory_space<vmem>>, vector<1x256xf32>
    tpu.vector_store %arg5[%c0_7, %c0_8], %13 {strides = array<i32>} : memref<1x512xf32, #tpu.memory_space<vmem>>, vector<1x256xf32>,
    %c256 = arith.constant 256 : index
    %c0_9 = arith.constant 0 : index
    %15 = vector.load %arg2[%c256, %c0_9] : memref<512x64xbf16, #tpu.memory_space<vmem>>, vector<256x64xbf16>
    %cst_10 = arith.constant dense<0.000000e+00> : vector<256x64xf32>
    %16 = tpu.matmul %15, %0, %cst_10 {dimension_numbers = #tpu.dot_dimension_numbers<[1], [0], [0], [1], [0, 0, 1, 1], [], []>} : vector<256x64xbf16>, vector<64x64xbf16>, vector<256x64xf32> -> vector<256x64xf32>
    %17 = vector.broadcast %1 : vector<1x64xf32> to vector<256x64xf32>
    %18 = arith.addf %16, %17 : vector<256x64xf32>
    %19 = vector.extract_strided_slice %18 {offsets = [0, 0], sizes = [256, 32], strides = [1, 1]} : vector<256x64xf32> to vector<256x32xf32>
    %20 = vector.extract_strided_slice %18 {offsets = [0, 32], sizes = [256, 32], strides = [1, 1]} : vector<256x64xf32> to vector<256x32xf32>
    %21 = arith.mulf %19, %20 : vector<256x32xf32>
    %cst_11 = arith.constant dense<0.000000e+00> : vector<256xf32>
    %22 = vector.multi_reduction <add>, %21, %cst_11 [1] : vector<256x32xf32> to vector<256xf32>
    %23 = vector.broadcast %2 : f32 to vector<256xf32>
    %24 = arith.addf %22, %23 : vector<256xf32>
    %25 = vector.shape_cast %24 : vector<256xf32> to vector<1x256xf32>
    %c0_12 = arith.constant 0 : index
    %c256_13 = arith.constant 256 : index
    %26 = vector.load %arg5[%c0_12, %c256_13] : memref<1x512xf32, #tpu.memory_space<vmem>>, vector<1x256xf32>
    tpu.vector_store %arg5[%c0_12, %c256_13], %25 {strides = array<i32>} : memref<1x512xf32, #tpu.memory_space<vmem>>, vector<1x256xf32>,
    return
  }
  func.func @transform_0(%arg0: i32) -> i32 {
    %c0_i32 = arith.constant 0 : i32
    %c0_i32_0 = arith.constant 0 : i32
    return %c0_i32 : i32
  }
  func.func @transform_1(%arg0: i32) -> (i32, i32) {
    %c0_i32 = arith.constant 0 : i32
    %c0_i32_0 = arith.constant 0 : i32
    return %arg0, %c0_i32 : i32, i32
  }
  func.func @transform_2(%arg0: i32) -> (i32, i32) {
    %c0_i32 = arith.constant 0 : i32
    %c0_i32_0 = arith.constant 0 : i32
    %c0_i32_1 = arith.constant 0 : i32
    return %c0_i32, %c0_i32_0 : i32, i32
  }
  func.func @transform_3(%arg0: i32) -> (i32, i32) {
    %c0_i32 = arith.constant 0 : i32
    %c0_i32_0 = arith.constant 0 : i32
    %c0_i32_1 = arith.constant 0 : i32
    return %c0_i32, %c0_i32_0 : i32, i32
  }
  func.func @transform_4(%arg0: i32) -> (i32, i32) {
    %c0_i32 = arith.constant 0 : i32
    %c0_i32_0 = arith.constant 0 : i32
    return %c0_i32, %arg0 : i32, i32
  }
}

</mosaic_0001>

<llo_original>
// kernel: dssm_pallas.1
$region0: #{dssm_pallas.1}
  #allocation0 [shape = 'u32[]', space=smem, size = 0x4, offset = 0x4, fixed_abs, tag = 'smem constant byte address 0x4 - core index']
  #allocation1 [shape = 'u32[144,128]{1,0:T(1,128)}', space=vmem, size = 0x12000, scoped, tag = 'internal scratch']
  #allocation2 [shape = 'f32[1]{0:T(128)S(6)}', space=smem, size = 0x200, scoped, tag = 'scoped memory for dssm_pallas.1']
  %s0 = inlined_call_operand.<no memory space> [shape: f32[1], index: 0, kind: input, shape index: {}]
  %s1 = inlined_call_operand.vmem [shape: bf16[600,64], index: 1, kind: input, shape index: {}]
  %s2 = inlined_call_operand.vmem [shape: bf16[64,64], index: 2, kind: input, shape index: {}]
  %s3 = inlined_call_operand.vmem [shape: f32[1,64], index: 3, kind: input, shape index: {}]
  %s4 = inlined_call_operand.vmem [shape: f32[1,1024], index: 4, kind: output, shape index: {}]
  %s5 = sld [smem:[#allocation0]]
  $region49: #{dssm_pallas.1} parent=0
    _
  %s7 = ssub.s32 1, %s5
  %s8 = scalar_select 0, %s7, %s5
  %9 = sst [smem:[#allocation2]] %s0
  loop: start=0, step=1, limit=4
  $region2: #{dssm_pallas.1} parent=0 // loop_pre_header
    _
  $region3: #{dssm_pallas.1} parent=0 // loop_header
    %s11 = sphi 0, %s15
    %p12 = scmp.ge.s32.totalorder %s11, 4
    %s19 = sphi 0, %s19
    %s21 = sphi 0, %s19
    %s22 = sphi 0, %s21
    %s36 = sphi 0, %s22
    %s42 = sphi 0, %s44
    %s45 = sphi 0, %s42
    %s46 = sphi 0, %s45
    %s62 = sphi 0, %s46
    %s66 = sphi 0, %s66
    %s68 = sphi 0, %s66
    %s69 = sphi 0, %s68
    %s83 = sphi 0, %s69
    %s87 = sphi 0, %s87
    %s89 = sphi 0, %s87
    %s90 = sphi 0, %s89
    %s104 = sphi 0, %s90
    %s110 = sphi 0, %s112
    %s113 = sphi 0, %s110
    %s114 = sphi 0, %s113
    %s130 = sphi 0, %s114
  $region4: #{dssm_pallas.1} parent=0 // loop_header_branch
    %14 = sbr.rel (%p12) target = $region8
  $region5: #{dssm_pallas.1} parent=0 // loop_body
    %s16 = ssub.s32 %s11, 1
    %s17 = ssub.s32 %s11, 2
    %s18 = sadd.s32 %s11, 1
    %s20 = sadd.s32 %s19, 1
    %p23 = scmp.eq.s32.totalorder %s11, 1
    %p24 = scmp.ne.s32.totalorder %s19, %s21
    %p25 = scmp.eq.s32.totalorder %s11, 0
    %p26 = por %p24, %p25
    %p27 = scmp.ne.s32.totalorder %s19, %s21
    %p28 = scmp.eq.s32.totalorder %s16, 1
    %p29 = por %p27, %p28
    %p30 = scmp.ne.s32.totalorder %s21, %s22
    %p31 = scmp.eq.s32.totalorder %s16, 0
    %p32 = por %p30, %p31
    %p33 = scmp.ne.s32.totalorder %s21, %s22
    %p34 = scmp.eq.s32.totalorder %s17, 1
    %p35 = por %p33, %p34
    %p37 = scmp.ne.s32.totalorder %s22, %s36
    %p38 = scmp.eq.s32.totalorder %s17, 0
    %p39 = por %p37, %p38
    %s40 = ssub.s32 %s11, %s18
    %p41 = scmp.eq.s32.totalorder %s40, 0
    %s43 = sadd.s32 %s42, 1
    %s44 = scalar_select %p41, %s42, %s43
    %p47 = pneg %p41
    %p48 = scmp.eq.s32.totalorder %s11, 1
    %p49 = por %p47, %p48
    %p50 = scmp.ne.s32.totalorder %s42, %s45
    %p51 = scmp.eq.s32.totalorder %s11, 0
    %p52 = por %p50, %p51
    %p53 = scmp.ne.s32.totalorder %s42, %s45
    %p54 = scmp.eq.s32.totalorder %s16, 1
    %p55 = por %p53, %p54
    %p56 = scmp.ne.s32.totalorder %s45, %s46
    %p57 = scmp.eq.s32.totalorder %s16, 0
    %p58 = por %p56, %p57
    %p59 = scmp.ne.s32.totalorder %s45, %s46
    %p60 = scmp.eq.s32.totalorder %s17, 1
    %p61 = por %p59, %p60
    %p63 = scmp.ne.s32.totalorder %s46, %s62
    %p64 = scmp.eq.s32.totalorder %s17, 0
    %p65 = por %p63, %p64
    %s67 = sadd.s32 %s66, 1
    %p70 = scmp.eq.s32.totalorder %s11, 1
    %p71 = scmp.ne.s32.totalorder %s66, %s68
    %p72 = scmp.eq.s32.totalorder %s11, 0
    %p73 = por %p71, %p72
    %p74 = scmp.ne.s32.totalorder %s66, %s68
    %p75 = scmp.eq.s32.totalorder %s16, 1
    %p76 = por %p74, %p75
    %p77 = scmp.ne.s32.totalorder %s68, %s69
    %p78 = scmp.eq.s32.totalorder %s16, 0
    %p79 = por %p77, %p78
    %p80 = scmp.ne.s32.totalorder %s68, %s69
    %p81 = scmp.eq.s32.totalorder %s17, 1
    %p82 = por %p80, %p81
    %p84 = scmp.ne.s32.totalorder %s69, %s83
    %p85 = scmp.eq.s32.totalorder %s17, 0
    %p86 = por %p84, %p85
    %s88 = sadd.s32 %s87, 1
    %p91 = scmp.eq.s32.totalorder %s11, 1
    %p92 = scmp.ne.s32.totalorder %s87, %s89
    %p93 = scmp.eq.s32.totalorder %s11, 0
    %p94 = por %p92, %p93
    %p95 = scmp.ne.s32.totalorder %s87, %s89
    %p96 = scmp.eq.s32.totalorder %s16, 1
    %p97 = por %p95, %p96
    %p98 = scmp.ne.s32.totalorder %s89, %s90
    %p99 = scmp.eq.s32.totalorder %s16, 0
    %p100 = por %p98, %p99
    %p101 = scmp.ne.s32.totalorder %s89, %s90
    %p102 = scmp.eq.s32.totalorder %s17, 1
    %p103 = por %p101, %p102
    %p105 = scmp.ne.s32.totalorder %s90, %s104
    %p106 = scmp.eq.s32.totalorder %s17, 0
    %p107 = por %p105, %p106
    %s108 = ssub.s32 %s11, %s18
    %p109 = scmp.eq.s32.totalorder %s108, 0
    %s111 = sadd.s32 %s110, 1
    %s112 = scalar_select %p109, %s110, %s111
    %p115 = pneg %p109
    %p116 = scmp.eq.s32.totalorder %s11, 1
    %p117 = por %p115, %p116
    %p118 = scmp.ne.s32.totalorder %s110, %s113
    %p119 = scmp.eq.s32.totalorder %s11, 0
    %p120 = por %p118, %p119
    %p121 = scmp.ne.s32.totalorder %s110, %s113
    %p122 = scmp.eq.s32.totalorder %s16, 1
    %p123 = por %p121, %p122
    %p124 = scmp.ne.s32.totalorder %s113, %s114
    %p125 = scmp.eq.s32.totalorder %s16, 0
    %p126 = por %p124, %p125
    %p127 = scmp.ne.s32.totalorder %s113, %s114
    %p128 = scmp.eq.s32.totalorder %s17, 1
    %p129 = por %p127, %p128
    %p131 = scmp.ne.s32.totalorder %s114, %s130
    %p132 = scmp.eq.s32.totalorder %s17, 0
    %p133 = por %p131, %p132
    %p134 = scmp.le.s32.totalorder 1, %s11
    %p135 = scmp.lt.s32.totalorder %s11, 3
    %p136 = pnand %p134, %p135
    %p137 = pneg %p136
    // Predicated region
    $region9: #{dssm_pallas.1} parent=5 // pred_check
      _
    $region10: #{dssm_pallas.1} parent=5 // pred_check_branch
      %139 = sbr.rel (%p136) target = $region12
    $region11: #{dssm_pallas.1} parent=5 // pred_region
      %s140 = ssub.s32 %s11, 1
      // Predicated region
      $region13: #{dssm_pallas.1} parent=11 // pred_check
        %p141 = pneg %p32
      $region14: #{dssm_pallas.1} parent=11 // pred_check_branch
        %143 = sbr.rel (%p141) target = $region16
      $region15: #{dssm_pallas.1} parent=11 // pred_region
        _
      $region16: #{dssm_pallas.1} parent=11 // pred_fallthru
        _
      // Predicated region
      $region17: #{dssm_pallas.1} parent=11 // pred_check
        %p144 = pneg %p79
      $region18: #{dssm_pallas.1} parent=11 // pred_check_branch
        %146 = sbr.rel (%p144) target = $region20
      $region19: #{dssm_pallas.1} parent=11 // pred_region
        _
      $region20: #{dssm_pallas.1} parent=11 // pred_fallthru
        _
      // Predicated region
      $region21: #{dssm_pallas.1} parent=11 // pred_check
        %p147 = pneg %p100
      $region22: #{dssm_pallas.1} parent=11 // pred_check_branch
        %149 = sbr.rel (%p147) target = $region24
      $region23: #{dssm_pallas.1} parent=11 // pred_region
        _
      $region24: #{dssm_pallas.1} parent=11 // pred_fallthru
        _
    $region12: #{dssm_pallas.1} parent=5 // pred_fallthru
      _
    %p150 = scmp.lt.s32.totalorder %s11, 2
    // Predicated region
    $region25: #{dssm_pallas.1} parent=5 // pred_check
      %p151 = pneg %p150
    $region26: #{dssm_pallas.1} parent=5 // pred_check_branch
      %153 = sbr.rel (%p151) target = $region28
    $region27: #{dssm_pallas.1} parent=5 // pred_region
      // Predicated region
      $region29: #{dssm_pallas.1} parent=27 // pred_check
        %p154 = pneg %p52
      $region30: #{dssm_pallas.1} parent=27 // pred_check_branch
        %156 = sbr.rel (%p154) target = $region32
      $region31: #{dssm_pallas.1} parent=27 // pred_region
        %s157 = smul.u32 64, %s11
        %s158 = ssub.s32 75, %s157
        %p159 = scmp.lt.s32.totalorder %s158, 64
        %s160 = scalar_select %p159, %s158, 64
        %s161 = smul.u32 64, %s160
        %p162 = scmp.lt.s32.totalorder %s157, 74
        %s163 = scalar_select %p162, %s157, 74
        %s164 = smul.addr %s163, 4
        %s165 = scalar_lea.vmem %s1, %s164
        %s166 = smul.u32 64, %s11
        %s167 = ssub.s32 75, %s166
        %p168 = scmp.lt.s32.totalorder %s167, 64
        %s169 = scalar_select %p168, %s167, 64
        %s170 = smul.u32 64, %s169
      $region32: #{dssm_pallas.1} parent=27 // pred_fallthru
        _
    $region28: #{dssm_pallas.1} parent=5 // pred_fallthru
      _
    %p171 = scmp.le.s32.totalorder 1, %s11
    %p172 = scmp.lt.s32.totalorder %s11, 3
    %p173 = pnand %p171, %p172
    %p174 = pneg %p173
    // Predicated region
    $region33: #{dssm_pallas.1} parent=5 // pred_check
      _
    $region34: #{dssm_pallas.1} parent=5 // pred_check_branch
      %176 = sbr.rel (%p173) target = $region36
    $region35: #{dssm_pallas.1} parent=5 // pred_region
      %s177 = ssub.s32 %s11, 1
      %p178 = pneg %p32
      %p179 = pneg %p29
      %s180 = smul.u32 64, %s16
      %s181 = ssub.s32 75, %s180
      %p182 = scmp.lt.s32.totalorder %s181, 64
      %s183 = scalar_select %p182, %s181, 64
      %s184 = smul.u32 64, %s183
      %p185 = scmp.lt.s32.totalorder %s180, 74
      %s186 = scalar_select %p185, %s180, 74
      %s187 = smul.addr %s186, 4
      %s188 = scalar_lea.vmem %s1, %s187
      %p189 = pneg %p58
      %p190 = pneg %p55
      %p191 = pneg %p79
      %p192 = pneg %p76
      %p193 = pneg %p100
      %p194 = pneg %p97
      %p195 = pneg %p126
      %p196 = pneg %p123
      %s197 = smul.u32 4, %s16
      %p198 = scmp.lt.s32.totalorder %s197, 7
      %s199 = scalar_select %p198, %s197, 7
      %s200 = scalar_lea.vmem %s4, %s199
      %s201 = smul.u32 64, %s16
      %s202 = ssub.s32 75, %s201
      %p203 = scmp.lt.s32.totalorder %s202, 64
      %s204 = scalar_select %p203, %s202, 64
      %s205 = smul.u32 64, %s204
      %p206 = scmp.lt.s32.totalorder %s201, 74
      %s207 = scalar_select %p206, %s201, 74
      %s208 = smul.addr %s207, 4
      %s209 = scalar_lea.vmem %s1, %s208
      %s210 = smul.u32 64, %s16
      %s211 = ssub.s32 75, %s210
      %p212 = scmp.lt.s32.totalorder %s211, 64
      %s213 = scalar_select %p212, %s211, 64
      %s214 = smul.u32 64, %s213
      %s215 = smul.u32 4, %s16
      %p216 = scmp.lt.s32.totalorder %s215, 7
      %s217 = scalar_select %p216, %s215, 7
      %s218 = scalar_lea.vmem %s4, %s217
      %s219 = smul.u32 4, %s16
      %v221 = vld [vmem:[%s2] sm:$0xf]
      %v222 = vld [vmem:[%s2 + $0x4] sm:$0xf]
      %v223 = vld [vmem:[%s2 + $0x8] sm:$0xf]
      %v224 = vld [vmem:[%s2 + $0xc] sm:$0xf]
      %v225 = vld [vmem:[%s2 + $0x10] sm:$0xf]
      %v226 = vld [vmem:[%s2 + $0x14] sm:$0xf]
      %v227 = vld [vmem:[%s2 + $0x18] sm:$0xf]
      %v228 = vld [vmem:[%s2 + $0x1c] sm:$0xf]
      %v229 = vld [vmem:[%s3] sm:$0x1]
      %s230 = sld [smem:[#allocation2]]
      %v231 = vld [vmem:[%s209] sm:$0xf]
      %v232 = vld [vmem:[%s209 + $0x4] sm:$0xf]
      %v233 = vld [vmem:[%s209 + $0x8] sm:$0xf]
      %v234 = vld [vmem:[%s209 + $0xc] sm:$0xf]
      %v235 = vld [vmem:[%s209 + $0x10] sm:$0xf]
      %v236 = vld [vmem:[%s209 + $0x14] sm:$0xf]
      %v237 = vld [vmem:[%s209 + $0x18] sm:$0xf]
      %v238 = vld [vmem:[%s209 + $0x1c] sm:$0xf]
      %v239 = vld [vmem:[%s209 + $0x20] sm:$0xf]
      %v240 = vld [vmem:[%s209 + $0x24] sm:$0xf]
      %v241 = vld [vmem:[%s209 + $0x28] sm:$0xf]
      %v242 = vld [vmem:[%s209 + $0x2c] sm:$0xf]
      %v243 = vld [vmem:[%s209 + $0x30] sm:$0xf]
      %v244 = vld [vmem:[%s209 + $0x34] sm:$0xf]
      %v245 = vld [vmem:[%s209 + $0x38] sm:$0xf]
      %v246 = vld [vmem:[%s209 + $0x3c] sm:$0xf]
      %v247 = vld [vmem:[%s209 + $0x40] sm:$0xf]
      %v248 = vld [vmem:[%s209 + $0x44] sm:$0xf]
      %v249 = vld [vmem:[%s209 + $0x48] sm:$0xf]
      %v250 = vld [vmem:[%s209 + $0x4c] sm:$0xf]
      %v251 = vld [vmem:[%s209 + $0x50] sm:$0xf]
      %v252 = vld [vmem:[%s209 + $0x54] sm:$0xf]
      %v253 = vld [vmem:[%s209 + $0x58] sm:$0xf]
      %v254 = vld [vmem:[%s209 + $0x5c] sm:$0xf]
      %v255 = vld [vmem:[%s209 + $0x60] sm:$0xf]
      %v256 = vld [vmem:[%s209 + $0x64] sm:$0xf]
      %v257 = vld [vmem:[%s209 + $0x68] sm:$0xf]
      %v258 = vld [vmem:[%s209 + $0x6c] sm:$0xf]
      %v259 = vld [vmem:[%s209 + $0x70] sm:$0xf]
      %v260 = vld [vmem:[%s209 + $0x74] sm:$0xf]
      %v261 = vld [vmem:[%s209 + $0x78] sm:$0xf]
      %v262 = vld [vmem:[%s209 + $0x7c] sm:$0xf]
      %v264 = vlaneseq
      %v265 = vshrl.u32 %v264, 7
      %v266 = vsub.s32 0, %v265
      %v267 = vrot.slane %v229, %v266
      %v301 = vunpack.c.l.b16 %v231
      %v302 = vunpack.c.l.b16 %v232
      %v303 = vunpack.c.l.b16 %v233
      %v304 = vunpack.c.l.b16 %v234
      %v305 = vunpack.c.l.b16 %v235
      %v306 = vunpack.c.l.b16 %v236
      %v307 = vunpack.c.l.b16 %v237
      %v308 = vunpack.c.l.b16 %v238
      %v309 = vunpack.c.l.b16 %v239
      %v310 = vunpack.c.l.b16 %v240
      %v311 = vunpack.c.l.b16 %v241
      %v312 = vunpack.c.l.b16 %v242
      %v313 = vunpack.c.l.b16 %v243
      %v314 = vunpack.c.l.b16 %v244
      %v315 = vunpack.c.l.b16 %v245
      %v316 = vunpack.c.l.b16 %v246
      %v317 = vunpack.c.l.b16 %v247
      %v318 = vunpack.c.l.b16 %v248
      %v319 = vunpack.c.l.b16 %v249
      %v320 = vunpack.c.l.b16 %v250
      %v321 = vunpack.c.l.b16 %v251
      %v322 = vunpack.c.l.b16 %v252
      %v323 = vunpack.c.l.b16 %v253
      %v324 = vunpack.c.l.b16 %v254
      %v325 = vunpack.c.l.b16 %v255
      %v326 = vunpack.c.l.b16 %v256
      %v327 = vunpack.c.l.b16 %v257
      %v328 = vunpack.c.l.b16 %v258
      %v329 = vunpack.c.l.b16 %v259
      %v330 = vunpack.c.l.b16 %v260
      %v331 = vunpack.c.l.b16 %v261
      %v332 = vunpack.c.l.b16 %v262
      %v333 = vpack.c.b16 %v302, %v301
      %v334 = vpack.c.b16 %v304, %v303
      %v335 = vpack.c.b16 %v306, %v305
      %v336 = vpack.c.b16 %v308, %v307
      %v337 = vpack.c.b16 %v310, %v309
      %v338 = vpack.c.b16 %v312, %v311
      %v339 = vpack.c.b16 %v314, %v313
      %v340 = vpack.c.b16 %v316, %v315
      %v341 = vpack.c.b16 %v318, %v317
      %v342 = vpack.c.b16 %v320, %v319
      %v343 = vpack.c.b16 %v322, %v321
      %v344 = vpack.c.b16 %v324, %v323
      %v345 = vpack.c.b16 %v326, %v325
      %v346 = vpack.c.b16 %v328, %v327
      %v347 = vpack.c.b16 %v330, %v329
      %v348 = vpack.c.b16 %v332, %v331
      %v357 = vunpack.c.l.b16 %v221
      %v358 = vunpack.c.l.b16 %v222
      %v359 = vunpack.c.l.b16 %v223
      %v360 = vunpack.c.l.b16 %v224
      %v361 = vunpack.c.l.b16 %v225
      %v362 = vunpack.c.l.b16 %v226
      %v363 = vunpack.c.l.b16 %v227
      %v364 = vunpack.c.l.b16 %v228
      %v365 = vpack.c.b16 %v358, %v357
      %v366 = vpack.c.b16 %v360, %v359
      %v367 = vpack.c.b16 %v362, %v361
      %v368 = vpack.c.b16 %v364, %v363
      %vm373 = vcmask 523264
      %v375 = vsel %vm373, %v333, 0
      %v378 = vsel %vm373, %v334, 0
      %v381 = vsel %vm373, %v335, 0
      %v384 = vsel %vm373, %v336, 0
      %v387 = vsel %vm373, %v337, 0
      %v390 = vsel %vm373, %v338, 0
      %v393 = vsel %vm373, %v339, 0
      %v396 = vsel %vm373, %v340, 0
      %v399 = vsel %vm373, %v341, 0
      %v402 = vsel %vm373, %v342, 0
      %v405 = vsel %vm373, %v343, 0
      %v408 = vsel %vm373, %v344, 0
      %v411 = vsel %vm373, %v345, 0
      %v414 = vsel %vm373, %v346, 0
      %v417 = vsel %vm373, %v347, 0
      %v420 = vsel %vm373, %v348, 0
      %422 = vmatprep.subr.bf16.mxu0 0
      %423 = vmatpush1.bf16.msra.mxu0 0
      %424 = vmatprep.subr.bf16.mxu0 0
      %425 = vmatpush1.bf16.msra.mxu0 0
      %426 = vmatprep.subr.bf16.mxu0 0
      %427 = vmatpush1.bf16.msra.mxu0 0
      %428 = vmatprep.subr.bf16.mxu0 0
      %429 = vmatpush1.bf16.msra.mxu0 0
      %430 = vmatprep.subr.bf16.mxu0 0
      %431 = vmatpush1.bf16.msra.mxu0 %v368
      %432 = vmatprep.subr.bf16.mxu0 0
      %433 = vmatpush1.bf16.msra.mxu0 %v367
      %434 = vmatprep.subr.bf16.mxu0 0
      %435 = vmatpush1.bf16.msra.mxu0 %v366
      %436 = vmatprep.subr.bf16.mxu0 0
      %437 = vmatpush1.bf16.msra.mxu0 %v365
      %438 = vmatprep.subr.bf16.mxu0 0
      %439 = vmatpush2.bf16.msra.mxu0 0
      %440 = vmatprep.subr.bf16.mxu0 0
      %441 = vmatpush2.bf16.msra.mxu0 0
      %442 = vmatprep.subr.bf16.mxu0 0
      %443 = vmatpush2.bf16.msra.mxu0 0
      %444 = vmatprep.subr.bf16.mxu0 0
      %445 = vmatpush2.bf16.msra.mxu0 0
      %446 = vmatprep.subr.bf16.mxu0 0
      %447 = vmatpush2.bf16.msra.mxu0 0
      %448 = vmatprep.subr.bf16.mxu0 0
      %449 = vmatpush2.bf16.msra.mxu0 0
      %450 = vmatprep.subr.bf16.mxu0 0
      %451 = vmatpush2.bf16.msra.mxu0 0
      %452 = vmatprep.subr.bf16.mxu0 0
      %453 = vmatpush2.bf16.msra.mxu0 0
      %454 = vmatprep.mubr.bf16.mxu0 0
      %455 = vmatmul.mubr.bf16.gmra.mxu0 %v375
      %v456 = vpop.f32.mrf.mxu0
      %v457 = vadd.f32 %v267, %v456
      %v458 = vpop.f32.mrf.mxu0
      %v459 = vpop.f32.mrf.mxu0
      %v460 = vadd.f32 %v267, %v459
      %v461 = vpop.f32.mrf.mxu0
      %462 = vmatprep.mubr.bf16.mxu0 0
      %463 = vmatmul.mubr.bf16.gmra.mxu0 %v378
      %v464 = vpop.f32.mrf.mxu0
      %v465 = vadd.f32 %v267, %v464
      %v466 = vpop.f32.mrf.mxu0
      %v467 = vpop.f32.mrf.mxu0
      %v468 = vadd.f32 %v267, %v467
      %v469 = vpop.f32.mrf.mxu0
      %470 = vmatprep.mubr.bf16.mxu0 0
      %471 = vmatmul.mubr.bf16.gmra.mxu0 %v381
      %v472 = vpop.f32.mrf.mxu0
      %v473 = vadd.f32 %v267, %v472
      %v474 = vpop.f32.mrf.mxu0
      %v475 = vpop.f32.mrf.mxu0
      %v476 = vadd.f32 %v267, %v475
      %v477 = vpop.f32.mrf.mxu0
      %478 = vmatprep.mubr.bf16.mxu0 0
      %479 = vmatmul.mubr.bf16.gmra.mxu0 %v384
      %v480 = vpop.f32.mrf.mxu0
      %v481 = vadd.f32 %v267, %v480
      %v482 = vpop.f32.mrf.mxu0
      %v483 = vpop.f32.mrf.mxu0
      %v484 = vadd.f32 %v267, %v483
      %v485 = vpop.f32.mrf.mxu0
      %486 = vmatprep.mubr.bf16.mxu0 0
      %487 = vmatmul.mubr.bf16.gmra.mxu0 %v387
      %v488 = vpop.f32.mrf.mxu0
      %v489 = vadd.f32 %v267, %v488
      %v490 = vpop.f32.mrf.mxu0
      %v491 = vpop.f32.mrf.mxu0
      %v492 = vadd.f32 %v267, %v491
      %v493 = vpop.f32.mrf.mxu0
      %494 = vmatprep.mubr.bf16.mxu0 0
      %495 = vmatmul.mubr.bf16.gmra.mxu0 %v390
      %v496 = vpop.f32.mrf.mxu0
      %v497 = vadd.f32 %v267, %v496
      %v498 = vpop.f32.mrf.mxu0
      %v499 = vpop.f32.mrf.mxu0
      %v500 = vadd.f32 %v267, %v499
      %v501 = vpop.f32.mrf.mxu0
      %502 = vmatprep.mubr.bf16.mxu0 0
      %503 = vmatmul.mubr.bf16.gmra.mxu0 %v393
      %v504 = vpop.f32.mrf.mxu0
      %v505 = vadd.f32 %v267, %v504
      %v506 = vpop.f32.mrf.mxu0
      %v507 = vpop.f32.mrf.mxu0
      %v508 = vadd.f32 %v267, %v507
      %v509 = vpop.f32.mrf.mxu0
      %510 = vmatprep.mubr.bf16.mxu0 0
      %511 = vmatmul.mubr.bf16.gmra.mxu0 %v396
      %v512 = vpop.f32.mrf.mxu0
      %v513 = vadd.f32 %v267, %v512
      %v514 = vpop.f32.mrf.mxu0
      %v515 = vpop.f32.mrf.mxu0
      %v516 = vadd.f32 %v267, %v515
      %v517 = vpop.f32.mrf.mxu0
      %518 = vmatprep.mubr.bf16.mxu0 0
      %519 = vmatmul.mubr.bf16.gmra.mxu0 %v399
      %v520 = vpop.f32.mrf.mxu0
      %v521 = vadd.f32 %v267, %v520
      %v522 = vpop.f32.mrf.mxu0
      %v523 = vpop.f32.mrf.mxu0
      %v524 = vadd.f32 %v267, %v523
      %v525 = vpop.f32.mrf.mxu0
      %526 = vmatprep.mubr.bf16.mxu0 0
      %527 = vmatmul.mubr.bf16.gmra.mxu0 %v402
      %v528 = vpop.f32.mrf.mxu0
      %v529 = vadd.f32 %v267, %v528
      %v530 = vpop.f32.mrf.mxu0
      %v531 = vpop.f32.mrf.mxu0
      %v532 = vadd.f32 %v267, %v531
      %v533 = vpop.f32.mrf.mxu0
      %534 = vmatprep.mubr.bf16.mxu0 0
      %535 = vmatmul.mubr.bf16.gmra.mxu0 %v405
      %v536 = vpop.f32.mrf.mxu0
      %v537 = vadd.f32 %v267, %v536
      %v538 = vpop.f32.mrf.mxu0
      %v539 = vpop.f32.mrf.mxu0
      %v540 = vadd.f32 %v267, %v539
      %v541 = vpop.f32.mrf.mxu0
      %542 = vmatprep.mubr.bf16.mxu0 0
      %543 = vmatmul.mubr.bf16.gmra.mxu0 %v408
      %v544 = vpop.f32.mrf.mxu0
      %v545 = vadd.f32 %v267, %v544
      %v546 = vpop.f32.mrf.mxu0
      %v547 = vpop.f32.mrf.mxu0
      %v548 = vadd.f32 %v267, %v547
      %v549 = vpop.f32.mrf.mxu0
      %550 = vmatprep.mubr.bf16.mxu0 0
      %551 = vmatmul.mubr.bf16.gmra.mxu0 %v411
      %v552 = vpop.f32.mrf.mxu0
      %v553 = vadd.f32 %v267, %v552
      %v554 = vpop.f32.mrf.mxu0
      %v555 = vpop.f32.mrf.mxu0
      %v556 = vadd.f32 %v267, %v555
      %v557 = vpop.f32.mrf.mxu0
      %558 = vmatprep.mubr.bf16.mxu0 0
      %559 = vmatmul.mubr.bf16.gmra.mxu0 %v414
      %v560 = vpop.f32.mrf.mxu0
      %v561 = vadd.f32 %v267, %v560
      %v562 = vpop.f32.mrf.mxu0
      %v563 = vpop.f32.mrf.mxu0
      %v564 = vadd.f32 %v267, %v563
      %v565 = vpop.f32.mrf.mxu0
      %566 = vmatprep.mubr.bf16.mxu0 0
      %567 = vmatmul.mubr.bf16.gmra.mxu0 %v417
      %v568 = vpop.f32.mrf.mxu0
      %v569 = vadd.f32 %v267, %v568
      %v570 = vpop.f32.mrf.mxu0
      %v571 = vpop.f32.mrf.mxu0
      %v572 = vadd.f32 %v267, %v571
      %v573 = vpop.f32.mrf.mxu0
      %574 = vmatprep.mubr.bf16.mxu0 0
      %575 = vmatmul.mubr.bf16.gmra.mxu0 %v420
      %v576 = vpop.f32.mrf.mxu0
      %v577 = vadd.f32 %v267, %v576
      %v578 = vpop.f32.mrf.mxu0
      %v579 = vpop.f32.mrf.mxu0
      %v580 = vadd.f32 %v267, %v579
      %v581 = vpop.f32.mrf.mxu0
      %582 = vdwg.mxu0
      %615 = vrot.lane.b32.xlu0 %v457, 96
      %v616 = vpop.permute.xlu0 %615
      %617 = vrot.lane.b32.xlu0 %v460, 96
      %v618 = vpop.permute.xlu0 %617
      %619 = vrot.lane.b32.xlu0 %v465, 96
      %v620 = vpop.permute.xlu0 %619
      %621 = vrot.lane.b32.xlu0 %v468, 96
      %v622 = vpop.permute.xlu0 %621
      %623 = vrot.lane.b32.xlu0 %v473, 96
      %v624 = vpop.permute.xlu0 %623
      %625 = vrot.lane.b32.xlu0 %v476, 96
      %v626 = vpop.permute.xlu0 %625
      %627 = vrot.lane.b32.xlu0 %v481, 96
      %v628 = vpop.permute.xlu0 %627
      %629 = vrot.lane.b32.xlu0 %v484, 96
      %v630 = vpop.permute.xlu0 %629
      %631 = vrot.lane.b32.xlu0 %v489, 96
      %v632 = vpop.permute.xlu0 %631
      %633 = vrot.lane.b32.xlu0 %v492, 96
      %v634 = vpop.permute.xlu0 %633
      %635 = vrot.lane.b32.xlu0 %v497, 96
      %v636 = vpop.permute.xlu0 %635
      %637 = vrot.lane.b32.xlu0 %v500, 96
      %v638 = vpop.permute.xlu0 %637
      %639 = vrot.lane.b32.xlu0 %v505, 96
      %v640 = vpop.permute.xlu0 %639
      %641 = vrot.lane.b32.xlu0 %v508, 96
      %v642 = vpop.permute.xlu0 %641
      %643 = vrot.lane.b32.xlu0 %v513, 96
      %v644 = vpop.permute.xlu0 %643
      %645 = vrot.lane.b32.xlu0 %v516, 96
      %v646 = vpop.permute.xlu0 %645
      %647 = vrot.lane.b32.xlu0 %v521, 96
      %v648 = vpop.permute.xlu0 %647
      %649 = vrot.lane.b32.xlu0 %v524, 96
      %v650 = vpop.permute.xlu0 %649
      %651 = vrot.lane.b32.xlu0 %v529, 96
      %v652 = vpop.permute.xlu0 %651
      %653 = vrot.lane.b32.xlu0 %v532, 96
      %v654 = vpop.permute.xlu0 %653
      %655 = vrot.lane.b32.xlu0 %v537, 96
      %v656 = vpop.permute.xlu0 %655
      %657 = vrot.lane.b32.xlu0 %v540, 96
      %v658 = vpop.permute.xlu0 %657
      %659 = vrot.lane.b32.xlu0 %v545, 96
      %v660 = vpop.permute.xlu0 %659
      %661 = vrot.lane.b32.xlu0 %v548, 96
      %v662 = vpop.permute.xlu0 %661
      %663 = vrot.lane.b32.xlu0 %v553, 96
      %v664 = vpop.permute.xlu0 %663
      %665 = vrot.lane.b32.xlu0 %v556, 96
      %v666 = vpop.permute.xlu0 %665
      %667 = vrot.lane.b32.xlu0 %v561, 96
      %v668 = vpop.permute.xlu0 %667
      %669 = vrot.lane.b32.xlu0 %v564, 96
      %v670 = vpop.permute.xlu0 %669
      %671 = vrot.lane.b32.xlu0 %v569, 96
      %v672 = vpop.permute.xlu0 %671
      %673 = vrot.lane.b32.xlu0 %v572, 96
      %v674 = vpop.permute.xlu0 %673
      %675 = vrot.lane.b32.xlu0 %v577, 96
      %v676 = vpop.permute.xlu0 %675
      %677 = vrot.lane.b32.xlu0 %v580, 96
      %v678 = vpop.permute.xlu0 %677
      %v711 = vmul.f32 %v457, %v616
      %v712 = vmul.f32 %v460, %v618
      %v713 = vmul.f32 %v465, %v620
      %v714 = vmul.f32 %v468, %v622
      %v715 = vmul.f32 %v473, %v624
      %v716 = vmul.f32 %v476, %v626
      %v717 = vmul.f32 %v481, %v628
      %v718 = vmul.f32 %v484, %v630
      %v719 = vmul.f32 %v489, %v632
      %v720 = vmul.f32 %v492, %v634
      %v721 = vmul.f32 %v497, %v636
      %v722 = vmul.f32 %v500, %v638
      %v723 = vmul.f32 %v505, %v640
      %v724 = vmul.f32 %v508, %v642
      %v725 = vmul.f32 %v513, %v644
      %v726 = vmul.f32 %v516, %v646
      %v727 = vmul.f32 %v521, %v648
      %v728 = vmul.f32 %v524, %v650
      %v729 = vmul.f32 %v529, %v652
      %v730 = vmul.f32 %v532, %v654
      %v731 = vmul.f32 %v537, %v656
      %v732 = vmul.f32 %v540, %v658
      %v733 = vmul.f32 %v545, %v660
      %v734 = vmul.f32 %v548, %v662
      %v735 = vmul.f32 %v553, %v664
      %v736 = vmul.f32 %v556, %v666
      %v737 = vmul.f32 %v561, %v668
      %v738 = vmul.f32 %v564, %v670
      %v739 = vmul.f32 %v569, %v672
      %v740 = vmul.f32 %v572, %v674
      %v741 = vmul.f32 %v577, %v676
      %v742 = vmul.f32 %v580, %v678
      %vm743 = vcmask 261120
      %v744 = vsel %vm743, %v711, 0.0
      %745 = vadd.xlane.f32.xlu0 %v744
      %v746 = vpop.xlane.xlu0 %745
      %v747 = vsel %vm743, %v712, 0.0
      %748 = vadd.xlane.f32.xlu0 %v747
      %v749 = vpop.xlane.xlu0 %748
      %v750 = vsel %vm743, %v713, 0.0
      %751 = vadd.xlane.f32.xlu0 %v750
      %v752 = vpop.xlane.xlu0 %751
      %v753 = vsel %vm743, %v714, 0.0
      %754 = vadd.xlane.f32.xlu0 %v753
      %v755 = vpop.xlane.xlu0 %754
      %v756 = vsel %vm743, %v715, 0.0
      %757 = vadd.xlane.f32.xlu0 %v756
      %v758 = vpop.xlane.xlu0 %757
      %v759 = vsel %vm743, %v716, 0.0
      %760 = vadd.xlane.f32.xlu0 %v759
      %v761 = vpop.xlane.xlu0 %760
      %v762 = vsel %vm743, %v717, 0.0
      %763 = vadd.xlane.f32.xlu0 %v762
      %v764 = vpop.xlane.xlu0 %763
      %v765 = vsel %vm743, %v718, 0.0
      %766 = vadd.xlane.f32.xlu0 %v765
      %v767 = vpop.xlane.xlu0 %766
      %v768 = vsel %vm743, %v719, 0.0
      %769 = vadd.xlane.f32.xlu0 %v768
      %v770 = vpop.xlane.xlu0 %769
      %v771 = vsel %vm743, %v720, 0.0
      %772 = vadd.xlane.f32.xlu0 %v771
      %v773 = vpop.xlane.xlu0 %772
      %v774 = vsel %vm743, %v721, 0.0
      %775 = vadd.xlane.f32.xlu0 %v774
      %v776 = vpop.xlane.xlu0 %775
      %v777 = vsel %vm743, %v722, 0.0
      %778 = vadd.xlane.f32.xlu0 %v777
      %v779 = vpop.xlane.xlu0 %778
      %v780 = vsel %vm743, %v723, 0.0
      %781 = vadd.xlane.f32.xlu0 %v780
      %v782 = vpop.xlane.xlu0 %781
      %v783 = vsel %vm743, %v724, 0.0
      %784 = vadd.xlane.f32.xlu0 %v783
      %v785 = vpop.xlane.xlu0 %784
      %v786 = vsel %vm743, %v725, 0.0
      %787 = vadd.xlane.f32.xlu0 %v786
      %v788 = vpop.xlane.xlu0 %787
      %v789 = vsel %vm743, %v726, 0.0
      %790 = vadd.xlane.f32.xlu0 %v789
      %v791 = vpop.xlane.xlu0 %790
      %v792 = vsel %vm743, %v727, 0.0
      %793 = vadd.xlane.f32.xlu0 %v792
      %v794 = vpop.xlane.xlu0 %793
      %v795 = vsel %vm743, %v728, 0.0
      %796 = vadd.xlane.f32.xlu0 %v795
      %v797 = vpop.xlane.xlu0 %796
      %v798 = vsel %vm743, %v729, 0.0
      %799 = vadd.xlane.f32.xlu0 %v798
      %v800 = vpop.xlane.xlu0 %799
      %v801 = vsel %vm743, %v730, 0.0
      %802 = vadd.xlane.f32.xlu0 %v801
      %v803 = vpop.xlane.xlu0 %802
      %v804 = vsel %vm743, %v731, 0.0
      %805 = vadd.xlane.f32.xlu0 %v804
      %v806 = vpop.xlane.xlu0 %805
      %v807 = vsel %vm743, %v732, 0.0
      %808 = vadd.xlane.f32.xlu0 %v807
      %v809 = vpop.xlane.xlu0 %808
      %v810 = vsel %vm743, %v733, 0.0
      %811 = vadd.xlane.f32.xlu0 %v810
      %v812 = vpop.xlane.xlu0 %811
      %v813 = vsel %vm743, %v734, 0.0
      %814 = vadd.xlane.f32.xlu0 %v813
      %v815 = vpop.xlane.xlu0 %814
      %v816 = vsel %vm743, %v735, 0.0
      %817 = vadd.xlane.f32.xlu0 %v816
      %v818 = vpop.xlane.xlu0 %817
      %v819 = vsel %vm743, %v736, 0.0
      %820 = vadd.xlane.f32.xlu0 %v819
      %v821 = vpop.xlane.xlu0 %820
      %v822 = vsel %vm743, %v737, 0.0
      %823 = vadd.xlane.f32.xlu0 %v822
      %v824 = vpop.xlane.xlu0 %823
      %v825 = vsel %vm743, %v738, 0.0
      %826 = vadd.xlane.f32.xlu0 %v825
      %v827 = vpop.xlane.xlu0 %826
      %v828 = vsel %vm743, %v739, 0.0
      %829 = vadd.xlane.f32.xlu0 %v828
      %v830 = vpop.xlane.xlu0 %829
      %v831 = vsel %vm743, %v740, 0.0
      %832 = vadd.xlane.f32.xlu0 %v831
      %v833 = vpop.xlane.xlu0 %832
      %v834 = vsel %vm743, %v741, 0.0
      %835 = vadd.xlane.f32.xlu0 %v834
      %v836 = vpop.xlane.xlu0 %835
      %v837 = vsel %vm743, %v742, 0.0
      %838 = vadd.xlane.f32.xlu0 %v837
      %v839 = vpop.xlane.xlu0 %838
      %v840 = vstv %s230
      %v841 = vadd.f32 %v746, %v840
      %v842 = vadd.f32 %v749, %v840
      %v843 = vadd.f32 %v752, %v840
      %v844 = vadd.f32 %v755, %v840
      %v845 = vadd.f32 %v758, %v840
      %v846 = vadd.f32 %v761, %v840
      %v847 = vadd.f32 %v764, %v840
      %v848 = vadd.f32 %v767, %v840
      %v849 = vadd.f32 %v770, %v840
      %v850 = vadd.f32 %v773, %v840
      %v851 = vadd.f32 %v776, %v840
      %v852 = vadd.f32 %v779, %v840
      %v853 = vadd.f32 %v782, %v840
      %v854 = vadd.f32 %v785, %v840
      %v855 = vadd.f32 %v788, %v840
      %v856 = vadd.f32 %v791, %v840
      %v857 = vadd.f32 %v794, %v840
      %v858 = vadd.f32 %v797, %v840
      %v859 = vadd.f32 %v800, %v840
      %v860 = vadd.f32 %v803, %v840
      %v861 = vadd.f32 %v806, %v840
      %v862 = vadd.f32 %v809, %v840
      %v863 = vadd.f32 %v812, %v840
      %v864 = vadd.f32 %v815, %v840
      %v865 = vadd.f32 %v818, %v840
      %v866 = vadd.f32 %v821, %v840
      %v867 = vadd.f32 %v824, %v840
      %v868 = vadd.f32 %v827, %v840
      %v869 = vadd.f32 %v830, %v840
      %v870 = vadd.f32 %v833, %v840
      %v871 = vadd.f32 %v836, %v840
      %v872 = vadd.f32 %v839, %v840
      %v905 = vlaneseq
      %v906 = vshrl.u32 %v905, 7
      %v907 = vsub.s32 0, %v906
      %v908 = vrot.slane %v841, %v907
      %v909 = vlaneseq
      %v910 = vshrl.u32 %v909, 7
      %v911 = vsub.s32 1, %v910
      %v912 = vrot.slane %v841, %v911
      %v913 = vlaneseq
      %v914 = vshrl.u32 %v913, 7
      %v915 = vsub.s32 2, %v914
      %v916 = vrot.slane %v841, %v915
      %v917 = vlaneseq
      %v918 = vshrl.u32 %v917, 7
      %v919 = vsub.s32 3, %v918
      %v920 = vrot.slane %v841, %v919
      %v921 = vlaneseq
      %v922 = vshrl.u32 %v921, 7
      %v923 = vsub.s32 4, %v922
      %v924 = vrot.slane %v841, %v923
      %v925 = vlaneseq
      %v926 = vshrl.u32 %v925, 7
      %v927 = vsub.s32 5, %v926
      %v928 = vrot.slane %v841, %v927
      %v929 = vlaneseq
      %v930 = vshrl.u32 %v929, 7
      %v931 = vsub.s32 6, %v930
      %v932 = vrot.slane %v841, %v931
      %v933 = vlaneseq
      %v934 = vshrl.u32 %v933, 7
      %v935 = vsub.s32 7, %v934
      %v936 = vrot.slane %v841, %v935
      %v937 = vlaneseq
      %v938 = vshrl.u32 %v937, 7
      %v939 = vsub.s32 0, %v938
      %v940 = vrot.slane %v842, %v939
      %v941 = vlaneseq
      %v942 = vshrl.u32 %v941, 7
      %v943 = vsub.s32 1, %v942
      %v944 = vrot.slane %v842, %v943
      %v945 = vlaneseq
      %v946 = vshrl.u32 %v945, 7
      %v947 = vsub.s32 2, %v946
      %v948 = vrot.slane %v842, %v947
      %v949 = vlaneseq
      %v950 = vshrl.u32 %v949, 7
      %v951 = vsub.s32 3, %v950
      %v952 = vrot.slane %v842, %v951
      %v953 = vlaneseq
      %v954 = vshrl.u32 %v953, 7
      %v955 = vsub.s32 4, %v954
      %v956 = vrot.slane %v842, %v955
      %v957 = vlaneseq
      %v958 = vshrl.u32 %v957, 7
      %v959 = vsub.s32 5, %v958
      %v960 = vrot.slane %v842, %v959
      %v961 = vlaneseq
      %v962 = vshrl.u32 %v961, 7
      %v963 = vsub.s32 6, %v962
      %v964 = vrot.slane %v842, %v963
      %v965 = vlaneseq
      %v966 = vshrl.u32 %v965, 7
      %v967 = vsub.s32 7, %v966
      %v968 = vrot.slane %v842, %v967
      %v969 = vlaneseq
      %v970 = vshrl.u32 %v969, 7
      %v971 = vsub.s32 0, %v970
      %v972 = vrot.slane %v843, %v971
      %v973 = vlaneseq
      %v974 = vshrl.u32 %v973, 7
      %v975 = vsub.s32 1, %v974
      %v976 = vrot.slane %v843, %v975
      %v977 = vlaneseq
      %v978 = vshrl.u32 %v977, 7
      %v979 = vsub.s32 2, %v978
      %v980 = vrot.slane %v843, %v979
      %v981 = vlaneseq
      %v982 = vshrl.u32 %v981, 7
      %v983 = vsub.s32 3, %v982
      %v984 = vrot.slane %v843, %v983
      %v985 = vlaneseq
      %v986 = vshrl.u32 %v985, 7
      %v987 = vsub.s32 4, %v986
      %v988 = vrot.slane %v843, %v987
      %v989 = vlaneseq
      %v990 = vshrl.u32 %v989, 7
      %v991 = vsub.s32 5, %v990
      %v992 = vrot.slane %v843, %v991
      %v993 = vlaneseq
      %v994 = vshrl.u32 %v993, 7
      %v995 = vsub.s32 6, %v994
      %v996 = vrot.slane %v843, %v995
      %v997 = vlaneseq
      %v998 = vshrl.u32 %v997, 7
      %v999 = vsub.s32 7, %v998
      %v1000 = vrot.slane %v843, %v999
      %v1001 = vlaneseq
      %v1002 = vshrl.u32 %v1001, 7
      %v1003 = vsub.s32 0, %v1002
      %v1004 = vrot.slane %v844, %v1003
      %v1005 = vlaneseq
      %v1006 = vshrl.u32 %v1005, 7
      %v1007 = vsub.s32 1, %v1006
      %v1008 = vrot.slane %v844, %v1007
      %v1009 = vlaneseq
      %v1010 = vshrl.u32 %v1009, 7
      %v1011 = vsub.s32 2, %v1010
      %v1012 = vrot.slane %v844, %v1011
      %v1013 = vlaneseq
      %v1014 = vshrl.u32 %v1013, 7
      %v1015 = vsub.s32 3, %v1014
      %v1016 = vrot.slane %v844, %v1015
      %v1017 = vlaneseq
      %v1018 = vshrl.u32 %v1017, 7
      %v1019 = vsub.s32 4, %v1018
      %v1020 = vrot.slane %v844, %v1019
      %v1021 = vlaneseq
      %v1022 = vshrl.u32 %v1021, 7
      %v1023 = vsub.s32 5, %v1022
      %v1024 = vrot.slane %v844, %v1023
      %v1025 = vlaneseq
      %v1026 = vshrl.u32 %v1025, 7
      %v1027 = vsub.s32 6, %v1026
      %v1028 = vrot.slane %v844, %v1027
      %v1029 = vlaneseq
      %v1030 = vshrl.u32 %v1029, 7
      %v1031 = vsub.s32 7, %v1030
      %v1032 = vrot.slane %v844, %v1031
      %v1033 = vlaneseq
      %v1034 = vshrl.u32 %v1033, 7
      %v1035 = vsub.s32 0, %v1034
      %v1036 = vrot.slane %v845, %v1035
      %v1037 = vlaneseq
      %v1038 = vshrl.u32 %v1037, 7
      %v1039 = vsub.s32 1, %v1038
      %v1040 = vrot.slane %v845, %v1039
      %v1041 = vlaneseq
      %v1042 = vshrl.u32 %v1041, 7
      %v1043 = vsub.s32 2, %v1042
      %v1044 = vrot.slane %v845, %v1043
      %v1045 = vlaneseq
      %v1046 = vshrl.u32 %v1045, 7
      %v1047 = vsub.s32 3, %v1046
      %v1048 = vrot.slane %v845, %v1047
      %v1049 = vlaneseq
      %v1050 = vshrl.u32 %v1049, 7
      %v1051 = vsub.s32 4, %v1050
      %v1052 = vrot.slane %v845, %v1051
      %v1053 = vlaneseq
      %v1054 = vshrl.u32 %v1053, 7
      %v1055 = vsub.s32 5, %v1054
      %v1056 = vrot.slane %v845, %v1055
      %v1057 = vlaneseq
      %v1058 = vshrl.u32 %v1057, 7
      %v1059 = vsub.s32 6, %v1058
      %v1060 = vrot.slane %v845, %v1059
      %v1061 = vlaneseq
      %v1062 = vshrl.u32 %v1061, 7
      %v1063 = vsub.s32 7, %v1062
      %v1064 = vrot.slane %v845, %v1063
      %v1065 = vlaneseq
      %v1066 = vshrl.u32 %v1065, 7
      %v1067 = vsub.s32 0, %v1066
      %v1068 = vrot.slane %v846, %v1067
      %v1069 = vlaneseq
      %v1070 = vshrl.u32 %v1069, 7
      %v1071 = vsub.s32 1, %v1070
      %v1072 = vrot.slane %v846, %v1071
      %v1073 = vlaneseq
      %v1074 = vshrl.u32 %v1073, 7
      %v1075 = vsub.s32 2, %v1074
      %v1076 = vrot.slane %v846, %v1075
      %v1077 = vlaneseq
      %v1078 = vshrl.u32 %v1077, 7
      %v1079 = vsub.s32 3, %v1078
      %v1080 = vrot.slane %v846, %v1079
      %v1081 = vlaneseq
      %v1082 = vshrl.u32 %v1081, 7
      %v1083 = vsub.s32 4, %v1082
      %v1084 = vrot.slane %v846, %v1083
      %v1085 = vlaneseq
      %v1086 = vshrl.u32 %v1085, 7
      %v1087 = vsub.s32 5, %v1086
      %v1088 = vrot.slane %v846, %v1087
      %v1089 = vlaneseq
      %v1090 = vshrl.u32 %v1089, 7
      %v1091 = vsub.s32 6, %v1090
      %v1092 = vrot.slane %v846, %v1091
      %v1093 = vlaneseq
      %v1094 = vshrl.u32 %v1093, 7
      %v1095 = vsub.s32 7, %v1094
      %v1096 = vrot.slane %v846, %v1095
      %v1097 = vlaneseq
      %v1098 = vshrl.u32 %v1097, 7
      %v1099 = vsub.s32 0, %v1098
      %v1100 = vrot.slane %v847, %v1099
      %v1101 = vlaneseq
      %v1102 = vshrl.u32 %v1101, 7
      %v1103 = vsub.s32 1, %v1102
      %v1104 = vrot.slane %v847, %v1103
      %v1105 = vlaneseq
      %v1106 = vshrl.u32 %v1105, 7
      %v1107 = vsub.s32 2, %v1106
      %v1108 = vrot.slane %v847, %v1107
      %v1109 = vlaneseq
      %v1110 = vshrl.u32 %v1109, 7
      %v1111 = vsub.s32 3, %v1110
      %v1112 = vrot.slane %v847, %v1111
      %v1113 = vlaneseq
      %v1114 = vshrl.u32 %v1113, 7
      %v1115 = vsub.s32 4, %v1114
      %v1116 = vrot.slane %v847, %v1115
      %v1117 = vlaneseq
      %v1118 = vshrl.u32 %v1117, 7
      %v1119 = vsub.s32 5, %v1118
      %v1120 = vrot.slane %v847, %v1119
      %v1121 = vlaneseq
      %v1122 = vshrl.u32 %v1121, 7
      %v1123 = vsub.s32 6, %v1122
      %v1124 = vrot.slane %v847, %v1123
      %v1125 = vlaneseq
      %v1126 = vshrl.u32 %v1125, 7
      %v1127 = vsub.s32 7, %v1126
      %v1128 = vrot.slane %v847, %v1127
      %v1129 = vlaneseq
      %v1130 = vshrl.u32 %v1129, 7
      %v1131 = vsub.s32 0, %v1130
      %v1132 = vrot.slane %v848, %v1131
      %v1133 = vlaneseq
      %v1134 = vshrl.u32 %v1133, 7
      %v1135 = vsub.s32 1, %v1134
      %v1136 = vrot.slane %v848, %v1135
      %v1137 = vlaneseq
      %v1138 = vshrl.u32 %v1137, 7
      %v1139 = vsub.s32 2, %v1138
      %v1140 = vrot.slane %v848, %v1139
      %v1141 = vlaneseq
      %v1142 = vshrl.u32 %v1141, 7
      %v1143 = vsub.s32 3, %v1142
      %v1144 = vrot.slane %v848, %v1143
      %v1145 = vlaneseq
      %v1146 = vshrl.u32 %v1145, 7
      %v1147 = vsub.s32 4, %v1146
      %v1148 = vrot.slane %v848, %v1147
      %v1149 = vlaneseq
      %v1150 = vshrl.u32 %v1149, 7
      %v1151 = vsub.s32 5, %v1150
      %v1152 = vrot.slane %v848, %v1151
      %v1153 = vlaneseq
      %v1154 = vshrl.u32 %v1153, 7
      %v1155 = vsub.s32 6, %v1154
      %v1156 = vrot.slane %v848, %v1155
      %v1157 = vlaneseq
      %v1158 = vshrl.u32 %v1157, 7
      %v1159 = vsub.s32 7, %v1158
      %v1160 = vrot.slane %v848, %v1159
      %v1161 = vlaneseq
      %v1162 = vshrl.u32 %v1161, 7
      %v1163 = vsub.s32 0, %v1162
      %v1164 = vrot.slane %v849, %v1163
      %v1165 = vlaneseq
      %v1166 = vshrl.u32 %v1165, 7
      %v1167 = vsub.s32 1, %v1166
      %v1168 = vrot.slane %v849, %v1167
      %v1169 = vlaneseq
      %v1170 = vshrl.u32 %v1169, 7
      %v1171 = vsub.s32 2, %v1170
      %v1172 = vrot.slane %v849, %v1171
      %v1173 = vlaneseq
      %v1174 = vshrl.u32 %v1173, 7
      %v1175 = vsub.s32 3, %v1174
      %v1176 = vrot.slane %v849, %v1175
      %v1177 = vlaneseq
      %v1178 = vshrl.u32 %v1177, 7
      %v1179 = vsub.s32 4, %v1178
      %v1180 = vrot.slane %v849, %v1179
      %v1181 = vlaneseq
      %v1182 = vshrl.u32 %v1181, 7
      %v1183 = vsub.s32 5, %v1182
      %v1184 = vrot.slane %v849, %v1183
      %v1185 = vlaneseq
      %v1186 = vshrl.u32 %v1185, 7
      %v1187 = vsub.s32 6, %v1186
      %v1188 = vrot.slane %v849, %v1187
      %v1189 = vlaneseq
      %v1190 = vshrl.u32 %v1189, 7
      %v1191 = vsub.s32 7, %v1190
      %v1192 = vrot.slane %v849, %v1191
      %v1193 = vlaneseq
      %v1194 = vshrl.u32 %v1193, 7
      %v1195 = vsub.s32 0, %v1194
      %v1196 = vrot.slane %v850, %v1195
      %v1197 = vlaneseq
      %v1198 = vshrl.u32 %v1197, 7
      %v1199 = vsub.s32 1, %v1198
      %v1200 = vrot.slane %v850, %v1199
      %v1201 = vlaneseq
      %v1202 = vshrl.u32 %v1201, 7
      %v1203 = vsub.s32 2, %v1202
      %v1204 = vrot.slane %v850, %v1203
      %v1205 = vlaneseq
      %v1206 = vshrl.u32 %v1205, 7
      %v1207 = vsub.s32 3, %v1206
      %v1208 = vrot.slane %v850, %v1207
      %v1209 = vlaneseq
      %v1210 = vshrl.u32 %v1209, 7
      %v1211 = vsub.s32 4, %v1210
      %v1212 = vrot.slane %v850, %v1211
      %v1213 = vlaneseq
      %v1214 = vshrl.u32 %v1213, 7
      %v1215 = vsub.s32 5, %v1214
      %v1216 = vrot.slane %v850, %v1215
      %v1217 = vlaneseq
      %v1218 = vshrl.u32 %v1217, 7
      %v1219 = vsub.s32 6, %v1218
      %v1220 = vrot.slane %v850, %v1219
      %v1221 = vlaneseq
      %v1222 = vshrl.u32 %v1221, 7
      %v1223 = vsub.s32 7, %v1222
      %v1224 = vrot.slane %v850, %v1223
      %v1225 = vlaneseq
      %v1226 = vshrl.u32 %v1225, 7
      %v1227 = vsub.s32 0, %v1226
      %v1228 = vrot.slane %v851, %v1227
      %v1229 = vlaneseq
      %v1230 = vshrl.u32 %v1229, 7
      %v1231 = vsub.s32 1, %v1230
      %v1232 = vrot.slane %v851, %v1231
      %v1233 = vlaneseq
      %v1234 = vshrl.u32 %v1233, 7
      %v1235 = vsub.s32 2, %v1234
      %v1236 = vrot.slane %v851, %v1235
      %v1237 = vlaneseq
      %v1238 = vshrl.u32 %v1237, 7
      %v1239 = vsub.s32 3, %v1238
      %v1240 = vrot.slane %v851, %v1239
      %v1241 = vlaneseq
      %v1242 = vshrl.u32 %v1241, 7
      %v1243 = vsub.s32 4, %v1242
      %v1244 = vrot.slane %v851, %v1243
      %v1245 = vlaneseq
      %v1246 = vshrl.u32 %v1245, 7
      %v1247 = vsub.s32 5, %v1246
      %v1248 = vrot.slane %v851, %v1247
      %v1249 = vlaneseq
      %v1250 = vshrl.u32 %v1249, 7
      %v1251 = vsub.s32 6, %v1250
      %v1252 = vrot.slane %v851, %v1251
      %v1253 = vlaneseq
      %v1254 = vshrl.u32 %v1253, 7
      %v1255 = vsub.s32 7, %v1254
      %v1256 = vrot.slane %v851, %v1255
      %v1257 = vlaneseq
      %v1258 = vshrl.u32 %v1257, 7
      %v1259 = vsub.s32 0, %v1258
      %v1260 = vrot.slane %v852, %v1259
      %v1261 = vlaneseq
      %v1262 = vshrl.u32 %v1261, 7
      %v1263 = vsub.s32 1, %v1262
      %v1264 = vrot.slane %v852, %v1263
      %v1265 = vlaneseq
      %v1266 = vshrl.u32 %v1265, 7
      %v1267 = vsub.s32 2, %v1266
      %v1268 = vrot.slane %v852, %v1267
      %v1269 = vlaneseq
      %v1270 = vshrl.u32 %v1269, 7
      %v1271 = vsub.s32 3, %v1270
      %v1272 = vrot.slane %v852, %v1271
      %v1273 = vlaneseq
      %v1274 = vshrl.u32 %v1273, 7
      %v1275 = vsub.s32 4, %v1274
      %v1276 = vrot.slane %v852, %v1275
      %v1277 = vlaneseq
      %v1278 = vshrl.u32 %v1277, 7
      %v1279 = vsub.s32 5, %v1278
      %v1280 = vrot.slane %v852, %v1279
      %v1281 = vlaneseq
      %v1282 = vshrl.u32 %v1281, 7
      %v1283 = vsub.s32 6, %v1282
      %v1284 = vrot.slane %v852, %v1283
      %v1285 = vlaneseq
      %v1286 = vshrl.u32 %v1285, 7
      %v1287 = vsub.s32 7, %v1286
      %v1288 = vrot.slane %v852, %v1287
      %v1289 = vlaneseq
      %v1290 = vshrl.u32 %v1289, 7
      %v1291 = vsub.s32 0, %v1290
      %v1292 = vrot.slane %v853, %v1291
      %v1293 = vlaneseq
      %v1294 = vshrl.u32 %v1293, 7
      %v1295 = vsub.s32 1, %v1294
      %v1296 = vrot.slane %v853, %v1295
      %v1297 = vlaneseq
      %v1298 = vshrl.u32 %v1297, 7
      %v1299 = vsub.s32 2, %v1298
      %v1300 = vrot.slane %v853, %v1299
      %v1301 = vlaneseq
      %v1302 = vshrl.u32 %v1301, 7
      %v1303 = vsub.s32 3, %v1302
      %v1304 = vrot.slane %v853, %v1303
      %v1305 = vlaneseq
      %v1306 = vshrl.u32 %v1305, 7
      %v1307 = vsub.s32 4, %v1306
      %v1308 = vrot.slane %v853, %v1307
      %v1309 = vlaneseq
      %v1310 = vshrl.u32 %v1309, 7
      %v1311 = vsub.s32 5, %v1310
      %v1312 = vrot.slane %v853, %v1311
      %v1313 = vlaneseq
      %v1314 = vshrl.u32 %v1313, 7
      %v1315 = vsub.s32 6, %v1314
      %v1316 = vrot.slane %v853, %v1315
      %v1317 = vlaneseq
      %v1318 = vshrl.u32 %v1317, 7
      %v1319 = vsub.s32 7, %v1318
      %v1320 = vrot.slane %v853, %v1319
      %v1321 = vlaneseq
      %v1322 = vshrl.u32 %v1321, 7
      %v1323 = vsub.s32 0, %v1322
      %v1324 = vrot.slane %v854, %v1323
      %v1325 = vlaneseq
      %v1326 = vshrl.u32 %v1325, 7
      %v1327 = vsub.s32 1, %v1326
      %v1328 = vrot.slane %v854, %v1327
      %v1329 = vlaneseq
      %v1330 = vshrl.u32 %v1329, 7
      %v1331 = vsub.s32 2, %v1330
      %v1332 = vrot.slane %v854, %v1331
      %v1333 = vlaneseq
      %v1334 = vshrl.u32 %v1333, 7
      %v1335 = vsub.s32 3, %v1334
      %v1336 = vrot.slane %v854, %v1335
      %v1337 = vlaneseq
      %v1338 = vshrl.u32 %v1337, 7
      %v1339 = vsub.s32 4, %v1338
      %v1340 = vrot.slane %v854, %v1339
      %v1341 = vlaneseq
      %v1342 = vshrl.u32 %v1341, 7
      %v1343 = vsub.s32 5, %v1342
      %v1344 = vrot.slane %v854, %v1343
      %v1345 = vlaneseq
      %v1346 = vshrl.u32 %v1345, 7
      %v1347 = vsub.s32 6, %v1346
      %v1348 = vrot.slane %v854, %v1347
      %v1349 = vlaneseq
      %v1350 = vshrl.u32 %v1349, 7
      %v1351 = vsub.s32 7, %v1350
      %v1352 = vrot.slane %v854, %v1351
      %v1353 = vlaneseq
      %v1354 = vshrl.u32 %v1353, 7
      %v1355 = vsub.s32 0, %v1354
      %v1356 = vrot.slane %v855, %v1355
      %v1357 = vlaneseq
      %v1358 = vshrl.u32 %v1357, 7
      %v1359 = vsub.s32 1, %v1358
      %v1360 = vrot.slane %v855, %v1359
      %v1361 = vlaneseq
      %v1362 = vshrl.u32 %v1361, 7
      %v1363 = vsub.s32 2, %v1362
      %v1364 = vrot.slane %v855, %v1363
      %v1365 = vlaneseq
      %v1366 = vshrl.u32 %v1365, 7
      %v1367 = vsub.s32 3, %v1366
      %v1368 = vrot.slane %v855, %v1367
      %v1369 = vlaneseq
      %v1370 = vshrl.u32 %v1369, 7
      %v1371 = vsub.s32 4, %v1370
      %v1372 = vrot.slane %v855, %v1371
      %v1373 = vlaneseq
      %v1374 = vshrl.u32 %v1373, 7
      %v1375 = vsub.s32 5, %v1374
      %v1376 = vrot.slane %v855, %v1375
      %v1377 = vlaneseq
      %v1378 = vshrl.u32 %v1377, 7
      %v1379 = vsub.s32 6, %v1378
      %v1380 = vrot.slane %v855, %v1379
      %v1381 = vlaneseq
      %v1382 = vshrl.u32 %v1381, 7
      %v1383 = vsub.s32 7, %v1382
      %v1384 = vrot.slane %v855, %v1383
      %v1385 = vlaneseq
      %v1386 = vshrl.u32 %v1385, 7
      %v1387 = vsub.s32 0, %v1386
      %v1388 = vrot.slane %v856, %v1387
      %v1389 = vlaneseq
      %v1390 = vshrl.u32 %v1389, 7
      %v1391 = vsub.s32 1, %v1390
      %v1392 = vrot.slane %v856, %v1391
      %v1393 = vlaneseq
      %v1394 = vshrl.u32 %v1393, 7
      %v1395 = vsub.s32 2, %v1394
      %v1396 = vrot.slane %v856, %v1395
      %v1397 = vlaneseq
      %v1398 = vshrl.u32 %v1397, 7
      %v1399 = vsub.s32 3, %v1398
      %v1400 = vrot.slane %v856, %v1399
      %v1401 = vlaneseq
      %v1402 = vshrl.u32 %v1401, 7
      %v1403 = vsub.s32 4, %v1402
      %v1404 = vrot.slane %v856, %v1403
      %v1405 = vlaneseq
      %v1406 = vshrl.u32 %v1405, 7
      %v1407 = vsub.s32 5, %v1406
      %v1408 = vrot.slane %v856, %v1407
      %v1409 = vlaneseq
      %v1410 = vshrl.u32 %v1409, 7
      %v1411 = vsub.s32 6, %v1410
      %v1412 = vrot.slane %v856, %v1411
      %v1413 = vlaneseq
      %v1414 = vshrl.u32 %v1413, 7
      %v1415 = vsub.s32 7, %v1414
      %v1416 = vrot.slane %v856, %v1415
      %v1417 = vlaneseq
      %v1418 = vshrl.u32 %v1417, 7
      %v1419 = vsub.s32 0, %v1418
      %v1420 = vrot.slane %v857, %v1419
      %v1421 = vlaneseq
      %v1422 = vshrl.u32 %v1421, 7
      %v1423 = vsub.s32 1, %v1422
      %v1424 = vrot.slane %v857, %v1423
      %v1425 = vlaneseq
      %v1426 = vshrl.u32 %v1425, 7
      %v1427 = vsub.s32 2, %v1426
      %v1428 = vrot.slane %v857, %v1427
      %v1429 = vlaneseq
      %v1430 = vshrl.u32 %v1429, 7
      %v1431 = vsub.s32 3, %v1430
      %v1432 = vrot.slane %v857, %v1431
      %v1433 = vlaneseq
      %v1434 = vshrl.u32 %v1433, 7
      %v1435 = vsub.s32 4, %v1434
      %v1436 = vrot.slane %v857, %v1435
      %v1437 = vlaneseq
      %v1438 = vshrl.u32 %v1437, 7
      %v1439 = vsub.s32 5, %v1438
      %v1440 = vrot.slane %v857, %v1439
      %v1441 = vlaneseq
      %v1442 = vshrl.u32 %v1441, 7
      %v1443 = vsub.s32 6, %v1442
      %v1444 = vrot.slane %v857, %v1443
      %v1445 = vlaneseq
      %v1446 = vshrl.u32 %v1445, 7
      %v1447 = vsub.s32 7, %v1446
      %v1448 = vrot.slane %v857, %v1447
      %v1449 = vlaneseq
      %v1450 = vshrl.u32 %v1449, 7
      %v1451 = vsub.s32 0, %v1450
      %v1452 = vrot.slane %v858, %v1451
      %v1453 = vlaneseq
      %v1454 = vshrl.u32 %v1453, 7
      %v1455 = vsub.s32 1, %v1454
      %v1456 = vrot.slane %v858, %v1455
      %v1457 = vlaneseq
      %v1458 = vshrl.u32 %v1457, 7
      %v1459 = vsub.s32 2, %v1458
      %v1460 = vrot.slane %v858, %v1459
      %v1461 = vlaneseq
      %v1462 = vshrl.u32 %v1461, 7
      %v1463 = vsub.s32 3, %v1462
      %v1464 = vrot.slane %v858, %v1463
      %v1465 = vlaneseq
      %v1466 = vshrl.u32 %v1465, 7
      %v1467 = vsub.s32 4, %v1466
      %v1468 = vrot.slane %v858, %v1467
      %v1469 = vlaneseq
      %v1470 = vshrl.u32 %v1469, 7
      %v1471 = vsub.s32 5, %v1470
      %v1472 = vrot.slane %v858, %v1471
      %v1473 = vlaneseq
      %v1474 = vshrl.u32 %v1473, 7
      %v1475 = vsub.s32 6, %v1474
      %v1476 = vrot.slane %v858, %v1475
      %v1477 = vlaneseq
      %v1478 = vshrl.u32 %v1477, 7
      %v1479 = vsub.s32 7, %v1478
      %v1480 = vrot.slane %v858, %v1479
      %v1481 = vlaneseq
      %v1482 = vshrl.u32 %v1481, 7
      %v1483 = vsub.s32 0, %v1482
      %v1484 = vrot.slane %v859, %v1483
      %v1485 = vlaneseq
      %v1486 = vshrl.u32 %v1485, 7
      %v1487 = vsub.s32 1, %v1486
      %v1488 = vrot.slane %v859, %v1487
      %v1489 = vlaneseq
      %v1490 = vshrl.u32 %v1489, 7
      %v1491 = vsub.s32 2, %v1490
      %v1492 = vrot.slane %v859, %v1491
      %v1493 = vlaneseq
      %v1494 = vshrl.u32 %v1493, 7
      %v1495 = vsub.s32 3, %v1494
      %v1496 = vrot.slane %v859, %v1495
      %v1497 = vlaneseq
      %v1498 = vshrl.u32 %v1497, 7
      %v1499 = vsub.s32 4, %v1498
      %v1500 = vrot.slane %v859, %v1499
      %v1501 = vlaneseq
      %v1502 = vshrl.u32 %v1501, 7
      %v1503 = vsub.s32 5, %v1502
      %v1504 = vrot.slane %v859, %v1503
      %v1505 = vlaneseq
      %v1506 = vshrl.u32 %v1505, 7
      %v1507 = vsub.s32 6, %v1506
      %v1508 = vrot.slane %v859, %v1507
      %v1509 = vlaneseq
      %v1510 = vshrl.u32 %v1509, 7
      %v1511 = vsub.s32 7, %v1510
      %v1512 = vrot.slane %v859, %v1511
      %v1513 = vlaneseq
      %v1514 = vshrl.u32 %v1513, 7
      %v1515 = vsub.s32 0, %v1514
      %v1516 = vrot.slane %v860, %v1515
      %v1517 = vlaneseq
      %v1518 = vshrl.u32 %v1517, 7
      %v1519 = vsub.s32 1, %v1518
      %v1520 = vrot.slane %v860, %v1519
      %v1521 = vlaneseq
      %v1522 = vshrl.u32 %v1521, 7
      %v1523 = vsub.s32 2, %v1522
      %v1524 = vrot.slane %v860, %v1523
      %v1525 = vlaneseq
      %v1526 = vshrl.u32 %v1525, 7
      %v1527 = vsub.s32 3, %v1526
      %v1528 = vrot.slane %v860, %v1527
      %v1529 = vlaneseq
      %v1530 = vshrl.u32 %v1529, 7
      %v1531 = vsub.s32 4, %v1530
      %v1532 = vrot.slane %v860, %v1531
      %v1533 = vlaneseq
      %v1534 = vshrl.u32 %v1533, 7
      %v1535 = vsub.s32 5, %v1534
      %v1536 = vrot.slane %v860, %v1535
      %v1537 = vlaneseq
      %v1538 = vshrl.u32 %v1537, 7
      %v1539 = vsub.s32 6, %v1538
      %v1540 = vrot.slane %v860, %v1539
      %v1541 = vlaneseq
      %v1542 = vshrl.u32 %v1541, 7
      %v1543 = vsub.s32 7, %v1542
      %v1544 = vrot.slane %v860, %v1543
      %v1545 = vlaneseq
      %v1546 = vshrl.u32 %v1545, 7
      %v1547 = vsub.s32 0, %v1546
      %v1548 = vrot.slane %v861, %v1547
      %v1549 = vlaneseq
      %v1550 = vshrl.u32 %v1549, 7
      %v1551 = vsub.s32 1, %v1550
      %v1552 = vrot.slane %v861, %v1551
      %v1553 = vlaneseq
      %v1554 = vshrl.u32 %v1553, 7
      %v1555 = vsub.s32 2, %v1554
      %v1556 = vrot.slane %v861, %v1555
      %v1557 = vlaneseq
      %v1558 = vshrl.u32 %v1557, 7
      %v1559 = vsub.s32 3, %v1558
      %v1560 = vrot.slane %v861, %v1559
      %v1561 = vlaneseq
      %v1562 = vshrl.u32 %v1561, 7
      %v1563 = vsub.s32 4, %v1562
      %v1564 = vrot.slane %v861, %v1563
      %v1565 = vlaneseq
      %v1566 = vshrl.u32 %v1565, 7
      %v1567 = vsub.s32 5, %v1566
      %v1568 = vrot.slane %v861, %v1567
      %v1569 = vlaneseq
      %v1570 = vshrl.u32 %v1569, 7
      %v1571 = vsub.s32 6, %v1570
      %v1572 = vrot.slane %v861, %v1571
      %v1573 = vlaneseq
      %v1574 = vshrl.u32 %v1573, 7
      %v1575 = vsub.s32 7, %v1574
      %v1576 = vrot.slane %v861, %v1575
      %v1577 = vlaneseq
      %v1578 = vshrl.u32 %v1577, 7
      %v1579 = vsub.s32 0, %v1578
      %v1580 = vrot.slane %v862, %v1579
      %v1581 = vlaneseq
      %v1582 = vshrl.u32 %v1581, 7
      %v1583 = vsub.s32 1, %v1582
      %v1584 = vrot.slane %v862, %v1583
      %v1585 = vlaneseq
      %v1586 = vshrl.u32 %v1585, 7
      %v1587 = vsub.s32 2, %v1586
      %v1588 = vrot.slane %v862, %v1587
      %v1589 = vlaneseq
      %v1590 = vshrl.u32 %v1589, 7
      %v1591 = vsub.s32 3, %v1590
      %v1592 = vrot.slane %v862, %v1591
      %v1593 = vlaneseq
      %v1594 = vshrl.u32 %v1593, 7
      %v1595 = vsub.s32 4, %v1594
      %v1596 = vrot.slane %v862, %v1595
      %v1597 = vlaneseq
      %v1598 = vshrl.u32 %v1597, 7
      %v1599 = vsub.s32 5, %v1598
      %v1600 = vrot.slane %v862, %v1599
      %v1601 = vlaneseq
      %v1602 = vshrl.u32 %v1601, 7
      %v1603 = vsub.s32 6, %v1602
      %v1604 = vrot.slane %v862, %v1603
      %v1605 = vlaneseq
      %v1606 = vshrl.u32 %v1605, 7
      %v1607 = vsub.s32 7, %v1606
      %v1608 = vrot.slane %v862, %v1607
      %v1609 = vlaneseq
      %v1610 = vshrl.u32 %v1609, 7
      %v1611 = vsub.s32 0, %v1610
      %v1612 = vrot.slane %v863, %v1611
      %v1613 = vlaneseq
      %v1614 = vshrl.u32 %v1613, 7
      %v1615 = vsub.s32 1, %v1614
      %v1616 = vrot.slane %v863, %v1615
      %v1617 = vlaneseq
      %v1618 = vshrl.u32 %v1617, 7
      %v1619 = vsub.s32 2, %v1618
      %v1620 = vrot.slane %v863, %v1619
      %v1621 = vlaneseq
      %v1622 = vshrl.u32 %v1621, 7
      %v1623 = vsub.s32 3, %v1622
      %v1624 = vrot.slane %v863, %v1623
      %v1625 = vlaneseq
      %v1626 = vshrl.u32 %v1625, 7
      %v1627 = vsub.s32 4, %v1626
      %v1628 = vrot.slane %v863, %v1627
      %v1629 = vlaneseq
      %v1630 = vshrl.u32 %v1629, 7
      %v1631 = vsub.s32 5, %v1630
      %v1632 = vrot.slane %v863, %v1631
      %v1633 = vlaneseq
      %v1634 = vshrl.u32 %v1633, 7
      %v1635 = vsub.s32 6, %v1634
      %v1636 = vrot.slane %v863, %v1635
      %v1637 = vlaneseq
      %v1638 = vshrl.u32 %v1637, 7
      %v1639 = vsub.s32 7, %v1638
      %v1640 = vrot.slane %v863, %v1639
      %v1641 = vlaneseq
      %v1642 = vshrl.u32 %v1641, 7
      %v1643 = vsub.s32 0, %v1642
      %v1644 = vrot.slane %v864, %v1643
      %v1645 = vlaneseq
      %v1646 = vshrl.u32 %v1645, 7
      %v1647 = vsub.s32 1, %v1646
      %v1648 = vrot.slane %v864, %v1647
      %v1649 = vlaneseq
      %v1650 = vshrl.u32 %v1649, 7
      %v1651 = vsub.s32 2, %v1650
      %v1652 = vrot.slane %v864, %v1651
      %v1653 = vlaneseq
      %v1654 = vshrl.u32 %v1653, 7
      %v1655 = vsub.s32 3, %v1654
      %v1656 = vrot.slane %v864, %v1655
      %v1657 = vlaneseq
      %v1658 = vshrl.u32 %v1657, 7
      %v1659 = vsub.s32 4, %v1658
      %v1660 = vrot.slane %v864, %v1659
      %v1661 = vlaneseq
      %v1662 = vshrl.u32 %v1661, 7
      %v1663 = vsub.s32 5, %v1662
      %v1664 = vrot.slane %v864, %v1663
      %v1665 = vlaneseq
      %v1666 = vshrl.u32 %v1665, 7
      %v1667 = vsub.s32 6, %v1666
      %v1668 = vrot.slane %v864, %v1667
      %v1669 = vlaneseq
      %v1670 = vshrl.u32 %v1669, 7
      %v1671 = vsub.s32 7, %v1670
      %v1672 = vrot.slane %v864, %v1671
      %v1673 = vlaneseq
      %v1674 = vshrl.u32 %v1673, 7
      %v1675 = vsub.s32 0, %v1674
      %v1676 = vrot.slane %v865, %v1675
      %v1677 = vlaneseq
      %v1678 = vshrl.u32 %v1677, 7
      %v1679 = vsub.s32 1, %v1678
      %v1680 = vrot.slane %v865, %v1679
      %v1681 = vlaneseq
      %v1682 = vshrl.u32 %v1681, 7
      %v1683 = vsub.s32 2, %v1682
      %v1684 = vrot.slane %v865, %v1683
      %v1685 = vlaneseq
      %v1686 = vshrl.u32 %v1685, 7
      %v1687 = vsub.s32 3, %v1686
      %v1688 = vrot.slane %v865, %v1687
      %v1689 = vlaneseq
      %v1690 = vshrl.u32 %v1689, 7
      %v1691 = vsub.s32 4, %v1690
      %v1692 = vrot.slane %v865, %v1691
      %v1693 = vlaneseq
      %v1694 = vshrl.u32 %v1693, 7
      %v1695 = vsub.s32 5, %v1694
      %v1696 = vrot.slane %v865, %v1695
      %v1697 = vlaneseq
      %v1698 = vshrl.u32 %v1697, 7
      %v1699 = vsub.s32 6, %v1698
      %v1700 = vrot.slane %v865, %v1699
      %v1701 = vlaneseq
      %v1702 = vshrl.u32 %v1701, 7
      %v1703 = vsub.s32 7, %v1702
      %v1704 = vrot.slane %v865, %v1703
      %v1705 = vlaneseq
      %v1706 = vshrl.u32 %v1705, 7
      %v1707 = vsub.s32 0, %v1706
      %v1708 = vrot.slane %v866, %v1707
      %v1709 = vlaneseq
      %v1710 = vshrl.u32 %v1709, 7
      %v1711 = vsub.s32 1, %v1710
      %v1712 = vrot.slane %v866, %v1711
      %v1713 = vlaneseq
      %v1714 = vshrl.u32 %v1713, 7
      %v1715 = vsub.s32 2, %v1714
      %v1716 = vrot.slane %v866, %v1715
      %v1717 = vlaneseq
      %v1718 = vshrl.u32 %v1717, 7
      %v1719 = vsub.s32 3, %v1718
      %v1720 = vrot.slane %v866, %v1719
      %v1721 = vlaneseq
      %v1722 = vshrl.u32 %v1721, 7
      %v1723 = vsub.s32 4, %v1722
      %v1724 = vrot.slane %v866, %v1723
      %v1725 = vlaneseq
      %v1726 = vshrl.u32 %v1725, 7
      %v1727 = vsub.s32 5, %v1726
      %v1728 = vrot.slane %v866, %v1727
      %v1729 = vlaneseq
      %v1730 = vshrl.u32 %v1729, 7
      %v1731 = vsub.s32 6, %v1730
      %v1732 = vrot.slane %v866, %v1731
      %v1733 = vlaneseq
      %v1734 = vshrl.u32 %v1733, 7
      %v1735 = vsub.s32 7, %v1734
      %v1736 = vrot.slane %v866, %v1735
      %v1737 = vlaneseq
      %v1738 = vshrl.u32 %v1737, 7
      %v1739 = vsub.s32 0, %v1738
      %v1740 = vrot.slane %v867, %v1739
      %v1741 = vlaneseq
      %v1742 = vshrl.u32 %v1741, 7
      %v1743 = vsub.s32 1, %v1742
      %v1744 = vrot.slane %v867, %v1743
      %v1745 = vlaneseq
      %v1746 = vshrl.u32 %v1745, 7
      %v1747 = vsub.s32 2, %v1746
      %v1748 = vrot.slane %v867, %v1747
      %v1749 = vlaneseq
      %v1750 = vshrl.u32 %v1749, 7
      %v1751 = vsub.s32 3, %v1750
      %v1752 = vrot.slane %v867, %v1751
      %v1753 = vlaneseq
      %v1754 = vshrl.u32 %v1753, 7
      %v1755 = vsub.s32 4, %v1754
      %v1756 = vrot.slane %v867, %v1755
      %v1757 = vlaneseq
      %v1758 = vshrl.u32 %v1757, 7
      %v1759 = vsub.s32 5, %v1758
      %v1760 = vrot.slane %v867, %v1759
      %v1761 = vlaneseq
      %v1762 = vshrl.u32 %v1761, 7
      %v1763 = vsub.s32 6, %v1762
      %v1764 = vrot.slane %v867, %v1763
      %v1765 = vlaneseq
      %v1766 = vshrl.u32 %v1765, 7
      %v1767 = vsub.s32 7, %v1766
      %v1768 = vrot.slane %v867, %v1767
      %v1769 = vlaneseq
      %v1770 = vshrl.u32 %v1769, 7
      %v1771 = vsub.s32 0, %v1770
      %v1772 = vrot.slane %v868, %v1771
      %v1773 = vlaneseq
      %v1774 = vshrl.u32 %v1773, 7
      %v1775 = vsub.s32 1, %v1774
      %v1776 = vrot.slane %v868, %v1775
      %v1777 = vlaneseq
      %v1778 = vshrl.u32 %v1777, 7
      %v1779 = vsub.s32 2, %v1778
      %v1780 = vrot.slane %v868, %v1779
      %v1781 = vlaneseq
      %v1782 = vshrl.u32 %v1781, 7
      %v1783 = vsub.s32 3, %v1782
      %v1784 = vrot.slane %v868, %v1783
      %v1785 = vlaneseq
      %v1786 = vshrl.u32 %v1785, 7
      %v1787 = vsub.s32 4, %v1786
      %v1788 = vrot.slane %v868, %v1787
      %v1789 = vlaneseq
      %v1790 = vshrl.u32 %v1789, 7
      %v1791 = vsub.s32 5, %v1790
      %v1792 = vrot.slane %v868, %v1791
      %v1793 = vlaneseq
      %v1794 = vshrl.u32 %v1793, 7
      %v1795 = vsub.s32 6, %v1794
      %v1796 = vrot.slane %v868, %v1795
      %v1797 = vlaneseq
      %v1798 = vshrl.u32 %v1797, 7
      %v1799 = vsub.s32 7, %v1798
      %v1800 = vrot.slane %v868, %v1799
      %v1801 = vlaneseq
      %v1802 = vshrl.u32 %v1801, 7
      %v1803 = vsub.s32 0, %v1802
      %v1804 = vrot.slane %v869, %v1803
      %v1805 = vlaneseq
      %v1806 = vshrl.u32 %v1805, 7
      %v1807 = vsub.s32 1, %v1806
      %v1808 = vrot.slane %v869, %v1807
      %v1809 = vlaneseq
      %v1810 = vshrl.u32 %v1809, 7
      %v1811 = vsub.s32 2, %v1810
      %v1812 = vrot.slane %v869, %v1811
      %v1813 = vlaneseq
      %v1814 = vshrl.u32 %v1813, 7
      %v1815 = vsub.s32 3, %v1814
      %v1816 = vrot.slane %v869, %v1815
      %v1817 = vlaneseq
      %v1818 = vshrl.u32 %v1817, 7
      %v1819 = vsub.s32 4, %v1818
      %v1820 = vrot.slane %v869, %v1819
      %v1821 = vlaneseq
      %v1822 = vshrl.u32 %v1821, 7
      %v1823 = vsub.s32 5, %v1822
      %v1824 = vrot.slane %v869, %v1823
      %v1825 = vlaneseq
      %v1826 = vshrl.u32 %v1825, 7
      %v1827 = vsub.s32 6, %v1826
      %v1828 = vrot.slane %v869, %v1827
      %v1829 = vlaneseq
      %v1830 = vshrl.u32 %v1829, 7
      %v1831 = vsub.s32 7, %v1830
      %v1832 = vrot.slane %v869, %v1831
      %v1833 = vlaneseq
      %v1834 = vshrl.u32 %v1833, 7
      %v1835 = vsub.s32 0, %v1834
      %v1836 = vrot.slane %v870, %v1835
      %v1837 = vlaneseq
      %v1838 = vshrl.u32 %v1837, 7
      %v1839 = vsub.s32 1, %v1838
      %v1840 = vrot.slane %v870, %v1839
      %v1841 = vlaneseq
      %v1842 = vshrl.u32 %v1841, 7
      %v1843 = vsub.s32 2, %v1842
      %v1844 = vrot.slane %v870, %v1843
      %v1845 = vlaneseq
      %v1846 = vshrl.u32 %v1845, 7
      %v1847 = vsub.s32 3, %v1846
      %v1848 = vrot.slane %v870, %v1847
      %v1849 = vlaneseq
      %v1850 = vshrl.u32 %v1849, 7
      %v1851 = vsub.s32 4, %v1850
      %v1852 = vrot.slane %v870, %v1851
      %v1853 = vlaneseq
      %v1854 = vshrl.u32 %v1853, 7
      %v1855 = vsub.s32 5, %v1854
      %v1856 = vrot.slane %v870, %v1855
      %v1857 = vlaneseq
      %v1858 = vshrl.u32 %v1857, 7
      %v1859 = vsub.s32 6, %v1858
      %v1860 = vrot.slane %v870, %v1859
      %v1861 = vlaneseq
      %v1862 = vshrl.u32 %v1861, 7
      %v1863 = vsub.s32 7, %v1862
      %v1864 = vrot.slane %v870, %v1863
      %v1865 = vlaneseq
      %v1866 = vshrl.u32 %v1865, 7
      %v1867 = vsub.s32 0, %v1866
      %v1868 = vrot.slane %v871, %v1867
      %v1869 = vlaneseq
      %v1870 = vshrl.u32 %v1869, 7
      %v1871 = vsub.s32 1, %v1870
      %v1872 = vrot.slane %v871, %v1871
      %v1873 = vlaneseq
      %v1874 = vshrl.u32 %v1873, 7
      %v1875 = vsub.s32 2, %v1874
      %v1876 = vrot.slane %v871, %v1875
      %v1877 = vlaneseq
      %v1878 = vshrl.u32 %v1877, 7
      %v1879 = vsub.s32 3, %v1878
      %v1880 = vrot.slane %v871, %v1879
      %v1881 = vlaneseq
      %v1882 = vshrl.u32 %v1881, 7
      %v1883 = vsub.s32 4, %v1882
      %v1884 = vrot.slane %v871, %v1883
      %v1885 = vlaneseq
      %v1886 = vshrl.u32 %v1885, 7
      %v1887 = vsub.s32 5, %v1886
      %v1888 = vrot.slane %v871, %v1887
      %v1889 = vlaneseq
      %v1890 = vshrl.u32 %v1889, 7
      %v1891 = vsub.s32 6, %v1890
      %v1892 = vrot.slane %v871, %v1891
      %v1893 = vlaneseq
      %v1894 = vshrl.u32 %v1893, 7
      %v1895 = vsub.s32 7, %v1894
      %v1896 = vrot.slane %v871, %v1895
      %v1897 = vlaneseq
      %v1898 = vshrl.u32 %v1897, 7
      %v1899 = vsub.s32 0, %v1898
      %v1900 = vrot.slane %v872, %v1899
      %v1901 = vlaneseq
      %v1902 = vshrl.u32 %v1901, 7
      %v1903 = vsub.s32 1, %v1902
      %v1904 = vrot.slane %v872, %v1903
      %v1905 = vlaneseq
      %v1906 = vshrl.u32 %v1905, 7
      %v1907 = vsub.s32 2, %v1906
      %v1908 = vrot.slane %v872, %v1907
      %v1909 = vlaneseq
      %v1910 = vshrl.u32 %v1909, 7
      %v1911 = vsub.s32 3, %v1910
      %v1912 = vrot.slane %v872, %v1911
      %v1913 = vlaneseq
      %v1914 = vshrl.u32 %v1913, 7
      %v1915 = vsub.s32 4, %v1914
      %v1916 = vrot.slane %v872, %v1915
      %v1917 = vlaneseq
      %v1918 = vshrl.u32 %v1917, 7
      %v1919 = vsub.s32 5, %v1918
      %v1920 = vrot.slane %v872, %v1919
      %v1921 = vlaneseq
      %v1922 = vshrl.u32 %v1921, 7
      %v1923 = vsub.s32 6, %v1922
      %v1924 = vrot.slane %v872, %v1923
      %v1925 = vlaneseq
      %v1926 = vshrl.u32 %v1925, 7
      %v1927 = vsub.s32 7, %v1926
      %v1928 = vrot.slane %v872, %v1927
      %v1929 = vcombine.low %v908, %v912
      %v1930 = vcombine.low %v916, %v920
      %v1931 = vcombine.low %v924, %v928
      %v1932 = vcombine.low %v932, %v936
      %v1934 = vunpack.c.l.s4 1966171168
      %v1935 = vunpack.c.0.s8 %v1934
      %v1936 = vlaneseq
      %v1937 = vshrl.u32 %v1936, 7
      %v1938 = vsub.s32 %v1935, %v1937
      %v1939 = vrot.slane %v1929, %v1938
      %v1941 = vunpack.c.l.s4 1966171168
      %v1942 = vunpack.c.0.s8 %v1941
      %v1943 = vlaneseq
      %v1944 = vshrl.u32 %v1943, 7
      %v1945 = vsub.s32 %v1942, %v1944
      %v1946 = vrot.slane %v1930, %v1945
      %v1948 = vunpack.c.l.s4 1966171168
      %v1949 = vunpack.c.0.s8 %v1948
      %v1950 = vlaneseq
      %v1951 = vshrl.u32 %v1950, 7
      %v1952 = vsub.s32 %v1949, %v1951
      %v1953 = vrot.slane %v1931, %v1952
      %v1955 = vunpack.c.l.s4 1966171168
      %v1956 = vunpack.c.0.s8 %v1955
      %v1957 = vlaneseq
      %v1958 = vshrl.u32 %v1957, 7
      %v1959 = vsub.s32 %v1956, %v1958
      %v1960 = vrot.slane %v1932, %v1959
      %v1961 = vcombine.low %v1939, %v1946
      %v1962 = vcombine.low %v1953, %v1960
      %v1964 = vunpack.c.l.s4 1966171168
      %v1965 = vunpack.c.0.s8 %v1964
      %v1966 = vlaneseq
      %v1967 = vshrl.u32 %v1966, 7
      %v1968 = vsub.s32 %v1965, %v1967
      %v1969 = vrot.slane %v1961, %v1968
      %v1971 = vunpack.c.l.s4 1966171168
      %v1972 = vunpack.c.0.s8 %v1971
      %v1973 = vlaneseq
      %v1974 = vshrl.u32 %v1973, 7
      %v1975 = vsub.s32 %v1972, %v1974
      %v1976 = vrot.slane %v1962, %v1975
      %v1977 = vcombine.low %v1969, %v1976
      %v1978 = vcombine.low %v940, %v944
      %v1979 = vcombine.low %v948, %v952
      %v1980 = vcombine.low %v956, %v960
      %v1981 = vcombine.low %v964, %v968
      %v1983 = vunpack.c.l.s4 1966171168
      %v1984 = vunpack.c.0.s8 %v1983
      %v1985 = vlaneseq
      %v1986 = vshrl.u32 %v1985, 7
      %v1987 = vsub.s32 %v1984, %v1986
      %v1988 = vrot.slane %v1978, %v1987
      %v1990 = vunpack.c.l.s4 1966171168
      %v1991 = vunpack.c.0.s8 %v1990
      %v1992 = vlaneseq
      %v1993 = vshrl.u32 %v1992, 7
      %v1994 = vsub.s32 %v1991, %v1993
      %v1995 = vrot.slane %v1979, %v1994
      %v1997 = vunpack.c.l.s4 1966171168
      %v1998 = vunpack.c.0.s8 %v1997
      %v1999 = vlaneseq
      %v2000 = vshrl.u32 %v1999, 7
      %v2001 = vsub.s32 %v1998, %v2000
      %v2002 = vrot.slane %v1980, %v2001
      %v2004 = vunpack.c.l.s4 1966171168
      %v2005 = vunpack.c.0.s8 %v2004
      %v2006 = vlaneseq
      %v2007 = vshrl.u32 %v2006, 7
      %v2008 = vsub.s32 %v2005, %v2007
      %v2009 = vrot.slane %v1981, %v2008
      %v2010 = vcombine.low %v1988, %v1995
      %v2011 = vcombine.low %v2002, %v2009
      %v2013 = vunpack.c.l.s4 1966171168
      %v2014 = vunpack.c.0.s8 %v2013
      %v2015 = vlaneseq
      %v2016 = vshrl.u32 %v2015, 7
      %v2017 = vsub.s32 %v2014, %v2016
      %v2018 = vrot.slane %v2010, %v2017
      %v2020 = vunpack.c.l.s4 1966171168
      %v2021 = vunpack.c.0.s8 %v2020
      %v2022 = vlaneseq
      %v2023 = vshrl.u32 %v2022, 7
      %v2024 = vsub.s32 %v2021, %v2023
      %v2025 = vrot.slane %v2011, %v2024
      %v2026 = vcombine.low %v2018, %v2025
      %v2027 = vcombine.low %v972, %v976
      %v2028 = vcombine.low %v980, %v984
      %v2029 = vcombine.low %v988, %v992
      %v2030 = vcombine.low %v996, %v1000
      %v2032 = vunpack.c.l.s4 1966171168
      %v2033 = vunpack.c.0.s8 %v2032
      %v2034 = vlaneseq
      %v2035 = vshrl.u32 %v2034, 7
      %v2036 = vsub.s32 %v2033, %v2035
      %v2037 = vrot.slane %v2027, %v2036
      %v2039 = vunpack.c.l.s4 1966171168
      %v2040 = vunpack.c.0.s8 %v2039
      %v2041 = vlaneseq
      %v2042 = vshrl.u32 %v2041, 7
      %v2043 = vsub.s32 %v2040, %v2042
      %v2044 = vrot.slane %v2028, %v2043
      %v2046 = vunpack.c.l.s4 1966171168
      %v2047 = vunpack.c.0.s8 %v2046
      %v2048 = vlaneseq
      %v2049 = vshrl.u32 %v2048, 7
      %v2050 = vsub.s32 %v2047, %v2049
      %v2051 = vrot.slane %v2029, %v2050
      %v2053 = vunpack.c.l.s4 1966171168
      %v2054 = vunpack.c.0.s8 %v2053
      %v2055 = vlaneseq
      %v2056 = vshrl.u32 %v2055, 7
      %v2057 = vsub.s32 %v2054, %v2056
      %v2058 = vrot.slane %v2030, %v2057
      %v2059 = vcombine.low %v2037, %v2044
      %v2060 = vcombine.low %v2051, %v2058
      %v2062 = vunpack.c.l.s4 1966171168
      %v2063 = vunpack.c.0.s8 %v2062
      %v2064 = vlaneseq
      %v2065 = vshrl.u32 %v2064, 7
      %v2066 = vsub.s32 %v2063, %v2065
      %v2067 = vrot.slane %v2059, %v2066
      %v2069 = vunpack.c.l.s4 1966171168
      %v2070 = vunpack.c.0.s8 %v2069
      %v2071 = vlaneseq
      %v2072 = vshrl.u32 %v2071, 7
      %v2073 = vsub.s32 %v2070, %v2072
      %v2074 = vrot.slane %v2060, %v2073
      %v2075 = vcombine.low %v2067, %v2074
      %v2076 = vcombine.low %v1004, %v1008
      %v2077 = vcombine.low %v1012, %v1016
      %v2078 = vcombine.low %v1020, %v1024
      %v2079 = vcombine.low %v1028, %v1032
      %v2081 = vunpack.c.l.s4 1966171168
      %v2082 = vunpack.c.0.s8 %v2081
      %v2083 = vlaneseq
      %v2084 = vshrl.u32 %v2083, 7
      %v2085 = vsub.s32 %v2082, %v2084
      %v2086 = vrot.slane %v2076, %v2085
      %v2088 = vunpack.c.l.s4 1966171168
      %v2089 = vunpack.c.0.s8 %v2088
      %v2090 = vlaneseq
      %v2091 = vshrl.u32 %v2090, 7
      %v2092 = vsub.s32 %v2089, %v2091
      %v2093 = vrot.slane %v2077, %v2092
      %v2095 = vunpack.c.l.s4 1966171168
      %v2096 = vunpack.c.0.s8 %v2095
      %v2097 = vlaneseq
      %v2098 = vshrl.u32 %v2097, 7
      %v2099 = vsub.s32 %v2096, %v2098
      %v2100 = vrot.slane %v2078, %v2099
      %v2102 = vunpack.c.l.s4 1966171168
      %v2103 = vunpack.c.0.s8 %v2102
      %v2104 = vlaneseq
      %v2105 = vshrl.u32 %v2104, 7
      %v2106 = vsub.s32 %v2103, %v2105
      %v2107 = vrot.slane %v2079, %v2106
      %v2108 = vcombine.low %v2086, %v2093
      %v2109 = vcombine.low %v2100, %v2107
      %v2111 = vunpack.c.l.s4 1966171168
      %v2112 = vunpack.c.0.s8 %v2111
      %v2113 = vlaneseq
      %v2114 = vshrl.u32 %v2113, 7
      %v2115 = vsub.s32 %v2112, %v2114
      %v2116 = vrot.slane %v2108, %v2115
      %v2118 = vunpack.c.l.s4 1966171168
      %v2119 = vunpack.c.0.s8 %v2118
      %v2120 = vlaneseq
      %v2121 = vshrl.u32 %v2120, 7
      %v2122 = vsub.s32 %v2119, %v2121
      %v2123 = vrot.slane %v2109, %v2122
      %v2124 = vcombine.low %v2116, %v2123
      %v2125 = vcombine.low %v1036, %v1040
      %v2126 = vcombine.low %v1044, %v1048
      %v2127 = vcombine.low %v1052, %v1056
      %v2128 = vcombine.low %v1060, %v1064
      %v2130 = vunpack.c.l.s4 1966171168
      %v2131 = vunpack.c.0.s8 %v2130
      %v2132 = vlaneseq
      %v2133 = vshrl.u32 %v2132, 7
      %v2134 = vsub.s32 %v2131, %v2133
      %v2135 = vrot.slane %v2125, %v2134
      %v2137 = vunpack.c.l.s4 1966171168
      %v2138 = vunpack.c.0.s8 %v2137
      %v2139 = vlaneseq
      %v2140 = vshrl.u32 %v2139, 7
      %v2141 = vsub.s32 %v2138, %v2140
      %v2142 = vrot.slane %v2126, %v2141
      %v2144 = vunpack.c.l.s4 1966171168
      %v2145 = vunpack.c.0.s8 %v2144
      %v2146 = vlaneseq
      %v2147 = vshrl.u32 %v2146, 7
      %v2148 = vsub.s32 %v2145, %v2147
      %v2149 = vrot.slane %v2127, %v2148
      %v2151 = vunpack.c.l.s4 1966171168
      %v2152 = vunpack.c.0.s8 %v2151
      %v2153 = vlaneseq
      %v2154 = vshrl.u32 %v2153, 7
      %v2155 = vsub.s32 %v2152, %v2154
      %v2156 = vrot.slane %v2128, %v2155
      %v2157 = vcombine.low %v2135, %v2142
      %v2158 = vcombine.low %v2149, %v2156
      %v2160 = vunpack.c.l.s4 1966171168
      %v2161 = vunpack.c.0.s8 %v2160
      %v2162 = vlaneseq
      %v2163 = vshrl.u32 %v2162, 7
      %v2164 = vsub.s32 %v2161, %v2163
      %v2165 = vrot.slane %v2157, %v2164
      %v2167 = vunpack.c.l.s4 1966171168
      %v2168 = vunpack.c.0.s8 %v2167
      %v2169 = vlaneseq
      %v2170 = vshrl.u32 %v2169, 7
      %v2171 = vsub.s32 %v2168, %v2170
      %v2172 = vrot.slane %v2158, %v2171
      %v2173 = vcombine.low %v2165, %v2172
      %v2174 = vcombine.low %v1068, %v1072
      %v2175 = vcombine.low %v1076, %v1080
      %v2176 = vcombine.low %v1084, %v1088
      %v2177 = vcombine.low %v1092, %v1096
      %v2179 = vunpack.c.l.s4 1966171168
      %v2180 = vunpack.c.0.s8 %v2179
      %v2181 = vlaneseq
      %v2182 = vshrl.u32 %v2181, 7
      %v2183 = vsub.s32 %v2180, %v2182
      %v2184 = vrot.slane %v2174, %v2183
      %v2186 = vunpack.c.l.s4 1966171168
      %v2187 = vunpack.c.0.s8 %v2186
      %v2188 = vlaneseq
      %v2189 = vshrl.u32 %v2188, 7
      %v2190 = vsub.s32 %v2187, %v2189
      %v2191 = vrot.slane %v2175, %v2190
      %v2193 = vunpack.c.l.s4 1966171168
      %v2194 = vunpack.c.0.s8 %v2193
      %v2195 = vlaneseq
      %v2196 = vshrl.u32 %v2195, 7
      %v2197 = vsub.s32 %v2194, %v2196
      %v2198 = vrot.slane %v2176, %v2197
      %v2200 = vunpack.c.l.s4 1966171168
      %v2201 = vunpack.c.0.s8 %v2200
      %v2202 = vlaneseq
      %v2203 = vshrl.u32 %v2202, 7
      %v2204 = vsub.s32 %v2201, %v2203
      %v2205 = vrot.slane %v2177, %v2204
      %v2206 = vcombine.low %v2184, %v2191
      %v2207 = vcombine.low %v2198, %v2205
      %v2209 = vunpack.c.l.s4 1966171168
      %v2210 = vunpack.c.0.s8 %v2209
      %v2211 = vlaneseq
      %v2212 = vshrl.u32 %v2211, 7
      %v2213 = vsub.s32 %v2210, %v2212
      %v2214 = vrot.slane %v2206, %v2213
      %v2216 = vunpack.c.l.s4 1966171168
      %v2217 = vunpack.c.0.s8 %v2216
      %v2218 = vlaneseq
      %v2219 = vshrl.u32 %v2218, 7
      %v2220 = vsub.s32 %v2217, %v2219
      %v2221 = vrot.slane %v2207, %v2220
      %v2222 = vcombine.low %v2214, %v2221
      %v2223 = vcombine.low %v1100, %v1104
      %v2224 = vcombine.low %v1108, %v1112
      %v2225 = vcombine.low %v1116, %v1120
      %v2226 = vcombine.low %v1124, %v1128
      %v2228 = vunpack.c.l.s4 1966171168
      %v2229 = vunpack.c.0.s8 %v2228
      %v2230 = vlaneseq
      %v2231 = vshrl.u32 %v2230, 7
      %v2232 = vsub.s32 %v2229, %v2231
      %v2233 = vrot.slane %v2223, %v2232
      %v2235 = vunpack.c.l.s4 1966171168
      %v2236 = vunpack.c.0.s8 %v2235
      %v2237 = vlaneseq
      %v2238 = vshrl.u32 %v2237, 7
      %v2239 = vsub.s32 %v2236, %v2238
      %v2240 = vrot.slane %v2224, %v2239
      %v2242 = vunpack.c.l.s4 1966171168
      %v2243 = vunpack.c.0.s8 %v2242
      %v2244 = vlaneseq
      %v2245 = vshrl.u32 %v2244, 7
      %v2246 = vsub.s32 %v2243, %v2245
      %v2247 = vrot.slane %v2225, %v2246
      %v2249 = vunpack.c.l.s4 1966171168
      %v2250 = vunpack.c.0.s8 %v2249
      %v2251 = vlaneseq
      %v2252 = vshrl.u32 %v2251, 7
      %v2253 = vsub.s32 %v2250, %v2252
      %v2254 = vrot.slane %v2226, %v2253
      %v2255 = vcombine.low %v2233, %v2240
      %v2256 = vcombine.low %v2247, %v2254
      %v2258 = vunpack.c.l.s4 1966171168
      %v2259 = vunpack.c.0.s8 %v2258
      %v2260 = vlaneseq
      %v2261 = vshrl.u32 %v2260, 7
      %v2262 = vsub.s32 %v2259, %v2261
      %v2263 = vrot.slane %v2255, %v2262
      %v2265 = vunpack.c.l.s4 1966171168
      %v2266 = vunpack.c.0.s8 %v2265
      %v2267 = vlaneseq
      %v2268 = vshrl.u32 %v2267, 7
      %v2269 = vsub.s32 %v2266, %v2268
      %v2270 = vrot.slane %v2256, %v2269
      %v2271 = vcombine.low %v2263, %v2270
      %v2272 = vcombine.low %v1132, %v1136
      %v2273 = vcombine.low %v1140, %v1144
      %v2274 = vcombine.low %v1148, %v1152
      %v2275 = vcombine.low %v1156, %v1160
      %v2277 = vunpack.c.l.s4 1966171168
      %v2278 = vunpack.c.0.s8 %v2277
      %v2279 = vlaneseq
      %v2280 = vshrl.u32 %v2279, 7
      %v2281 = vsub.s32 %v2278, %v2280
      %v2282 = vrot.slane %v2272, %v2281
      %v2284 = vunpack.c.l.s4 1966171168
      %v2285 = vunpack.c.0.s8 %v2284
      %v2286 = vlaneseq
      %v2287 = vshrl.u32 %v2286, 7
      %v2288 = vsub.s32 %v2285, %v2287
      %v2289 = vrot.slane %v2273, %v2288
      %v2291 = vunpack.c.l.s4 1966171168
      %v2292 = vunpack.c.0.s8 %v2291
      %v2293 = vlaneseq
      %v2294 = vshrl.u32 %v2293, 7
      %v2295 = vsub.s32 %v2292, %v2294
      %v2296 = vrot.slane %v2274, %v2295
      %v2298 = vunpack.c.l.s4 1966171168
      %v2299 = vunpack.c.0.s8 %v2298
      %v2300 = vlaneseq
      %v2301 = vshrl.u32 %v2300, 7
      %v2302 = vsub.s32 %v2299, %v2301
      %v2303 = vrot.slane %v2275, %v2302
      %v2304 = vcombine.low %v2282, %v2289
      %v2305 = vcombine.low %v2296, %v2303
      %v2307 = vunpack.c.l.s4 1966171168
      %v2308 = vunpack.c.0.s8 %v2307
      %v2309 = vlaneseq
      %v2310 = vshrl.u32 %v2309, 7
      %v2311 = vsub.s32 %v2308, %v2310
      %v2312 = vrot.slane %v2304, %v2311
      %v2314 = vunpack.c.l.s4 1966171168
      %v2315 = vunpack.c.0.s8 %v2314
      %v2316 = vlaneseq
      %v2317 = vshrl.u32 %v2316, 7
      %v2318 = vsub.s32 %v2315, %v2317
      %v2319 = vrot.slane %v2305, %v2318
      %v2320 = vcombine.low %v2312, %v2319
      %v2321 = vcombine.low %v1164, %v1168
      %v2322 = vcombine.low %v1172, %v1176
      %v2323 = vcombine.low %v1180, %v1184
      %v2324 = vcombine.low %v1188, %v1192
      %v2326 = vunpack.c.l.s4 1966171168
      %v2327 = vunpack.c.0.s8 %v2326
      %v2328 = vlaneseq
      %v2329 = vshrl.u32 %v2328, 7
      %v2330 = vsub.s32 %v2327, %v2329
      %v2331 = vrot.slane %v2321, %v2330
      %v2333 = vunpack.c.l.s4 1966171168
      %v2334 = vunpack.c.0.s8 %v2333
      %v2335 = vlaneseq
      %v2336 = vshrl.u32 %v2335, 7
      %v2337 = vsub.s32 %v2334, %v2336
      %v2338 = vrot.slane %v2322, %v2337
      %v2340 = vunpack.c.l.s4 1966171168
      %v2341 = vunpack.c.0.s8 %v2340
      %v2342 = vlaneseq
      %v2343 = vshrl.u32 %v2342, 7
      %v2344 = vsub.s32 %v2341, %v2343
      %v2345 = vrot.slane %v2323, %v2344
      %v2347 = vunpack.c.l.s4 1966171168
      %v2348 = vunpack.c.0.s8 %v2347
      %v2349 = vlaneseq
      %v2350 = vshrl.u32 %v2349, 7
      %v2351 = vsub.s32 %v2348, %v2350
      %v2352 = vrot.slane %v2324, %v2351
      %v2353 = vcombine.low %v2331, %v2338
      %v2354 = vcombine.low %v2345, %v2352
      %v2356 = vunpack.c.l.s4 1966171168
      %v2357 = vunpack.c.0.s8 %v2356
      %v2358 = vlaneseq
      %v2359 = vshrl.u32 %v2358, 7
      %v2360 = vsub.s32 %v2357, %v2359
      %v2361 = vrot.slane %v2353, %v2360
      %v2363 = vunpack.c.l.s4 1966171168
      %v2364 = vunpack.c.0.s8 %v2363
      %v2365 = vlaneseq
      %v2366 = vshrl.u32 %v2365, 7
      %v2367 = vsub.s32 %v2364, %v2366
      %v2368 = vrot.slane %v2354, %v2367
      %v2369 = vcombine.low %v2361, %v2368
      %v2370 = vcombine.low %v1196, %v1200
      %v2371 = vcombine.low %v1204, %v1208
      %v2372 = vcombine.low %v1212, %v1216
      %v2373 = vcombine.low %v1220, %v1224
      %v2375 = vunpack.c.l.s4 1966171168
      %v2376 = vunpack.c.0.s8 %v2375
      %v2377 = vlaneseq
      %v2378 = vshrl.u32 %v2377, 7
      %v2379 = vsub.s32 %v2376, %v2378
      %v2380 = vrot.slane %v2370, %v2379
      %v2382 = vunpack.c.l.s4 1966171168
      %v2383 = vunpack.c.0.s8 %v2382
      %v2384 = vlaneseq
      %v2385 = vshrl.u32 %v2384, 7
      %v2386 = vsub.s32 %v2383, %v2385
      %v2387 = vrot.slane %v2371, %v2386
      %v2389 = vunpack.c.l.s4 1966171168
      %v2390 = vunpack.c.0.s8 %v2389
      %v2391 = vlaneseq
      %v2392 = vshrl.u32 %v2391, 7
      %v2393 = vsub.s32 %v2390, %v2392
      %v2394 = vrot.slane %v2372, %v2393
      %v2396 = vunpack.c.l.s4 1966171168
      %v2397 = vunpack.c.0.s8 %v2396
      %v2398 = vlaneseq
      %v2399 = vshrl.u32 %v2398, 7
      %v2400 = vsub.s32 %v2397, %v2399
      %v2401 = vrot.slane %v2373, %v2400
      %v2402 = vcombine.low %v2380, %v2387
      %v2403 = vcombine.low %v2394, %v2401
      %v2405 = vunpack.c.l.s4 1966171168
      %v2406 = vunpack.c.0.s8 %v2405
      %v2407 = vlaneseq
      %v2408 = vshrl.u32 %v2407, 7
      %v2409 = vsub.s32 %v2406, %v2408
      %v2410 = vrot.slane %v2402, %v2409
      %v2412 = vunpack.c.l.s4 1966171168
      %v2413 = vunpack.c.0.s8 %v2412
      %v2414 = vlaneseq
      %v2415 = vshrl.u32 %v2414, 7
      %v2416 = vsub.s32 %v2413, %v2415
      %v2417 = vrot.slane %v2403, %v2416
      %v2418 = vcombine.low %v2410, %v2417
      %v2419 = vcombine.low %v1228, %v1232
      %v2420 = vcombine.low %v1236, %v1240
      %v2421 = vcombine.low %v1244, %v1248
      %v2422 = vcombine.low %v1252, %v1256
      %v2424 = vunpack.c.l.s4 1966171168
      %v2425 = vunpack.c.0.s8 %v2424
      %v2426 = vlaneseq
      %v2427 = vshrl.u32 %v2426, 7
      %v2428 = vsub.s32 %v2425, %v2427
      %v2429 = vrot.slane %v2419, %v2428
      %v2431 = vunpack.c.l.s4 1966171168
      %v2432 = vunpack.c.0.s8 %v2431
      %v2433 = vlaneseq
      %v2434 = vshrl.u32 %v2433, 7
      %v2435 = vsub.s32 %v2432, %v2434
      %v2436 = vrot.slane %v2420, %v2435
      %v2438 = vunpack.c.l.s4 1966171168
      %v2439 = vunpack.c.0.s8 %v2438
      %v2440 = vlaneseq
      %v2441 = vshrl.u32 %v2440, 7
      %v2442 = vsub.s32 %v2439, %v2441
      %v2443 = vrot.slane %v2421, %v2442
      %v2445 = vunpack.c.l.s4 1966171168
      %v2446 = vunpack.c.0.s8 %v2445
      %v2447 = vlaneseq
      %v2448 = vshrl.u32 %v2447, 7
      %v2449 = vsub.s32 %v2446, %v2448
      %v2450 = vrot.slane %v2422, %v2449
      %v2451 = vcombine.low %v2429, %v2436
      %v2452 = vcombine.low %v2443, %v2450
      %v2454 = vunpack.c.l.s4 1966171168
      %v2455 = vunpack.c.0.s8 %v2454
      %v2456 = vlaneseq
      %v2457 = vshrl.u32 %v2456, 7
      %v2458 = vsub.s32 %v2455, %v2457
      %v2459 = vrot.slane %v2451, %v2458
      %v2461 = vunpack.c.l.s4 1966171168
      %v2462 = vunpack.c.0.s8 %v2461
      %v2463 = vlaneseq
      %v2464 = vshrl.u32 %v2463, 7
      %v2465 = vsub.s32 %v2462, %v2464
      %v2466 = vrot.slane %v2452, %v2465
      %v2467 = vcombine.low %v2459, %v2466
      %v2468 = vcombine.low %v1260, %v1264
      %v2469 = vcombine.low %v1268, %v1272
      %v2470 = vcombine.low %v1276, %v1280
      %v2471 = vcombine.low %v1284, %v1288
      %v2473 = vunpack.c.l.s4 1966171168
      %v2474 = vunpack.c.0.s8 %v2473
      %v2475 = vlaneseq
      %v2476 = vshrl.u32 %v2475, 7
      %v2477 = vsub.s32 %v2474, %v2476
      %v2478 = vrot.slane %v2468, %v2477
      %v2480 = vunpack.c.l.s4 1966171168
      %v2481 = vunpack.c.0.s8 %v2480
      %v2482 = vlaneseq
      %v2483 = vshrl.u32 %v2482, 7
      %v2484 = vsub.s32 %v2481, %v2483
      %v2485 = vrot.slane %v2469, %v2484
      %v2487 = vunpack.c.l.s4 1966171168
      %v2488 = vunpack.c.0.s8 %v2487
      %v2489 = vlaneseq
      %v2490 = vshrl.u32 %v2489, 7
      %v2491 = vsub.s32 %v2488, %v2490
      %v2492 = vrot.slane %v2470, %v2491
      %v2494 = vunpack.c.l.s4 1966171168
      %v2495 = vunpack.c.0.s8 %v2494
      %v2496 = vlaneseq
      %v2497 = vshrl.u32 %v2496, 7
      %v2498 = vsub.s32 %v2495, %v2497
      %v2499 = vrot.slane %v2471, %v2498
      %v2500 = vcombine.low %v2478, %v2485
      %v2501 = vcombine.low %v2492, %v2499
      %v2503 = vunpack.c.l.s4 1966171168
      %v2504 = vunpack.c.0.s8 %v2503
      %v2505 = vlaneseq
      %v2506 = vshrl.u32 %v2505, 7
      %v2507 = vsub.s32 %v2504, %v2506
      %v2508 = vrot.slane %v2500, %v2507
      %v2510 = vunpack.c.l.s4 1966171168
      %v2511 = vunpack.c.0.s8 %v2510
      %v2512 = vlaneseq
      %v2513 = vshrl.u32 %v2512, 7
      %v2514 = vsub.s32 %v2511, %v2513
      %v2515 = vrot.slane %v2501, %v2514
      %v2516 = vcombine.low %v2508, %v2515
      %v2517 = vcombine.low %v1292, %v1296
      %v2518 = vcombine.low %v1300, %v1304
      %v2519 = vcombine.low %v1308, %v1312
      %v2520 = vcombine.low %v1316, %v1320
      %v2522 = vunpack.c.l.s4 1966171168
      %v2523 = vunpack.c.0.s8 %v2522
      %v2524 = vlaneseq
      %v2525 = vshrl.u32 %v2524, 7
      %v2526 = vsub.s32 %v2523, %v2525
      %v2527 = vrot.slane %v2517, %v2526
      %v2529 = vunpack.c.l.s4 1966171168
      %v2530 = vunpack.c.0.s8 %v2529
      %v2531 = vlaneseq
      %v2532 = vshrl.u32 %v2531, 7
      %v2533 = vsub.s32 %v2530, %v2532
      %v2534 = vrot.slane %v2518, %v2533
      %v2536 = vunpack.c.l.s4 1966171168
      %v2537 = vunpack.c.0.s8 %v2536
      %v2538 = vlaneseq
      %v2539 = vshrl.u32 %v2538, 7
      %v2540 = vsub.s32 %v2537, %v2539
      %v2541 = vrot.slane %v2519, %v2540
      %v2543 = vunpack.c.l.s4 1966171168
      %v2544 = vunpack.c.0.s8 %v2543
      %v2545 = vlaneseq
      %v2546 = vshrl.u32 %v2545, 7
      %v2547 = vsub.s32 %v2544, %v2546
      %v2548 = vrot.slane %v2520, %v2547
      %v2549 = vcombine.low %v2527, %v2534
      %v2550 = vcombine.low %v2541, %v2548
      %v2552 = vunpack.c.l.s4 1966171168
      %v2553 = vunpack.c.0.s8 %v2552
      %v2554 = vlaneseq
      %v2555 = vshrl.u32 %v2554, 7
      %v2556 = vsub.s32 %v2553, %v2555
      %v2557 = vrot.slane %v2549, %v2556
      %v2559 = vunpack.c.l.s4 1966171168
      %v2560 = vunpack.c.0.s8 %v2559
      %v2561 = vlaneseq
      %v2562 = vshrl.u32 %v2561, 7
      %v2563 = vsub.s32 %v2560, %v2562
      %v2564 = vrot.slane %v2550, %v2563
      %v2565 = vcombine.low %v2557, %v2564
      %v2566 = vcombine.low %v1324, %v1328
      %v2567 = vcombine.low %v1332, %v1336
      %v2568 = vcombine.low %v1340, %v1344
      %v2569 = vcombine.low %v1348, %v1352
      %v2571 = vunpack.c.l.s4 1966171168
      %v2572 = vunpack.c.0.s8 %v2571
      %v2573 = vlaneseq
      %v2574 = vshrl.u32 %v2573, 7
      %v2575 = vsub.s32 %v2572, %v2574
      %v2576 = vrot.slane %v2566, %v2575
      %v2578 = vunpack.c.l.s4 1966171168
      %v2579 = vunpack.c.0.s8 %v2578
      %v2580 = vlaneseq
      %v2581 = vshrl.u32 %v2580, 7
      %v2582 = vsub.s32 %v2579, %v2581
      %v2583 = vrot.slane %v2567, %v2582
      %v2585 = vunpack.c.l.s4 1966171168
      %v2586 = vunpack.c.0.s8 %v2585
      %v2587 = vlaneseq
      %v2588 = vshrl.u32 %v2587, 7
      %v2589 = vsub.s32 %v2586, %v2588
      %v2590 = vrot.slane %v2568, %v2589
      %v2592 = vunpack.c.l.s4 1966171168
      %v2593 = vunpack.c.0.s8 %v2592
      %v2594 = vlaneseq
      %v2595 = vshrl.u32 %v2594, 7
      %v2596 = vsub.s32 %v2593, %v2595
      %v2597 = vrot.slane %v2569, %v2596
      %v2598 = vcombine.low %v2576, %v2583
      %v2599 = vcombine.low %v2590, %v2597
      %v2601 = vunpack.c.l.s4 1966171168
      %v2602 = vunpack.c.0.s8 %v2601
      %v2603 = vlaneseq
      %v2604 = vshrl.u32 %v2603, 7
      %v2605 = vsub.s32 %v2602, %v2604
      %v2606 = vrot.slane %v2598, %v2605
      %v2608 = vunpack.c.l.s4 1966171168
      %v2609 = vunpack.c.0.s8 %v2608
      %v2610 = vlaneseq
      %v2611 = vshrl.u32 %v2610, 7
      %v2612 = vsub.s32 %v2609, %v2611
      %v2613 = vrot.slane %v2599, %v2612
      %v2614 = vcombine.low %v2606, %v2613
      %v2615 = vcombine.low %v1356, %v1360
      %v2616 = vcombine.low %v1364, %v1368
      %v2617 = vcombine.low %v1372, %v1376
      %v2618 = vcombine.low %v1380, %v1384
      %v2620 = vunpack.c.l.s4 1966171168
      %v2621 = vunpack.c.0.s8 %v2620
      %v2622 = vlaneseq
      %v2623 = vshrl.u32 %v2622, 7
      %v2624 = vsub.s32 %v2621, %v2623
      %v2625 = vrot.slane %v2615, %v2624
      %v2627 = vunpack.c.l.s4 1966171168
      %v2628 = vunpack.c.0.s8 %v2627
      %v2629 = vlaneseq
      %v2630 = vshrl.u32 %v2629, 7
      %v2631 = vsub.s32 %v2628, %v2630
      %v2632 = vrot.slane %v2616, %v2631
      %v2634 = vunpack.c.l.s4 1966171168
      %v2635 = vunpack.c.0.s8 %v2634
      %v2636 = vlaneseq
      %v2637 = vshrl.u32 %v2636, 7
      %v2638 = vsub.s32 %v2635, %v2637
      %v2639 = vrot.slane %v2617, %v2638
      %v2641 = vunpack.c.l.s4 1966171168
      %v2642 = vunpack.c.0.s8 %v2641
      %v2643 = vlaneseq
      %v2644 = vshrl.u32 %v2643, 7
      %v2645 = vsub.s32 %v2642, %v2644
      %v2646 = vrot.slane %v2618, %v2645
      %v2647 = vcombine.low %v2625, %v2632
      %v2648 = vcombine.low %v2639, %v2646
      %v2650 = vunpack.c.l.s4 1966171168
      %v2651 = vunpack.c.0.s8 %v2650
      %v2652 = vlaneseq
      %v2653 = vshrl.u32 %v2652, 7
      %v2654 = vsub.s32 %v2651, %v2653
      %v2655 = vrot.slane %v2647, %v2654
      %v2657 = vunpack.c.l.s4 1966171168
      %v2658 = vunpack.c.0.s8 %v2657
      %v2659 = vlaneseq
      %v2660 = vshrl.u32 %v2659, 7
      %v2661 = vsub.s32 %v2658, %v2660
      %v2662 = vrot.slane %v2648, %v2661
      %v2663 = vcombine.low %v2655, %v2662
      %v2664 = vcombine.low %v1388, %v1392
      %v2665 = vcombine.low %v1396, %v1400
      %v2666 = vcombine.low %v1404, %v1408
      %v2667 = vcombine.low %v1412, %v1416
      %v2669 = vunpack.c.l.s4 1966171168
      %v2670 = vunpack.c.0.s8 %v2669
      %v2671 = vlaneseq
      %v2672 = vshrl.u32 %v2671, 7
      %v2673 = vsub.s32 %v2670, %v2672
      %v2674 = vrot.slane %v2664, %v2673
      %v2676 = vunpack.c.l.s4 1966171168
      %v2677 = vunpack.c.0.s8 %v2676
      %v2678 = vlaneseq
      %v2679 = vshrl.u32 %v2678, 7
      %v2680 = vsub.s32 %v2677, %v2679
      %v2681 = vrot.slane %v2665, %v2680
      %v2683 = vunpack.c.l.s4 1966171168
      %v2684 = vunpack.c.0.s8 %v2683
      %v2685 = vlaneseq
      %v2686 = vshrl.u32 %v2685, 7
      %v2687 = vsub.s32 %v2684, %v2686
      %v2688 = vrot.slane %v2666, %v2687
      %v2690 = vunpack.c.l.s4 1966171168
      %v2691 = vunpack.c.0.s8 %v2690
      %v2692 = vlaneseq
      %v2693 = vshrl.u32 %v2692, 7
      %v2694 = vsub.s32 %v2691, %v2693
      %v2695 = vrot.slane %v2667, %v2694
      %v2696 = vcombine.low %v2674, %v2681
      %v2697 = vcombine.low %v2688, %v2695
      %v2699 = vunpack.c.l.s4 1966171168
      %v2700 = vunpack.c.0.s8 %v2699
      %v2701 = vlaneseq
      %v2702 = vshrl.u32 %v2701, 7
      %v2703 = vsub.s32 %v2700, %v2702
      %v2704 = vrot.slane %v2696, %v2703
      %v2706 = vunpack.c.l.s4 1966171168
      %v2707 = vunpack.c.0.s8 %v2706
      %v2708 = vlaneseq
      %v2709 = vshrl.u32 %v2708, 7
      %v2710 = vsub.s32 %v2707, %v2709
      %v2711 = vrot.slane %v2697, %v2710
      %v2712 = vcombine.low %v2704, %v2711
      %v2713 = vcombine.low %v1420, %v1424
      %v2714 = vcombine.low %v1428, %v1432
      %v2715 = vcombine.low %v1436, %v1440
      %v2716 = vcombine.low %v1444, %v1448
      %v2718 = vunpack.c.l.s4 1966171168
      %v2719 = vunpack.c.0.s8 %v2718
      %v2720 = vlaneseq
      %v2721 = vshrl.u32 %v2720, 7
      %v2722 = vsub.s32 %v2719, %v2721
      %v2723 = vrot.slane %v2713, %v2722
      %v2725 = vunpack.c.l.s4 1966171168
      %v2726 = vunpack.c.0.s8 %v2725
      %v2727 = vlaneseq
      %v2728 = vshrl.u32 %v2727, 7
      %v2729 = vsub.s32 %v2726, %v2728
      %v2730 = vrot.slane %v2714, %v2729
      %v2732 = vunpack.c.l.s4 1966171168
      %v2733 = vunpack.c.0.s8 %v2732
      %v2734 = vlaneseq
      %v2735 = vshrl.u32 %v2734, 7
      %v2736 = vsub.s32 %v2733, %v2735
      %v2737 = vrot.slane %v2715, %v2736
      %v2739 = vunpack.c.l.s4 1966171168
      %v2740 = vunpack.c.0.s8 %v2739
      %v2741 = vlaneseq
      %v2742 = vshrl.u32 %v2741, 7
      %v2743 = vsub.s32 %v2740, %v2742
      %v2744 = vrot.slane %v2716, %v2743
      %v2745 = vcombine.low %v2723, %v2730
      %v2746 = vcombine.low %v2737, %v2744
      %v2748 = vunpack.c.l.s4 1966171168
      %v2749 = vunpack.c.0.s8 %v2748
      %v2750 = vlaneseq
      %v2751 = vshrl.u32 %v2750, 7
      %v2752 = vsub.s32 %v2749, %v2751
      %v2753 = vrot.slane %v2745, %v2752
      %v2755 = vunpack.c.l.s4 1966171168
      %v2756 = vunpack.c.0.s8 %v2755
      %v2757 = vlaneseq
      %v2758 = vshrl.u32 %v2757, 7
      %v2759 = vsub.s32 %v2756, %v2758
      %v2760 = vrot.slane %v2746, %v2759
      %v2761 = vcombine.low %v2753, %v2760
      %v2762 = vcombine.low %v1452, %v1456
      %v2763 = vcombine.low %v1460, %v1464
      %v2764 = vcombine.low %v1468, %v1472
      %v2765 = vcombine.low %v1476, %v1480
      %v2767 = vunpack.c.l.s4 1966171168
      %v2768 = vunpack.c.0.s8 %v2767
      %v2769 = vlaneseq
      %v2770 = vshrl.u32 %v2769, 7
      %v2771 = vsub.s32 %v2768, %v2770
      %v2772 = vrot.slane %v2762, %v2771
      %v2774 = vunpack.c.l.s4 1966171168
      %v2775 = vunpack.c.0.s8 %v2774
      %v2776 = vlaneseq
      %v2777 = vshrl.u32 %v2776, 7
      %v2778 = vsub.s32 %v2775, %v2777
      %v2779 = vrot.slane %v2763, %v2778
      %v2781 = vunpack.c.l.s4 1966171168
      %v2782 = vunpack.c.0.s8 %v2781
      %v2783 = vlaneseq
      %v2784 = vshrl.u32 %v2783, 7
      %v2785 = vsub.s32 %v2782, %v2784
      %v2786 = vrot.slane %v2764, %v2785
      %v2788 = vunpack.c.l.s4 1966171168
      %v2789 = vunpack.c.0.s8 %v2788
      %v2790 = vlaneseq
      %v2791 = vshrl.u32 %v2790, 7
      %v2792 = vsub.s32 %v2789, %v2791
      %v2793 = vrot.slane %v2765, %v2792
      %v2794 = vcombine.low %v2772, %v2779
      %v2795 = vcombine.low %v2786, %v2793
      %v2797 = vunpack.c.l.s4 1966171168
      %v2798 = vunpack.c.0.s8 %v2797
      %v2799 = vlaneseq
      %v2800 = vshrl.u32 %v2799, 7
      %v2801 = vsub.s32 %v2798, %v2800
      %v2802 = vrot.slane %v2794, %v2801
      %v2804 = vunpack.c.l.s4 1966171168
      %v2805 = vunpack.c.0.s8 %v2804
      %v2806 = vlaneseq
      %v2807 = vshrl.u32 %v2806, 7
      %v2808 = vsub.s32 %v2805, %v2807
      %v2809 = vrot.slane %v2795, %v2808
      %v2810 = vcombine.low %v2802, %v2809
      %v2811 = vcombine.low %v1484, %v1488
      %v2812 = vcombine.low %v1492, %v1496
      %v2813 = vcombine.low %v1500, %v1504
      %v2814 = vcombine.low %v1508, %v1512
      %v2816 = vunpack.c.l.s4 1966171168
      %v2817 = vunpack.c.0.s8 %v2816
      %v2818 = vlaneseq
      %v2819 = vshrl.u32 %v2818, 7
      %v2820 = vsub.s32 %v2817, %v2819
      %v2821 = vrot.slane %v2811, %v2820
      %v2823 = vunpack.c.l.s4 1966171168
      %v2824 = vunpack.c.0.s8 %v2823
      %v2825 = vlaneseq
      %v2826 = vshrl.u32 %v2825, 7
      %v2827 = vsub.s32 %v2824, %v2826
      %v2828 = vrot.slane %v2812, %v2827
      %v2830 = vunpack.c.l.s4 1966171168
      %v2831 = vunpack.c.0.s8 %v2830
      %v2832 = vlaneseq
      %v2833 = vshrl.u32 %v2832, 7
      %v2834 = vsub.s32 %v2831, %v2833
      %v2835 = vrot.slane %v2813, %v2834
      %v2837 = vunpack.c.l.s4 1966171168
      %v2838 = vunpack.c.0.s8 %v2837
      %v2839 = vlaneseq
      %v2840 = vshrl.u32 %v2839, 7
      %v2841 = vsub.s32 %v2838, %v2840
      %v2842 = vrot.slane %v2814, %v2841
      %v2843 = vcombine.low %v2821, %v2828
      %v2844 = vcombine.low %v2835, %v2842
      %v2846 = vunpack.c.l.s4 1966171168
      %v2847 = vunpack.c.0.s8 %v2846
      %v2848 = vlaneseq
      %v2849 = vshrl.u32 %v2848, 7
      %v2850 = vsub.s32 %v2847, %v2849
      %v2851 = vrot.slane %v2843, %v2850
      %v2853 = vunpack.c.l.s4 1966171168
      %v2854 = vunpack.c.0.s8 %v2853
      %v2855 = vlaneseq
      %v2856 = vshrl.u32 %v2855, 7
      %v2857 = vsub.s32 %v2854, %v2856
      %v2858 = vrot.slane %v2844, %v2857
      %v2859 = vcombine.low %v2851, %v2858
      %v2860 = vcombine.low %v1516, %v1520
      %v2861 = vcombine.low %v1524, %v1528
      %v2862 = vcombine.low %v1532, %v1536
      %v2863 = vcombine.low %v1540, %v1544
      %v2865 = vunpack.c.l.s4 1966171168
      %v2866 = vunpack.c.0.s8 %v2865
      %v2867 = vlaneseq
      %v2868 = vshrl.u32 %v2867, 7
      %v2869 = vsub.s32 %v2866, %v2868
      %v2870 = vrot.slane %v2860, %v2869
      %v2872 = vunpack.c.l.s4 1966171168
      %v2873 = vunpack.c.0.s8 %v2872
      %v2874 = vlaneseq
      %v2875 = vshrl.u32 %v2874, 7
      %v2876 = vsub.s32 %v2873, %v2875
      %v2877 = vrot.slane %v2861, %v2876
      %v2879 = vunpack.c.l.s4 1966171168
      %v2880 = vunpack.c.0.s8 %v2879
      %v2881 = vlaneseq
      %v2882 = vshrl.u32 %v2881, 7
      %v2883 = vsub.s32 %v2880, %v2882
      %v2884 = vrot.slane %v2862, %v2883
      %v2886 = vunpack.c.l.s4 1966171168
      %v2887 = vunpack.c.0.s8 %v2886
      %v2888 = vlaneseq
      %v2889 = vshrl.u32 %v2888, 7
      %v2890 = vsub.s32 %v2887, %v2889
      %v2891 = vrot.slane %v2863, %v2890
      %v2892 = vcombine.low %v2870, %v2877
      %v2893 = vcombine.low %v2884, %v2891
      %v2895 = vunpack.c.l.s4 1966171168
      %v2896 = vunpack.c.0.s8 %v2895
      %v2897 = vlaneseq
      %v2898 = vshrl.u32 %v2897, 7
      %v2899 = vsub.s32 %v2896, %v2898
      %v2900 = vrot.slane %v2892, %v2899
      %v2902 = vunpack.c.l.s4 1966171168
      %v2903 = vunpack.c.0.s8 %v2902
      %v2904 = vlaneseq
      %v2905 = vshrl.u32 %v2904, 7
      %v2906 = vsub.s32 %v2903, %v2905
      %v2907 = vrot.slane %v2893, %v2906
      %v2908 = vcombine.low %v2900, %v2907
      %v2909 = vcombine.low %v1548, %v1552
      %v2910 = vcombine.low %v1556, %v1560
      %v2911 = vcombine.low %v1564, %v1568
      %v2912 = vcombine.low %v1572, %v1576
      %v2914 = vunpack.c.l.s4 1966171168
      %v2915 = vunpack.c.0.s8 %v2914
      %v2916 = vlaneseq
      %v2917 = vshrl.u32 %v2916, 7
      %v2918 = vsub.s32 %v2915, %v2917
      %v2919 = vrot.slane %v2909, %v2918
      %v2921 = vunpack.c.l.s4 1966171168
      %v2922 = vunpack.c.0.s8 %v2921
      %v2923 = vlaneseq
      %v2924 = vshrl.u32 %v2923, 7
      %v2925 = vsub.s32 %v2922, %v2924
      %v2926 = vrot.slane %v2910, %v2925
      %v2928 = vunpack.c.l.s4 1966171168
      %v2929 = vunpack.c.0.s8 %v2928
      %v2930 = vlaneseq
      %v2931 = vshrl.u32 %v2930, 7
      %v2932 = vsub.s32 %v2929, %v2931
      %v2933 = vrot.slane %v2911, %v2932
      %v2935 = vunpack.c.l.s4 1966171168
      %v2936 = vunpack.c.0.s8 %v2935
      %v2937 = vlaneseq
      %v2938 = vshrl.u32 %v2937, 7
      %v2939 = vsub.s32 %v2936, %v2938
      %v2940 = vrot.slane %v2912, %v2939
      %v2941 = vcombine.low %v2919, %v2926
      %v2942 = vcombine.low %v2933, %v2940
      %v2944 = vunpack.c.l.s4 1966171168
      %v2945 = vunpack.c.0.s8 %v2944
      %v2946 = vlaneseq
      %v2947 = vshrl.u32 %v2946, 7
      %v2948 = vsub.s32 %v2945, %v2947
      %v2949 = vrot.slane %v2941, %v2948
      %v2951 = vunpack.c.l.s4 1966171168
      %v2952 = vunpack.c.0.s8 %v2951
      %v2953 = vlaneseq
      %v2954 = vshrl.u32 %v2953, 7
      %v2955 = vsub.s32 %v2952, %v2954
      %v2956 = vrot.slane %v2942, %v2955
      %v2957 = vcombine.low %v2949, %v2956
      %v2958 = vcombine.low %v1580, %v1584
      %v2959 = vcombine.low %v1588, %v1592
      %v2960 = vcombine.low %v1596, %v1600
      %v2961 = vcombine.low %v1604, %v1608
      %v2963 = vunpack.c.l.s4 1966171168
      %v2964 = vunpack.c.0.s8 %v2963
      %v2965 = vlaneseq
      %v2966 = vshrl.u32 %v2965, 7
      %v2967 = vsub.s32 %v2964, %v2966
      %v2968 = vrot.slane %v2958, %v2967
      %v2970 = vunpack.c.l.s4 1966171168
      %v2971 = vunpack.c.0.s8 %v2970
      %v2972 = vlaneseq
      %v2973 = vshrl.u32 %v2972, 7
      %v2974 = vsub.s32 %v2971, %v2973
      %v2975 = vrot.slane %v2959, %v2974
      %v2977 = vunpack.c.l.s4 1966171168
      %v2978 = vunpack.c.0.s8 %v2977
      %v2979 = vlaneseq
      %v2980 = vshrl.u32 %v2979, 7
      %v2981 = vsub.s32 %v2978, %v2980
      %v2982 = vrot.slane %v2960, %v2981
      %v2984 = vunpack.c.l.s4 1966171168
      %v2985 = vunpack.c.0.s8 %v2984
      %v2986 = vlaneseq
      %v2987 = vshrl.u32 %v2986, 7
      %v2988 = vsub.s32 %v2985, %v2987
      %v2989 = vrot.slane %v2961, %v2988
      %v2990 = vcombine.low %v2968, %v2975
      %v2991 = vcombine.low %v2982, %v2989
      %v2993 = vunpack.c.l.s4 1966171168
      %v2994 = vunpack.c.0.s8 %v2993
      %v2995 = vlaneseq
      %v2996 = vshrl.u32 %v2995, 7
      %v2997 = vsub.s32 %v2994, %v2996
      %v2998 = vrot.slane %v2990, %v2997
      %v3000 = vunpack.c.l.s4 1966171168
      %v3001 = vunpack.c.0.s8 %v3000
      %v3002 = vlaneseq
      %v3003 = vshrl.u32 %v3002, 7
      %v3004 = vsub.s32 %v3001, %v3003
      %v3005 = vrot.slane %v2991, %v3004
      %v3006 = vcombine.low %v2998, %v3005
      %v3007 = vcombine.low %v1612, %v1616
      %v3008 = vcombine.low %v1620, %v1624
      %v3009 = vcombine.low %v1628, %v1632
      %v3010 = vcombine.low %v1636, %v1640
      %v3012 = vunpack.c.l.s4 1966171168
      %v3013 = vunpack.c.0.s8 %v3012
      %v3014 = vlaneseq
      %v3015 = vshrl.u32 %v3014, 7
      %v3016 = vsub.s32 %v3013, %v3015
      %v3017 = vrot.slane %v3007, %v3016
      %v3019 = vunpack.c.l.s4 1966171168
      %v3020 = vunpack.c.0.s8 %v3019
      %v3021 = vlaneseq
      %v3022 = vshrl.u32 %v3021, 7
      %v3023 = vsub.s32 %v3020, %v3022
      %v3024 = vrot.slane %v3008, %v3023
      %v3026 = vunpack.c.l.s4 1966171168
      %v3027 = vunpack.c.0.s8 %v3026
      %v3028 = vlaneseq
      %v3029 = vshrl.u32 %v3028, 7
      %v3030 = vsub.s32 %v3027, %v3029
      %v3031 = vrot.slane %v3009, %v3030
      %v3033 = vunpack.c.l.s4 1966171168
      %v3034 = vunpack.c.0.s8 %v3033
      %v3035 = vlaneseq
      %v3036 = vshrl.u32 %v3035, 7
      %v3037 = vsub.s32 %v3034, %v3036
      %v3038 = vrot.slane %v3010, %v3037
      %v3039 = vcombine.low %v3017, %v3024
      %v3040 = vcombine.low %v3031, %v3038
      %v3042 = vunpack.c.l.s4 1966171168
      %v3043 = vunpack.c.0.s8 %v3042
      %v3044 = vlaneseq
      %v3045 = vshrl.u32 %v3044, 7
      %v3046 = vsub.s32 %v3043, %v3045
      %v3047 = vrot.slane %v3039, %v3046
      %v3049 = vunpack.c.l.s4 1966171168
      %v3050 = vunpack.c.0.s8 %v3049
      %v3051 = vlaneseq
      %v3052 = vshrl.u32 %v3051, 7
      %v3053 = vsub.s32 %v3050, %v3052
      %v3054 = vrot.slane %v3040, %v3053
      %v3055 = vcombine.low %v3047, %v3054
      %v3056 = vcombine.low %v1644, %v1648
      %v3057 = vcombine.low %v1652, %v1656
      %v3058 = vcombine.low %v1660, %v1664
      %v3059 = vcombine.low %v1668, %v1672
      %v3061 = vunpack.c.l.s4 1966171168
      %v3062 = vunpack.c.0.s8 %v3061
      %v3063 = vlaneseq
      %v3064 = vshrl.u32 %v3063, 7
      %v3065 = vsub.s32 %v3062, %v3064
      %v3066 = vrot.slane %v3056, %v3065
      %v3068 = vunpack.c.l.s4 1966171168
      %v3069 = vunpack.c.0.s8 %v3068
      %v3070 = vlaneseq
      %v3071 = vshrl.u32 %v3070, 7
      %v3072 = vsub.s32 %v3069, %v3071
      %v3073 = vrot.slane %v3057, %v3072
      %v3075 = vunpack.c.l.s4 1966171168
      %v3076 = vunpack.c.0.s8 %v3075
      %v3077 = vlaneseq
      %v3078 = vshrl.u32 %v3077, 7
      %v3079 = vsub.s32 %v3076, %v3078
      %v3080 = vrot.slane %v3058, %v3079
      %v3082 = vunpack.c.l.s4 1966171168
      %v3083 = vunpack.c.0.s8 %v3082
      %v3084 = vlaneseq
      %v3085 = vshrl.u32 %v3084, 7
      %v3086 = vsub.s32 %v3083, %v3085
      %v3087 = vrot.slane %v3059, %v3086
      %v3088 = vcombine.low %v3066, %v3073
      %v3089 = vcombine.low %v3080, %v3087
      %v3091 = vunpack.c.l.s4 1966171168
      %v3092 = vunpack.c.0.s8 %v3091
      %v3093 = vlaneseq
      %v3094 = vshrl.u32 %v3093, 7
      %v3095 = vsub.s32 %v3092, %v3094
      %v3096 = vrot.slane %v3088, %v3095
      %v3098 = vunpack.c.l.s4 1966171168
      %v3099 = vunpack.c.0.s8 %v3098
      %v3100 = vlaneseq
      %v3101 = vshrl.u32 %v3100, 7
      %v3102 = vsub.s32 %v3099, %v3101
      %v3103 = vrot.slane %v3089, %v3102
      %v3104 = vcombine.low %v3096, %v3103
      %v3105 = vcombine.low %v1676, %v1680
      %v3106 = vcombine.low %v1684, %v1688
      %v3107 = vcombine.low %v1692, %v1696
      %v3108 = vcombine.low %v1700, %v1704
      %v3110 = vunpack.c.l.s4 1966171168
      %v3111 = vunpack.c.0.s8 %v3110
      %v3112 = vlaneseq
      %v3113 = vshrl.u32 %v3112, 7
      %v3114 = vsub.s32 %v3111, %v3113
      %v3115 = vrot.slane %v3105, %v3114
      %v3117 = vunpack.c.l.s4 1966171168
      %v3118 = vunpack.c.0.s8 %v3117
      %v3119 = vlaneseq
      %v3120 = vshrl.u32 %v3119, 7
      %v3121 = vsub.s32 %v3118, %v3120
      %v3122 = vrot.slane %v3106, %v3121
      %v3124 = vunpack.c.l.s4 1966171168
      %v3125 = vunpack.c.0.s8 %v3124
      %v3126 = vlaneseq
      %v3127 = vshrl.u32 %v3126, 7
      %v3128 = vsub.s32 %v3125, %v3127
      %v3129 = vrot.slane %v3107, %v3128
      %v3131 = vunpack.c.l.s4 1966171168
      %v3132 = vunpack.c.0.s8 %v3131
      %v3133 = vlaneseq
      %v3134 = vshrl.u32 %v3133, 7
      %v3135 = vsub.s32 %v3132, %v3134
      %v3136 = vrot.slane %v3108, %v3135
      %v3137 = vcombine.low %v3115, %v3122
      %v3138 = vcombine.low %v3129, %v3136
      %v3140 = vunpack.c.l.s4 1966171168
      %v3141 = vunpack.c.0.s8 %v3140
      %v3142 = vlaneseq
      %v3143 = vshrl.u32 %v3142, 7
      %v3144 = vsub.s32 %v3141, %v3143
      %v3145 = vrot.slane %v3137, %v3144
      %v3147 = vunpack.c.l.s4 1966171168
      %v3148 = vunpack.c.0.s8 %v3147
      %v3149 = vlaneseq
      %v3150 = vshrl.u32 %v3149, 7
      %v3151 = vsub.s32 %v3148, %v3150
      %v3152 = vrot.slane %v3138, %v3151
      %v3153 = vcombine.low %v3145, %v3152
      %v3154 = vcombine.low %v1708, %v1712
      %v3155 = vcombine.low %v1716, %v1720
      %v3156 = vcombine.low %v1724, %v1728
      %v3157 = vcombine.low %v1732, %v1736
      %v3159 = vunpack.c.l.s4 1966171168
      %v3160 = vunpack.c.0.s8 %v3159
      %v3161 = vlaneseq
      %v3162 = vshrl.u32 %v3161, 7
      %v3163 = vsub.s32 %v3160, %v3162
      %v3164 = vrot.slane %v3154, %v3163
      %v3166 = vunpack.c.l.s4 1966171168
      %v3167 = vunpack.c.0.s8 %v3166
      %v3168 = vlaneseq
      %v3169 = vshrl.u32 %v3168, 7
      %v3170 = vsub.s32 %v3167, %v3169
      %v3171 = vrot.slane %v3155, %v3170
      %v3173 = vunpack.c.l.s4 1966171168
      %v3174 = vunpack.c.0.s8 %v3173
      %v3175 = vlaneseq
      %v3176 = vshrl.u32 %v3175, 7
      %v3177 = vsub.s32 %v3174, %v3176
      %v3178 = vrot.slane %v3156, %v3177
      %v3180 = vunpack.c.l.s4 1966171168
      %v3181 = vunpack.c.0.s8 %v3180
      %v3182 = vlaneseq
      %v3183 = vshrl.u32 %v3182, 7
      %v3184 = vsub.s32 %v3181, %v3183
      %v3185 = vrot.slane %v3157, %v3184
      %v3186 = vcombine.low %v3164, %v3171
      %v3187 = vcombine.low %v3178, %v3185
      %v3189 = vunpack.c.l.s4 1966171168
      %v3190 = vunpack.c.0.s8 %v3189
      %v3191 = vlaneseq
      %v3192 = vshrl.u32 %v3191, 7
      %v3193 = vsub.s32 %v3190, %v3192
      %v3194 = vrot.slane %v3186, %v3193
      %v3196 = vunpack.c.l.s4 1966171168
      %v3197 = vunpack.c.0.s8 %v3196
      %v3198 = vlaneseq
      %v3199 = vshrl.u32 %v3198, 7
      %v3200 = vsub.s32 %v3197, %v3199
      %v3201 = vrot.slane %v3187, %v3200
      %v3202 = vcombine.low %v3194, %v3201
      %v3203 = vcombine.low %v1740, %v1744
      %v3204 = vcombine.low %v1748, %v1752
      %v3205 = vcombine.low %v1756, %v1760
      %v3206 = vcombine.low %v1764, %v1768
      %v3208 = vunpack.c.l.s4 1966171168
      %v3209 = vunpack.c.0.s8 %v3208
      %v3210 = vlaneseq
      %v3211 = vshrl.u32 %v3210, 7
      %v3212 = vsub.s32 %v3209, %v3211
      %v3213 = vrot.slane %v3203, %v3212
      %v3215 = vunpack.c.l.s4 1966171168
      %v3216 = vunpack.c.0.s8 %v3215
      %v3217 = vlaneseq
      %v3218 = vshrl.u32 %v3217, 7
      %v3219 = vsub.s32 %v3216, %v3218
      %v3220 = vrot.slane %v3204, %v3219
      %v3222 = vunpack.c.l.s4 1966171168
      %v3223 = vunpack.c.0.s8 %v3222
      %v3224 = vlaneseq
      %v3225 = vshrl.u32 %v3224, 7
      %v3226 = vsub.s32 %v3223, %v3225
      %v3227 = vrot.slane %v3205, %v3226
      %v3229 = vunpack.c.l.s4 1966171168
      %v3230 = vunpack.c.0.s8 %v3229
      %v3231 = vlaneseq
      %v3232 = vshrl.u32 %v3231, 7
      %v3233 = vsub.s32 %v3230, %v3232
      %v3234 = vrot.slane %v3206, %v3233
      %v3235 = vcombine.low %v3213, %v3220
      %v3236 = vcombine.low %v3227, %v3234
      %v3238 = vunpack.c.l.s4 1966171168
      %v3239 = vunpack.c.0.s8 %v3238
      %v3240 = vlaneseq
      %v3241 = vshrl.u32 %v3240, 7
      %v3242 = vsub.s32 %v3239, %v3241
      %v3243 = vrot.slane %v3235, %v3242
      %v3245 = vunpack.c.l.s4 1966171168
      %v3246 = vunpack.c.0.s8 %v3245
      %v3247 = vlaneseq
      %v3248 = vshrl.u32 %v3247, 7
      %v3249 = vsub.s32 %v3246, %v3248
      %v3250 = vrot.slane %v3236, %v3249
      %v3251 = vcombine.low %v3243, %v3250
      %v3252 = vcombine.low %v1772, %v1776
      %v3253 = vcombine.low %v1780, %v1784
      %v3254 = vcombine.low %v1788, %v1792
      %v3255 = vcombine.low %v1796, %v1800
      %v3257 = vunpack.c.l.s4 1966171168
      %v3258 = vunpack.c.0.s8 %v3257
      %v3259 = vlaneseq
      %v3260 = vshrl.u32 %v3259, 7
      %v3261 = vsub.s32 %v3258, %v3260
      %v3262 = vrot.slane %v3252, %v3261
      %v3264 = vunpack.c.l.s4 1966171168
      %v3265 = vunpack.c.0.s8 %v3264
      %v3266 = vlaneseq
      %v3267 = vshrl.u32 %v3266, 7
      %v3268 = vsub.s32 %v3265, %v3267
      %v3269 = vrot.slane %v3253, %v3268
      %v3271 = vunpack.c.l.s4 1966171168
      %v3272 = vunpack.c.0.s8 %v3271
      %v3273 = vlaneseq
      %v3274 = vshrl.u32 %v3273, 7
      %v3275 = vsub.s32 %v3272, %v3274
      %v3276 = vrot.slane %v3254, %v3275
      %v3278 = vunpack.c.l.s4 1966171168
      %v3279 = vunpack.c.0.s8 %v3278
      %v3280 = vlaneseq
      %v3281 = vshrl.u32 %v3280, 7
      %v3282 = vsub.s32 %v3279, %v3281
      %v3283 = vrot.slane %v3255, %v3282
      %v3284 = vcombine.low %v3262, %v3269
      %v3285 = vcombine.low %v3276, %v3283
      %v3287 = vunpack.c.l.s4 1966171168
      %v3288 = vunpack.c.0.s8 %v3287
      %v3289 = vlaneseq
      %v3290 = vshrl.u32 %v3289, 7
      %v3291 = vsub.s32 %v3288, %v3290
      %v3292 = vrot.slane %v3284, %v3291
      %v3294 = vunpack.c.l.s4 1966171168
      %v3295 = vunpack.c.0.s8 %v3294
      %v3296 = vlaneseq
      %v3297 = vshrl.u32 %v3296, 7
      %v3298 = vsub.s32 %v3295, %v3297
      %v3299 = vrot.slane %v3285, %v3298
      %v3300 = vcombine.low %v3292, %v3299
      %v3301 = vcombine.low %v1804, %v1808
      %v3302 = vcombine.low %v1812, %v1816
      %v3303 = vcombine.low %v1820, %v1824
      %v3304 = vcombine.low %v1828, %v1832
      %v3306 = vunpack.c.l.s4 1966171168
      %v3307 = vunpack.c.0.s8 %v3306
      %v3308 = vlaneseq
      %v3309 = vshrl.u32 %v3308, 7
      %v3310 = vsub.s32 %v3307, %v3309
      %v3311 = vrot.slane %v3301, %v3310
      %v3313 = vunpack.c.l.s4 1966171168
      %v3314 = vunpack.c.0.s8 %v3313
      %v3315 = vlaneseq
      %v3316 = vshrl.u32 %v3315, 7
      %v3317 = vsub.s32 %v3314, %v3316
      %v3318 = vrot.slane %v3302, %v3317
      %v3320 = vunpack.c.l.s4 1966171168
      %v3321 = vunpack.c.0.s8 %v3320
      %v3322 = vlaneseq
      %v3323 = vshrl.u32 %v3322, 7
      %v3324 = vsub.s32 %v3321, %v3323
      %v3325 = vrot.slane %v3303, %v3324
      %v3327 = vunpack.c.l.s4 1966171168
      %v3328 = vunpack.c.0.s8 %v3327
      %v3329 = vlaneseq
      %v3330 = vshrl.u32 %v3329, 7
      %v3331 = vsub.s32 %v3328, %v3330
      %v3332 = vrot.slane %v3304, %v3331
      %v3333 = vcombine.low %v3311, %v3318
      %v3334 = vcombine.low %v3325, %v3332
      %v3336 = vunpack.c.l.s4 1966171168
      %v3337 = vunpack.c.0.s8 %v3336
      %v3338 = vlaneseq
      %v3339 = vshrl.u32 %v3338, 7
      %v3340 = vsub.s32 %v3337, %v3339
      %v3341 = vrot.slane %v3333, %v3340
      %v3343 = vunpack.c.l.s4 1966171168
      %v3344 = vunpack.c.0.s8 %v3343
      %v3345 = vlaneseq
      %v3346 = vshrl.u32 %v3345, 7
      %v3347 = vsub.s32 %v3344, %v3346
      %v3348 = vrot.slane %v3334, %v3347
      %v3349 = vcombine.low %v3341, %v3348
      %v3350 = vcombine.low %v1836, %v1840
      %v3351 = vcombine.low %v1844, %v1848
      %v3352 = vcombine.low %v1852, %v1856
      %v3353 = vcombine.low %v1860, %v1864
      %v3355 = vunpack.c.l.s4 1966171168
      %v3356 = vunpack.c.0.s8 %v3355
      %v3357 = vlaneseq
      %v3358 = vshrl.u32 %v3357, 7
      %v3359 = vsub.s32 %v3356, %v3358
      %v3360 = vrot.slane %v3350, %v3359
      %v3362 = vunpack.c.l.s4 1966171168
      %v3363 = vunpack.c.0.s8 %v3362
      %v3364 = vlaneseq
      %v3365 = vshrl.u32 %v3364, 7
      %v3366 = vsub.s32 %v3363, %v3365
      %v3367 = vrot.slane %v3351, %v3366
      %v3369 = vunpack.c.l.s4 1966171168
      %v3370 = vunpack.c.0.s8 %v3369
      %v3371 = vlaneseq
      %v3372 = vshrl.u32 %v3371, 7
      %v3373 = vsub.s32 %v3370, %v3372
      %v3374 = vrot.slane %v3352, %v3373
      %v3376 = vunpack.c.l.s4 1966171168
      %v3377 = vunpack.c.0.s8 %v3376
      %v3378 = vlaneseq
      %v3379 = vshrl.u32 %v3378, 7
      %v3380 = vsub.s32 %v3377, %v3379
      %v3381 = vrot.slane %v3353, %v3380
      %v3382 = vcombine.low %v3360, %v3367
      %v3383 = vcombine.low %v3374, %v3381
      %v3385 = vunpack.c.l.s4 1966171168
      %v3386 = vunpack.c.0.s8 %v3385
      %v3387 = vlaneseq
      %v3388 = vshrl.u32 %v3387, 7
      %v3389 = vsub.s32 %v3386, %v3388
      %v3390 = vrot.slane %v3382, %v3389
      %v3392 = vunpack.c.l.s4 1966171168
      %v3393 = vunpack.c.0.s8 %v3392
      %v3394 = vlaneseq
      %v3395 = vshrl.u32 %v3394, 7
      %v3396 = vsub.s32 %v3393, %v3395
      %v3397 = vrot.slane %v3383, %v3396
      %v3398 = vcombine.low %v3390, %v3397
      %v3399 = vcombine.low %v1868, %v1872
      %v3400 = vcombine.low %v1876, %v1880
      %v3401 = vcombine.low %v1884, %v1888
      %v3402 = vcombine.low %v1892, %v1896
      %v3404 = vunpack.c.l.s4 1966171168
      %v3405 = vunpack.c.0.s8 %v3404
      %v3406 = vlaneseq
      %v3407 = vshrl.u32 %v3406, 7
      %v3408 = vsub.s32 %v3405, %v3407
      %v3409 = vrot.slane %v3399, %v3408
      %v3411 = vunpack.c.l.s4 1966171168
      %v3412 = vunpack.c.0.s8 %v3411
      %v3413 = vlaneseq
      %v3414 = vshrl.u32 %v3413, 7
      %v3415 = vsub.s32 %v3412, %v3414
      %v3416 = vrot.slane %v3400, %v3415
      %v3418 = vunpack.c.l.s4 1966171168
      %v3419 = vunpack.c.0.s8 %v3418
      %v3420 = vlaneseq
      %v3421 = vshrl.u32 %v3420, 7
      %v3422 = vsub.s32 %v3419, %v3421
      %v3423 = vrot.slane %v3401, %v3422
      %v3425 = vunpack.c.l.s4 1966171168
      %v3426 = vunpack.c.0.s8 %v3425
      %v3427 = vlaneseq
      %v3428 = vshrl.u32 %v3427, 7
      %v3429 = vsub.s32 %v3426, %v3428
      %v3430 = vrot.slane %v3402, %v3429
      %v3431 = vcombine.low %v3409, %v3416
      %v3432 = vcombine.low %v3423, %v3430
      %v3434 = vunpack.c.l.s4 1966171168
      %v3435 = vunpack.c.0.s8 %v3434
      %v3436 = vlaneseq
      %v3437 = vshrl.u32 %v3436, 7
      %v3438 = vsub.s32 %v3435, %v3437
      %v3439 = vrot.slane %v3431, %v3438
      %v3441 = vunpack.c.l.s4 1966171168
      %v3442 = vunpack.c.0.s8 %v3441
      %v3443 = vlaneseq
      %v3444 = vshrl.u32 %v3443, 7
      %v3445 = vsub.s32 %v3442, %v3444
      %v3446 = vrot.slane %v3432, %v3445
      %v3447 = vcombine.low %v3439, %v3446
      %v3448 = vcombine.low %v1900, %v1904
      %v3449 = vcombine.low %v1908, %v1912
      %v3450 = vcombine.low %v1916, %v1920
      %v3451 = vcombine.low %v1924, %v1928
      %v3453 = vunpack.c.l.s4 1966171168
      %v3454 = vunpack.c.0.s8 %v3453
      %v3455 = vlaneseq
      %v3456 = vshrl.u32 %v3455, 7
      %v3457 = vsub.s32 %v3454, %v3456
      %v3458 = vrot.slane %v3448, %v3457
      %v3460 = vunpack.c.l.s4 1966171168
      %v3461 = vunpack.c.0.s8 %v3460
      %v3462 = vlaneseq
      %v3463 = vshrl.u32 %v3462, 7
      %v3464 = vsub.s32 %v3461, %v3463
      %v3465 = vrot.slane %v3449, %v3464
      %v3467 = vunpack.c.l.s4 1966171168
      %v3468 = vunpack.c.0.s8 %v3467
      %v3469 = vlaneseq
      %v3470 = vshrl.u32 %v3469, 7
      %v3471 = vsub.s32 %v3468, %v3470
      %v3472 = vrot.slane %v3450, %v3471
      %v3474 = vunpack.c.l.s4 1966171168
      %v3475 = vunpack.c.0.s8 %v3474
      %v3476 = vlaneseq
      %v3477 = vshrl.u32 %v3476, 7
      %v3478 = vsub.s32 %v3475, %v3477
      %v3479 = vrot.slane %v3451, %v3478
      %v3480 = vcombine.low %v3458, %v3465
      %v3481 = vcombine.low %v3472, %v3479
      %v3483 = vunpack.c.l.s4 1966171168
      %v3484 = vunpack.c.0.s8 %v3483
      %v3485 = vlaneseq
      %v3486 = vshrl.u32 %v3485, 7
      %v3487 = vsub.s32 %v3484, %v3486
      %v3488 = vrot.slane %v3480, %v3487
      %v3490 = vunpack.c.l.s4 1966171168
      %v3491 = vunpack.c.0.s8 %v3490
      %v3492 = vlaneseq
      %v3493 = vshrl.u32 %v3492, 7
      %v3494 = vsub.s32 %v3491, %v3493
      %v3495 = vrot.slane %v3481, %v3494
      %v3496 = vcombine.low %v3488, %v3495
      %3497 = vset.pattern.permute.xlu0 0
      %3498 = vperm.xlu0 %3497, %v1977
      %v3499 = vpop.permute.xlu0 %3498
      %3500 = vset.pattern.permute.xlu0 0
      %3501 = vperm.xlu0 %3500, %v2026
      %v3502 = vpop.permute.xlu0 %3501
      %3503 = vset.pattern.permute.xlu0 0
      %3504 = vperm.xlu0 %3503, %v2075
      %v3505 = vpop.permute.xlu0 %3504
      %3506 = vset.pattern.permute.xlu0 0
      %3507 = vperm.xlu0 %3506, %v2124
      %v3508 = vpop.permute.xlu0 %3507
      %3509 = vset.pattern.permute.xlu0 0
      %3510 = vperm.xlu0 %3509, %v2173
      %v3511 = vpop.permute.xlu0 %3510
      %3512 = vset.pattern.permute.xlu0 0
      %3513 = vperm.xlu0 %3512, %v2222
      %v3514 = vpop.permute.xlu0 %3513
      %3515 = vset.pattern.permute.xlu0 0
      %3516 = vperm.xlu0 %3515, %v2271
      %v3517 = vpop.permute.xlu0 %3516
      %3518 = vset.pattern.permute.xlu0 0
      %3519 = vperm.xlu0 %3518, %v2320
      %v3520 = vpop.permute.xlu0 %3519
      %3521 = vset.pattern.permute.xlu0 0
      %3522 = vperm.xlu0 %3521, %v2369
      %v3523 = vpop.permute.xlu0 %3522
      %3524 = vset.pattern.permute.xlu0 0
      %3525 = vperm.xlu0 %3524, %v2418
      %v3526 = vpop.permute.xlu0 %3525
      %3527 = vset.pattern.permute.xlu0 0
      %3528 = vperm.xlu0 %3527, %v2467
      %v3529 = vpop.permute.xlu0 %3528
      %3530 = vset.pattern.permute.xlu0 0
      %3531 = vperm.xlu0 %3530, %v2516
      %v3532 = vpop.permute.xlu0 %3531
      %3533 = vset.pattern.permute.xlu0 0
      %3534 = vperm.xlu0 %3533, %v2565
      %v3535 = vpop.permute.xlu0 %3534
      %3536 = vset.pattern.permute.xlu0 0
      %3537 = vperm.xlu0 %3536, %v2614
      %v3538 = vpop.permute.xlu0 %3537
      %3539 = vset.pattern.permute.xlu0 0
      %3540 = vperm.xlu0 %3539, %v2663
      %v3541 = vpop.permute.xlu0 %3540
      %3542 = vset.pattern.permute.xlu0 0
      %3543 = vperm.xlu0 %3542, %v2712
      %v3544 = vpop.permute.xlu0 %3543
      %3545 = vset.pattern.permute.xlu0 0
      %3546 = vperm.xlu0 %3545, %v2761
      %v3547 = vpop.permute.xlu0 %3546
      %3548 = vset.pattern.permute.xlu0 0
      %3549 = vperm.xlu0 %3548, %v2810
      %v3550 = vpop.permute.xlu0 %3549
      %3551 = vset.pattern.permute.xlu0 0
      %3552 = vperm.xlu0 %3551, %v2859
      %v3553 = vpop.permute.xlu0 %3552
      %3554 = vset.pattern.permute.xlu0 0
      %3555 = vperm.xlu0 %3554, %v2908
      %v3556 = vpop.permute.xlu0 %3555
      %3557 = vset.pattern.permute.xlu0 0
      %3558 = vperm.xlu0 %3557, %v2957
      %v3559 = vpop.permute.xlu0 %3558
      %3560 = vset.pattern.permute.xlu0 0
      %3561 = vperm.xlu0 %3560, %v3006
      %v3562 = vpop.permute.xlu0 %3561
      %3563 = vset.pattern.permute.xlu0 0
      %3564 = vperm.xlu0 %3563, %v3055
      %v3565 = vpop.permute.xlu0 %3564
      %3566 = vset.pattern.permute.xlu0 0
      %3567 = vperm.xlu0 %3566, %v3104
      %v3568 = vpop.permute.xlu0 %3567
      %3569 = vset.pattern.permute.xlu0 0
      %3570 = vperm.xlu0 %3569, %v3153
      %v3571 = vpop.permute.xlu0 %3570
      %3572 = vset.pattern.permute.xlu0 0
      %3573 = vperm.xlu0 %3572, %v3202
      %v3574 = vpop.permute.xlu0 %3573
      %3575 = vset.pattern.permute.xlu0 0
      %3576 = vperm.xlu0 %3575, %v3251
      %v3577 = vpop.permute.xlu0 %3576
      %3578 = vset.pattern.permute.xlu0 0
      %3579 = vperm.xlu0 %3578, %v3300
      %v3580 = vpop.permute.xlu0 %3579
      %3581 = vset.pattern.permute.xlu0 0
      %3582 = vperm.xlu0 %3581, %v3349
      %v3583 = vpop.permute.xlu0 %3582
      %3584 = vset.pattern.permute.xlu0 0
      %3585 = vperm.xlu0 %3584, %v3398
      %v3586 = vpop.permute.xlu0 %3585
      %3587 = vset.pattern.permute.xlu0 0
      %3588 = vperm.xlu0 %3587, %v3447
      %v3589 = vpop.permute.xlu0 %3588
      %3590 = vset.pattern.permute.xlu0 0
      %3591 = vperm.xlu0 %3590, %v3496
      %v3592 = vpop.permute.xlu0 %3591
      %v3593 = vlaneseq
      %v3594 = vand.u32 %v3593, 127
      %v3595 = vlaneseq
      %v3596 = vshrl.u32 %v3595, 7
      %v3597 = vsub.s32 %v3594, %v3596
      %v3598 = vrot.slane %v3499, %v3597
      %v3599 = vadd.s32 %v3594, 4294967288
      %v3600 = vlaneseq
      %v3601 = vshrl.u32 %v3600, 7
      %v3602 = vsub.s32 %v3599, %v3601
      %v3603 = vrot.slane %v3502, %v3602
      %vm3604 = vcmask 130112
      %v3605 = vsel %vm3604, %v3603, %v3598
      %v3606 = vadd.s32 %v3594, 4294967280
      %v3607 = vlaneseq
      %v3608 = vshrl.u32 %v3607, 7
      %v3609 = vsub.s32 %v3606, %v3608
      %v3610 = vrot.slane %v3505, %v3609
      %vm3611 = vcmask 195712
      %v3612 = vsel %vm3611, %v3610, %v3605
      %v3613 = vadd.s32 %v3594, 4294967272
      %v3614 = vlaneseq
      %v3615 = vshrl.u32 %v3614, 7
      %v3616 = vsub.s32 %v3613, %v3615
      %v3617 = vrot.slane %v3508, %v3616
      %vm3618 = vcmask 261312
      %v3619 = vsel %vm3618, %v3617, %v3612
      %v3620 = vadd.s32 %v3594, 4294967264
      %v3621 = vlaneseq
      %v3622 = vshrl.u32 %v3621, 7
      %v3623 = vsub.s32 %v3620, %v3622
      %v3624 = vrot.slane %v3511, %v3623
      %vm3625 = vcmask 326912
      %v3626 = vsel %vm3625, %v3624, %v3619
      %v3627 = vadd.s32 %v3594, 4294967256
      %v3628 = vlaneseq
      %v3629 = vshrl.u32 %v3628, 7
      %v3630 = vsub.s32 %v3627, %v3629
      %v3631 = vrot.slane %v3514, %v3630
      %vm3632 = vcmask 392512
      %v3633 = vsel %vm3632, %v3631, %v3626
      %v3634 = vadd.s32 %v3594, 4294967248
      %v3635 = vlaneseq
      %v3636 = vshrl.u32 %v3635, 7
      %v3637 = vsub.s32 %v3634, %v3636
      %v3638 = vrot.slane %v3517, %v3637
      %vm3639 = vcmask 458112
      %v3640 = vsel %vm3639, %v3638, %v3633
      %v3641 = vadd.s32 %v3594, 4294967240
      %v3642 = vlaneseq
      %v3643 = vshrl.u32 %v3642, 7
      %v3644 = vsub.s32 %v3641, %v3643
      %v3645 = vrot.slane %v3520, %v3644
      %vm3646 = vcmask 523712
      %v3647 = vsel %vm3646, %v3645, %v3640
      %v3648 = vadd.s32 %v3594, 4294967232
      %v3649 = vlaneseq
      %v3650 = vshrl.u32 %v3649, 7
      %v3651 = vsub.s32 %v3648, %v3650
      %v3652 = vrot.slane %v3523, %v3651
      %vm3653 = vcmask 589312
      %v3654 = vsel %vm3653, %v3652, %v3647
      %v3655 = vadd.s32 %v3594, 4294967224
      %v3656 = vlaneseq
      %v3657 = vshrl.u32 %v3656, 7
      %v3658 = vsub.s32 %v3655, %v3657
      %v3659 = vrot.slane %v3526, %v3658
      %vm3660 = vcmask 654912
      %v3661 = vsel %vm3660, %v3659, %v3654
      %v3662 = vadd.s32 %v3594, 4294967216
      %v3663 = vlaneseq
      %v3664 = vshrl.u32 %v3663, 7
      %v3665 = vsub.s32 %v3662, %v3664
      %v3666 = vrot.slane %v3529, %v3665
      %vm3667 = vcmask 720512
      %v3668 = vsel %vm3667, %v3666, %v3661
      %v3669 = vadd.s32 %v3594, 4294967208
      %v3670 = vlaneseq
      %v3671 = vshrl.u32 %v3670, 7
      %v3672 = vsub.s32 %v3669, %v3671
      %v3673 = vrot.slane %v3532, %v3672
      %vm3674 = vcmask 786112
      %v3675 = vsel %vm3674, %v3673, %v3668
      %v3676 = vadd.s32 %v3594, 4294967200
      %v3677 = vlaneseq
      %v3678 = vshrl.u32 %v3677, 7
      %v3679 = vsub.s32 %v3676, %v3678
      %v3680 = vrot.slane %v3535, %v3679
      %vm3681 = vcmask 851712
      %v3682 = vsel %vm3681, %v3680, %v3675
      %v3683 = vadd.s32 %v3594, 4294967192
      %v3684 = vlaneseq
      %v3685 = vshrl.u32 %v3684, 7
      %v3686 = vsub.s32 %v3683, %v3685
      %v3687 = vrot.slane %v3538, %v3686
      %vm3688 = vcmask 917312
      %v3689 = vsel %vm3688, %v3687, %v3682
      %v3690 = vadd.s32 %v3594, 4294967184
      %v3691 = vlaneseq
      %v3692 = vshrl.u32 %v3691, 7
      %v3693 = vsub.s32 %v3690, %v3692
      %v3694 = vrot.slane %v3541, %v3693
      %vm3695 = vcmask 982912
      %v3696 = vsel %vm3695, %v3694, %v3689
      %v3697 = vadd.s32 %v3594, 4294967176
      %v3698 = vlaneseq
      %v3699 = vshrl.u32 %v3698, 7
      %v3700 = vsub.s32 %v3697, %v3699
      %v3701 = vrot.slane %v3544, %v3700
      %vm3702 = vcmask 1048512
      %v3703 = vsel %vm3702, %v3701, %v3696
      %v3704 = vlaneseq
      %v3705 = vshrl.u32 %v3704, 7
      %v3706 = vsub.s32 %v3594, %v3705
      %v3707 = vrot.slane %v3547, %v3706
      %v3708 = vlaneseq
      %v3709 = vshrl.u32 %v3708, 7
      %v3710 = vsub.s32 %v3599, %v3709
      %v3711 = vrot.slane %v3550, %v3710
      %v3712 = vsel %vm3604, %v3711, %v3707
      %v3713 = vlaneseq
      %v3714 = vshrl.u32 %v3713, 7
      %v3715 = vsub.s32 %v3606, %v3714
      %v3716 = vrot.slane %v3553, %v3715
      %v3717 = vsel %vm3611, %v3716, %v3712
      %v3718 = vlaneseq
      %v3719 = vshrl.u32 %v3718, 7
      %v3720 = vsub.s32 %v3613, %v3719
      %v3721 = vrot.slane %v3556, %v3720
      %v3722 = vsel %vm3618, %v3721, %v3717
      %v3723 = vlaneseq
      %v3724 = vshrl.u32 %v3723, 7
      %v3725 = vsub.s32 %v3620, %v3724
      %v3726 = vrot.slane %v3559, %v3725
      %v3727 = vsel %vm3625, %v3726, %v3722
      %v3728 = vlaneseq
      %v3729 = vshrl.u32 %v3728, 7
      %v3730 = vsub.s32 %v3627, %v3729
      %v3731 = vrot.slane %v3562, %v3730
      %v3732 = vsel %vm3632, %v3731, %v3727
      %v3733 = vlaneseq
      %v3734 = vshrl.u32 %v3733, 7
      %v3735 = vsub.s32 %v3634, %v3734
      %v3736 = vrot.slane %v3565, %v3735
      %v3737 = vsel %vm3639, %v3736, %v3732
      %v3738 = vlaneseq
      %v3739 = vshrl.u32 %v3738, 7
      %v3740 = vsub.s32 %v3641, %v3739
      %v3741 = vrot.slane %v3568, %v3740
      %v3742 = vsel %vm3646, %v3741, %v3737
      %v3743 = vlaneseq
      %v3744 = vshrl.u32 %v3743, 7
      %v3745 = vsub.s32 %v3648, %v3744
      %v3746 = vrot.slane %v3571, %v3745
      %v3747 = vsel %vm3653, %v3746, %v3742
      %v3748 = vlaneseq
      %v3749 = vshrl.u32 %v3748, 7
      %v3750 = vsub.s32 %v3655, %v3749
      %v3751 = vrot.slane %v3574, %v3750
      %v3752 = vsel %vm3660, %v3751, %v3747
      %v3753 = vlaneseq
      %v3754 = vshrl.u32 %v3753, 7
      %v3755 = vsub.s32 %v3662, %v3754
      %v3756 = vrot.slane %v3577, %v3755
      %v3757 = vsel %vm3667, %v3756, %v3752
      %v3758 = vlaneseq
      %v3759 = vshrl.u32 %v3758, 7
      %v3760 = vsub.s32 %v3669, %v3759
      %v3761 = vrot.slane %v3580, %v3760
      %v3762 = vsel %vm3674, %v3761, %v3757
      %v3763 = vlaneseq
      %v3764 = vshrl.u32 %v3763, 7
      %v3765 = vsub.s32 %v3676, %v3764
      %v3766 = vrot.slane %v3583, %v3765
      %v3767 = vsel %vm3681, %v3766, %v3762
      %v3768 = vlaneseq
      %v3769 = vshrl.u32 %v3768, 7
      %v3770 = vsub.s32 %v3683, %v3769
      %v3771 = vrot.slane %v3586, %v3770
      %v3772 = vsel %vm3688, %v3771, %v3767
      %v3773 = vlaneseq
      %v3774 = vshrl.u32 %v3773, 7
      %v3775 = vsub.s32 %v3690, %v3774
      %v3776 = vrot.slane %v3589, %v3775
      %v3777 = vsel %vm3695, %v3776, %v3772
      %v3778 = vlaneseq
      %v3779 = vshrl.u32 %v3778, 7
      %v3780 = vsub.s32 %v3697, %v3779
      %v3781 = vrot.slane %v3592, %v3780
      %v3782 = vsel %vm3702, %v3781, %v3777
      %v3783 = vcombine.low %v3703, %v3782
      %v3785 = vunpack.c.l.s4 1966171168
      %v3786 = vunpack.c.0.s8 %v3785
      %v3787 = vlaneseq
      %v3788 = vshrl.u32 %v3787, 7
      %v3789 = vsub.s32 %v3786, %v3788
      %v3790 = vrot.slane %v3783, %v3789
      %v3792 = vunpack.c.l.s4 1966171168
      %v3793 = vunpack.c.0.s8 %v3792
      %v3794 = vlaneseq
      %v3795 = vshrl.u32 %v3794, 7
      %v3796 = vsub.s32 %v3793, %v3795
      %v3797 = vrot.slane %v3790, %v3796
      %v3799 = vlaneseq
      %vm3800 = vcmp.ge.s32.totalorder %v3799, 0
      %vm3801 = vcmp.lt.s32.totalorder %v3799, 256
      %vm3802 = vmand %vm3800, %vm3801
      %3803 = vst.msk [vmem:[%s218] sm:$0x3] %vm3802, %v3797
      %v3804 = vld [vmem:[%s209 + $0x80] sm:$0xf]
      %v3805 = vld [vmem:[%s209 + $0x84] sm:$0xf]
      %v3806 = vld [vmem:[%s209 + $0x88] sm:$0xf]
      %v3807 = vld [vmem:[%s209 + $0x8c] sm:$0xf]
      %v3808 = vld [vmem:[%s209 + $0x90] sm:$0xf]
      %v3809 = vld [vmem:[%s209 + $0x94] sm:$0xf]
      %v3810 = vld [vmem:[%s209 + $0x98] sm:$0xf]
      %v3811 = vld [vmem:[%s209 + $0x9c] sm:$0xf]
      %v3812 = vld [vmem:[%s209 + $0xa0] sm:$0xf]
      %v3813 = vld [vmem:[%s209 + $0xa4] sm:$0xf]
      %v3814 = vld [vmem:[%s209 + $0xa8] sm:$0xf]
      %v3815 = vld [vmem:[%s209 + $0xac] sm:$0xf]
      %v3816 = vld [vmem:[%s209 + $0xb0] sm:$0xf]
      %v3817 = vld [vmem:[%s209 + $0xb4] sm:$0xf]
      %v3818 = vld [vmem:[%s209 + $0xb8] sm:$0xf]
      %v3819 = vld [vmem:[%s209 + $0xbc] sm:$0xf]
      %v3820 = vld [vmem:[%s209 + $0xc0] sm:$0xf]
      %v3821 = vld [vmem:[%s209 + $0xc4] sm:$0xf]
      %v3822 = vld [vmem:[%s209 + $0xc8] sm:$0xf]
      %v3823 = vld [vmem:[%s209 + $0xcc] sm:$0xf]
      %v3824 = vld [vmem:[%s209 + $0xd0] sm:$0xf]
      %v3825 = vld [vmem:[%s209 + $0xd4] sm:$0xf]
      %v3826 = vld [vmem:[%s209 + $0xd8] sm:$0xf]
      %v3827 = vld [vmem:[%s209 + $0xdc] sm:$0xf]
      %v3828 = vld [vmem:[%s209 + $0xe0] sm:$0xf]
      %v3829 = vld [vmem:[%s209 + $0xe4] sm:$0xf]
      %v3830 = vld [vmem:[%s209 + $0xe8] sm:$0xf]
      %v3831 = vld [vmem:[%s209 + $0xec] sm:$0xf]
      %v3832 = vld [vmem:[%s209 + $0xf0] sm:$0xf]
      %v3833 = vld [vmem:[%s209 + $0xf4] sm:$0xf]
      %v3834 = vld [vmem:[%s209 + $0xf8] sm:$0xf]
      %v3835 = vld [vmem:[%s209 + $0xfc] sm:$0xf]
      %v3868 = vunpack.c.l.b16 %v3804
      %v3869 = vunpack.c.l.b16 %v3805
      %v3870 = vunpack.c.l.b16 %v3806
      %v3871 = vunpack.c.l.b16 %v3807
      %v3872 = vunpack.c.l.b16 %v3808
      %v3873 = vunpack.c.l.b16 %v3809
      %v3874 = vunpack.c.l.b16 %v3810
      %v3875 = vunpack.c.l.b16 %v3811
      %v3876 = vunpack.c.l.b16 %v3812
      %v3877 = vunpack.c.l.b16 %v3813
      %v3878 = vunpack.c.l.b16 %v3814
      %v3879 = vunpack.c.l.b16 %v3815
      %v3880 = vunpack.c.l.b16 %v3816
      %v3881 = vunpack.c.l.b16 %v3817
      %v3882 = vunpack.c.l.b16 %v3818
      %v3883 = vunpack.c.l.b16 %v3819
      %v3884 = vunpack.c.l.b16 %v3820
      %v3885 = vunpack.c.l.b16 %v3821
      %v3886 = vunpack.c.l.b16 %v3822
      %v3887 = vunpack.c.l.b16 %v3823
      %v3888 = vunpack.c.l.b16 %v3824
      %v3889 = vunpack.c.l.b16 %v3825
      %v3890 = vunpack.c.l.b16 %v3826
      %v3891 = vunpack.c.l.b16 %v3827
      %v3892 = vunpack.c.l.b16 %v3828
      %v3893 = vunpack.c.l.b16 %v3829
      %v3894 = vunpack.c.l.b16 %v3830
      %v3895 = vunpack.c.l.b16 %v3831
      %v3896 = vunpack.c.l.b16 %v3832
      %v3897 = vunpack.c.l.b16 %v3833
      %v3898 = vunpack.c.l.b16 %v3834
      %v3899 = vunpack.c.l.b16 %v3835
      %v3900 = vpack.c.b16 %v3869, %v3868
      %v3901 = vpack.c.b16 %v3871, %v3870
      %v3902 = vpack.c.b16 %v3873, %v3872
      %v3903 = vpack.c.b16 %v3875, %v3874
      %v3904 = vpack.c.b16 %v3877, %v3876
      %v3905 = vpack.c.b16 %v3879, %v3878
      %v3906 = vpack.c.b16 %v3881, %v3880
      %v3907 = vpack.c.b16 %v3883, %v3882
      %v3908 = vpack.c.b16 %v3885, %v3884
      %v3909 = vpack.c.b16 %v3887, %v3886
      %v3910 = vpack.c.b16 %v3889, %v3888
      %v3911 = vpack.c.b16 %v3891, %v3890
      %v3912 = vpack.c.b16 %v3893, %v3892
      %v3913 = vpack.c.b16 %v3895, %v3894
      %v3914 = vpack.c.b16 %v3897, %v3896
      %v3915 = vpack.c.b16 %v3899, %v3898
      %v3917 = vsel %vm373, %v3900, 0
      %v3920 = vsel %vm373, %v3901, 0
      %v3923 = vsel %vm373, %v3902, 0
      %v3926 = vsel %vm373, %v3903, 0
      %v3929 = vsel %vm373, %v3904, 0
      %v3932 = vsel %vm373, %v3905, 0
      %v3935 = vsel %vm373, %v3906, 0
      %v3938 = vsel %vm373, %v3907, 0
      %v3941 = vsel %vm373, %v3908, 0
      %v3944 = vsel %vm373, %v3909, 0
      %v3947 = vsel %vm373, %v3910, 0
      %v3950 = vsel %vm373, %v3911, 0
      %v3953 = vsel %vm373, %v3912, 0
      %v3956 = vsel %vm373, %v3913, 0
      %v3959 = vsel %vm373, %v3914, 0
      %v3962 = vsel %vm373, %v3915, 0
      %3964 = vmatprep.subr.bf16.mxu0 0
      %3965 = vmatpush1.bf16.msra.mxu0 0
      %3966 = vmatprep.subr.bf16.mxu0 0
      %3967 = vmatpush1.bf16.msra.mxu0 0
      %3968 = vmatprep.subr.bf16.mxu0 0
      %3969 = vmatpush1.bf16.msra.mxu0 0
      %3970 = vmatprep.subr.bf16.mxu0 0
      %3971 = vmatpush1.bf16.msra.mxu0 0
      %3972 = vmatprep.subr.bf16.mxu0 0
      %3973 = vmatpush1.bf16.msra.mxu0 %v368
      %3974 = vmatprep.subr.bf16.mxu0 0
      %3975 = vmatpush1.bf16.msra.mxu0 %v367
      %3976 = vmatprep.subr.bf16.mxu0 0
      %3977 = vmatpush1.bf16.msra.mxu0 %v366
      %3978 = vmatprep.subr.bf16.mxu0 0
      %3979 = vmatpush1.bf16.msra.mxu0 %v365
      %3980 = vmatprep.subr.bf16.mxu0 0
      %3981 = vmatpush2.bf16.msra.mxu0 0
      %3982 = vmatprep.subr.bf16.mxu0 0
      %3983 = vmatpush2.bf16.msra.mxu0 0
      %3984 = vmatprep.subr.bf16.mxu0 0
      %3985 = vmatpush2.bf16.msra.mxu0 0
      %3986 = vmatprep.subr.bf16.mxu0 0
      %3987 = vmatpush2.bf16.msra.mxu0 0
      %3988 = vmatprep.subr.bf16.mxu0 0
      %3989 = vmatpush2.bf16.msra.mxu0 0
      %3990 = vmatprep.subr.bf16.mxu0 0
      %3991 = vmatpush2.bf16.msra.mxu0 0
      %3992 = vmatprep.subr.bf16.mxu0 0
      %3993 = vmatpush2.bf16.msra.mxu0 0
      %3994 = vmatprep.subr.bf16.mxu0 0
      %3995 = vmatpush2.bf16.msra.mxu0 0
      %3996 = vmatprep.mubr.bf16.mxu0 0
      %3997 = vmatmul.mubr.bf16.gmra.mxu0 %v3917
      %v3998 = vpop.f32.mrf.mxu0
      %v3999 = vadd.f32 %v267, %v3998
      %v4000 = vpop.f32.mrf.mxu0
      %v4001 = vpop.f32.mrf.mxu0
      %v4002 = vadd.f32 %v267, %v4001
      %v4003 = vpop.f32.mrf.mxu0
      %4004 = vmatprep.mubr.bf16.mxu0 0
      %4005 = vmatmul.mubr.bf16.gmra.mxu0 %v3920
      %v4006 = vpop.f32.mrf.mxu0
      %v4007 = vadd.f32 %v267, %v4006
      %v4008 = vpop.f32.mrf.mxu0
      %v4009 = vpop.f32.mrf.mxu0
      %v4010 = vadd.f32 %v267, %v4009
      %v4011 = vpop.f32.mrf.mxu0
      %4012 = vmatprep.mubr.bf16.mxu0 0
      %4013 = vmatmul.mubr.bf16.gmra.mxu0 %v3923
      %v4014 = vpop.f32.mrf.mxu0
      %v4015 = vadd.f32 %v267, %v4014
      %v4016 = vpop.f32.mrf.mxu0
      %v4017 = vpop.f32.mrf.mxu0
      %v4018 = vadd.f32 %v267, %v4017
      %v4019 = vpop.f32.mrf.mxu0
      %4020 = vmatprep.mubr.bf16.mxu0 0
      %4021 = vmatmul.mubr.bf16.gmra.mxu0 %v3926
      %v4022 = vpop.f32.mrf.mxu0
      %v4023 = vadd.f32 %v267, %v4022
      %v4024 = vpop.f32.mrf.mxu0
      %v4025 = vpop.f32.mrf.mxu0
      %v4026 = vadd.f32 %v267, %v4025
      %v4027 = vpop.f32.mrf.mxu0
      %4028 = vmatprep.mubr.bf16.mxu0 0
      %4029 = vmatmul.mubr.bf16.gmra.mxu0 %v3929
      %v4030 = vpop.f32.mrf.mxu0
      %v4031 = vadd.f32 %v267, %v4030
      %v4032 = vpop.f32.mrf.mxu0
      %v4033 = vpop.f32.mrf.mxu0
      %v4034 = vadd.f32 %v267, %v4033
      %v4035 = vpop.f32.mrf.mxu0
      %4036 = vmatprep.mubr.bf16.mxu0 0
      %4037 = vmatmul.mubr.bf16.gmra.mxu0 %v3932
      %v4038 = vpop.f32.mrf.mxu0
      %v4039 = vadd.f32 %v267, %v4038
      %v4040 = vpop.f32.mrf.mxu0
      %v4041 = vpop.f32.mrf.mxu0
      %v4042 = vadd.f32 %v267, %v4041
      %v4043 = vpop.f32.mrf.mxu0
      %4044 = vmatprep.mubr.bf16.mxu0 0
      %4045 = vmatmul.mubr.bf16.gmra.mxu0 %v3935
      %v4046 = vpop.f32.mrf.mxu0
      %v4047 = vadd.f32 %v267, %v4046
      %v4048 = vpop.f32.mrf.mxu0
      %v4049 = vpop.f32.mrf.mxu0
      %v4050 = vadd.f32 %v267, %v4049
      %v4051 = vpop.f32.mrf.mxu0
      %4052 = vmatprep.mubr.bf16.mxu0 0
      %4053 = vmatmul.mubr.bf16.gmra.mxu0 %v3938
      %v4054 = vpop.f32.mrf.mxu0
      %v4055 = vadd.f32 %v267, %v4054
      %v4056 = vpop.f32.mrf.mxu0
      %v4057 = vpop.f32.mrf.mxu0
      %v4058 = vadd.f32 %v267, %v4057
      %v4059 = vpop.f32.mrf.mxu0
      %4060 = vmatprep.mubr.bf16.mxu0 0
      %4061 = vmatmul.mubr.bf16.gmra.mxu0 %v3941
      %v4062 = vpop.f32.mrf.mxu0
      %v4063 = vadd.f32 %v267, %v4062
      %v4064 = vpop.f32.mrf.mxu0
      %v4065 = vpop.f32.mrf.mxu0
      %v4066 = vadd.f32 %v267, %v4065
      %v4067 = vpop.f32.mrf.mxu0
      %4068 = vmatprep.mubr.bf16.mxu0 0
      %4069 = vmatmul.mubr.bf16.gmra.mxu0 %v3944
      %v4070 = vpop.f32.mrf.mxu0
      %v4071 = vadd.f32 %v267, %v4070
      %v4072 = vpop.f32.mrf.mxu0
      %v4073 = vpop.f32.mrf.mxu0
      %v4074 = vadd.f32 %v267, %v4073
      %v4075 = vpop.f32.mrf.mxu0
      %4076 = vmatprep.mubr.bf16.mxu0 0
      %4077 = vmatmul.mubr.bf16.gmra.mxu0 %v3947
      %v4078 = vpop.f32.mrf.mxu0
      %v4079 = vadd.f32 %v267, %v4078
      %v4080 = vpop.f32.mrf.mxu0
      %v4081 = vpop.f32.mrf.mxu0
      %v4082 = vadd.f32 %v267, %v4081
      %v4083 = vpop.f32.mrf.mxu0
      %4084 = vmatprep.mubr.bf16.mxu0 0
      %4085 = vmatmul.mubr.bf16.gmra.mxu0 %v3950
      %v4086 = vpop.f32.mrf.mxu0
      %v4087 = vadd.f32 %v267, %v4086
      %v4088 = vpop.f32.mrf.mxu0
      %v4089 = vpop.f32.mrf.mxu0
      %v4090 = vadd.f32 %v267, %v4089
      %v4091 = vpop.f32.mrf.mxu0
      %4092 = vmatprep.mubr.bf16.mxu0 0
      %4093 = vmatmul.mubr.bf16.gmra.mxu0 %v3953
      %v4094 = vpop.f32.mrf.mxu0
      %v4095 = vadd.f32 %v267, %v4094
      %v4096 = vpop.f32.mrf.mxu0
      %v4097 = vpop.f32.mrf.mxu0
      %v4098 = vadd.f32 %v267, %v4097
      %v4099 = vpop.f32.mrf.mxu0
      %4100 = vmatprep.mubr.bf16.mxu0 0
      %4101 = vmatmul.mubr.bf16.gmra.mxu0 %v3956
      %v4102 = vpop.f32.mrf.mxu0
      %v4103 = vadd.f32 %v267, %v4102
      %v4104 = vpop.f32.mrf.mxu0
      %v4105 = vpop.f32.mrf.mxu0
      %v4106 = vadd.f32 %v267, %v4105
      %v4107 = vpop.f32.mrf.mxu0
      %4108 = vmatprep.mubr.bf16.mxu0 0
      %4109 = vmatmul.mubr.bf16.gmra.mxu0 %v3959
      %v4110 = vpop.f32.mrf.mxu0
      %v4111 = vadd.f32 %v267, %v4110
      %v4112 = vpop.f32.mrf.mxu0
      %v4113 = vpop.f32.mrf.mxu0
      %v4114 = vadd.f32 %v267, %v4113
      %v4115 = vpop.f32.mrf.mxu0
      %4116 = vmatprep.mubr.bf16.mxu0 0
      %4117 = vmatmul.mubr.bf16.gmra.mxu0 %v3962
      %v4118 = vpop.f32.mrf.mxu0
      %v4119 = vadd.f32 %v267, %v4118
      %v4120 = vpop.f32.mrf.mxu0
      %v4121 = vpop.f32.mrf.mxu0
      %v4122 = vadd.f32 %v267, %v4121
      %v4123 = vpop.f32.mrf.mxu0
      %4124 = vdwg.mxu0
      %4157 = vrot.lane.b32.xlu0 %v3999, 96
      %v4158 = vpop.permute.xlu0 %4157
      %4159 = vrot.lane.b32.xlu0 %v4002, 96
      %v4160 = vpop.permute.xlu0 %4159
      %4161 = vrot.lane.b32.xlu0 %v4007, 96
      %v4162 = vpop.permute.xlu0 %4161
      %4163 = vrot.lane.b32.xlu0 %v4010, 96
      %v4164 = vpop.permute.xlu0 %4163
      %4165 = vrot.lane.b32.xlu0 %v4015, 96
      %v4166 = vpop.permute.xlu0 %4165
      %4167 = vrot.lane.b32.xlu0 %v4018, 96
      %v4168 = vpop.permute.xlu0 %4167
      %4169 = vrot.lane.b32.xlu0 %v4023, 96
      %v4170 = vpop.permute.xlu0 %4169
      %4171 = vrot.lane.b32.xlu0 %v4026, 96
      %v4172 = vpop.permute.xlu0 %4171
      %4173 = vrot.lane.b32.xlu0 %v4031, 96
      %v4174 = vpop.permute.xlu0 %4173
      %4175 = vrot.lane.b32.xlu0 %v4034, 96
      %v4176 = vpop.permute.xlu0 %4175
      %4177 = vrot.lane.b32.xlu0 %v4039, 96
      %v4178 = vpop.permute.xlu0 %4177
      %4179 = vrot.lane.b32.xlu0 %v4042, 96
      %v4180 = vpop.permute.xlu0 %4179
      %4181 = vrot.lane.b32.xlu0 %v4047, 96
      %v4182 = vpop.permute.xlu0 %4181
      %4183 = vrot.lane.b32.xlu0 %v4050, 96
      %v4184 = vpop.permute.xlu0 %4183
      %4185 = vrot.lane.b32.xlu0 %v4055, 96
      %v4186 = vpop.permute.xlu0 %4185
      %4187 = vrot.lane.b32.xlu0 %v4058, 96
      %v4188 = vpop.permute.xlu0 %4187
      %4189 = vrot.lane.b32.xlu0 %v4063, 96
      %v4190 = vpop.permute.xlu0 %4189
      %4191 = vrot.lane.b32.xlu0 %v4066, 96
      %v4192 = vpop.permute.xlu0 %4191
      %4193 = vrot.lane.b32.xlu0 %v4071, 96
      %v4194 = vpop.permute.xlu0 %4193
      %4195 = vrot.lane.b32.xlu0 %v4074, 96
      %v4196 = vpop.permute.xlu0 %4195
      %4197 = vrot.lane.b32.xlu0 %v4079, 96
      %v4198 = vpop.permute.xlu0 %4197
      %4199 = vrot.lane.b32.xlu0 %v4082, 96
      %v4200 = vpop.permute.xlu0 %4199
      %4201 = vrot.lane.b32.xlu0 %v4087, 96
      %v4202 = vpop.permute.xlu0 %4201
      %4203 = vrot.lane.b32.xlu0 %v4090, 96
      %v4204 = vpop.permute.xlu0 %4203
      %4205 = vrot.lane.b32.xlu0 %v4095, 96
      %v4206 = vpop.permute.xlu0 %4205
      %4207 = vrot.lane.b32.xlu0 %v4098, 96
      %v4208 = vpop.permute.xlu0 %4207
      %4209 = vrot.lane.b32.xlu0 %v4103, 96
      %v4210 = vpop.permute.xlu0 %4209
      %4211 = vrot.lane.b32.xlu0 %v4106, 96
      %v4212 = vpop.permute.xlu0 %4211
      %4213 = vrot.lane.b32.xlu0 %v4111, 96
      %v4214 = vpop.permute.xlu0 %4213
      %4215 = vrot.lane.b32.xlu0 %v4114, 96
      %v4216 = vpop.permute.xlu0 %4215
      %4217 = vrot.lane.b32.xlu0 %v4119, 96
      %v4218 = vpop.permute.xlu0 %4217
      %4219 = vrot.lane.b32.xlu0 %v4122, 96
      %v4220 = vpop.permute.xlu0 %4219
      %v4253 = vmul.f32 %v3999, %v4158
      %v4254 = vmul.f32 %v4002, %v4160
      %v4255 = vmul.f32 %v4007, %v4162
      %v4256 = vmul.f32 %v4010, %v4164
      %v4257 = vmul.f32 %v4015, %v4166
      %v4258 = vmul.f32 %v4018, %v4168
      %v4259 = vmul.f32 %v4023, %v4170
      %v4260 = vmul.f32 %v4026, %v4172
      %v4261 = vmul.f32 %v4031, %v4174
      %v4262 = vmul.f32 %v4034, %v4176
      %v4263 = vmul.f32 %v4039, %v4178
      %v4264 = vmul.f32 %v4042, %v4180
      %v4265 = vmul.f32 %v4047, %v4182
      %v4266 = vmul.f32 %v4050, %v4184
      %v4267 = vmul.f32 %v4055, %v4186
      %v4268 = vmul.f32 %v4058, %v4188
      %v4269 = vmul.f32 %v4063, %v4190
      %v4270 = vmul.f32 %v4066, %v4192
      %v4271 = vmul.f32 %v4071, %v4194
      %v4272 = vmul.f32 %v4074, %v4196
      %v4273 = vmul.f32 %v4079, %v4198
      %v4274 = vmul.f32 %v4082, %v4200
      %v4275 = vmul.f32 %v4087, %v4202
      %v4276 = vmul.f32 %v4090, %v4204
      %v4277 = vmul.f32 %v4095, %v4206
      %v4278 = vmul.f32 %v4098, %v4208
      %v4279 = vmul.f32 %v4103, %v4210
      %v4280 = vmul.f32 %v4106, %v4212
      %v4281 = vmul.f32 %v4111, %v4214
      %v4282 = vmul.f32 %v4114, %v4216
      %v4283 = vmul.f32 %v4119, %v4218
      %v4284 = vmul.f32 %v4122, %v4220
      %v4285 = vsel %vm743, %v4253, 0.0
      %4286 = vadd.xlane.f32.xlu0 %v4285
      %v4287 = vpop.xlane.xlu0 %4286
      %v4288 = vsel %vm743, %v4254, 0.0
      %4289 = vadd.xlane.f32.xlu0 %v4288
      %v4290 = vpop.xlane.xlu0 %4289
      %v4291 = vsel %vm743, %v4255, 0.0
      %4292 = vadd.xlane.f32.xlu0 %v4291
      %v4293 = vpop.xlane.xlu0 %4292
      %v4294 = vsel %vm743, %v4256, 0.0
      %4295 = vadd.xlane.f32.xlu0 %v4294
      %v4296 = vpop.xlane.xlu0 %4295
      %v4297 = vsel %vm743, %v4257, 0.0
      %4298 = vadd.xlane.f32.xlu0 %v4297
      %v4299 = vpop.xlane.xlu0 %4298
      %v4300 = vsel %vm743, %v4258, 0.0
      %4301 = vadd.xlane.f32.xlu0 %v4300
      %v4302 = vpop.xlane.xlu0 %4301
      %v4303 = vsel %vm743, %v4259, 0.0
      %4304 = vadd.xlane.f32.xlu0 %v4303
      %v4305 = vpop.xlane.xlu0 %4304
      %v4306 = vsel %vm743, %v4260, 0.0
      %4307 = vadd.xlane.f32.xlu0 %v4306
      %v4308 = vpop.xlane.xlu0 %4307
      %v4309 = vsel %vm743, %v4261, 0.0
      %4310 = vadd.xlane.f32.xlu0 %v4309
      %v4311 = vpop.xlane.xlu0 %4310
      %v4312 = vsel %vm743, %v4262, 0.0
      %4313 = vadd.xlane.f32.xlu0 %v4312
      %v4314 = vpop.xlane.xlu0 %4313
      %v4315 = vsel %vm743, %v4263, 0.0
      %4316 = vadd.xlane.f32.xlu0 %v4315
      %v4317 = vpop.xlane.xlu0 %4316
      %v4318 = vsel %vm743, %v4264, 0.0
      %4319 = vadd.xlane.f32.xlu0 %v4318
      %v4320 = vpop.xlane.xlu0 %4319
      %v4321 = vsel %vm743, %v4265, 0.0
      %4322 = vadd.xlane.f32.xlu0 %v4321
      %v4323 = vpop.xlane.xlu0 %4322
      %v4324 = vsel %vm743, %v4266, 0.0
      %4325 = vadd.xlane.f32.xlu0 %v4324
      %v4326 = vpop.xlane.xlu0 %4325
      %v4327 = vsel %vm743, %v4267, 0.0
      %4328 = vadd.xlane.f32.xlu0 %v4327
      %v4329 = vpop.xlane.xlu0 %4328
      %v4330 = vsel %vm743, %v4268, 0.0
      %4331 = vadd.xlane.f32.xlu0 %v4330
      %v4332 = vpop.xlane.xlu0 %4331
      %v4333 = vsel %vm743, %v4269, 0.0
      %4334 = vadd.xlane.f32.xlu0 %v4333
      %v4335 = vpop.xlane.xlu0 %4334
      %v4336 = vsel %vm743, %v4270, 0.0
      %4337 = vadd.xlane.f32.xlu0 %v4336
      %v4338 = vpop.xlane.xlu0 %4337
      %v4339 = vsel %vm743, %v4271, 0.0
      %4340 = vadd.xlane.f32.xlu0 %v4339
      %v4341 = vpop.xlane.xlu0 %4340
      %v4342 = vsel %vm743, %v4272, 0.0
      %4343 = vadd.xlane.f32.xlu0 %v4342
      %v4344 = vpop.xlane.xlu0 %4343
      %v4345 = vsel %vm743, %v4273, 0.0
      %4346 = vadd.xlane.f32.xlu0 %v4345
      %v4347 = vpop.xlane.xlu0 %4346
      %v4348 = vsel %vm743, %v4274, 0.0
      %4349 = vadd.xlane.f32.xlu0 %v4348
      %v4350 = vpop.xlane.xlu0 %4349
      %v4351 = vsel %vm743, %v4275, 0.0
      %4352 = vadd.xlane.f32.xlu0 %v4351
      %v4353 = vpop.xlane.xlu0 %4352
      %v4354 = vsel %vm743, %v4276, 0.0
      %4355 = vadd.xlane.f32.xlu0 %v4354
      %v4356 = vpop.xlane.xlu0 %4355
      %v4357 = vsel %vm743, %v4277, 0.0
      %4358 = vadd.xlane.f32.xlu0 %v4357
      %v4359 = vpop.xlane.xlu0 %4358
      %v4360 = vsel %vm743, %v4278, 0.0
      %4361 = vadd.xlane.f32.xlu0 %v4360
      %v4362 = vpop.xlane.xlu0 %4361
      %v4363 = vsel %vm743, %v4279, 0.0
      %4364 = vadd.xlane.f32.xlu0 %v4363
      %v4365 = vpop.xlane.xlu0 %4364
      %v4366 = vsel %vm743, %v4280, 0.0
      %4367 = vadd.xlane.f32.xlu0 %v4366
      %v4368 = vpop.xlane.xlu0 %4367
      %v4369 = vsel %vm743, %v4281, 0.0
      %4370 = vadd.xlane.f32.xlu0 %v4369
      %v4371 = vpop.xlane.xlu0 %4370
      %v4372 = vsel %vm743, %v4282, 0.0
      %4373 = vadd.xlane.f32.xlu0 %v4372
      %v4374 = vpop.xlane.xlu0 %4373
      %v4375 = vsel %vm743, %v4283, 0.0
      %4376 = vadd.xlane.f32.xlu0 %v4375
      %v4377 = vpop.xlane.xlu0 %4376
      %v4378 = vsel %vm743, %v4284, 0.0
      %4379 = vadd.xlane.f32.xlu0 %v4378
      %v4380 = vpop.xlane.xlu0 %4379
      %v4381 = vadd.f32 %v4287, %v840
      %v4382 = vadd.f32 %v4290, %v840
      %v4383 = vadd.f32 %v4293, %v840
      %v4384 = vadd.f32 %v4296, %v840
      %v4385 = vadd.f32 %v4299, %v840
      %v4386 = vadd.f32 %v4302, %v840
      %v4387 = vadd.f32 %v4305, %v840
      %v4388 = vadd.f32 %v4308, %v840
      %v4389 = vadd.f32 %v4311, %v840
      %v4390 = vadd.f32 %v4314, %v840
      %v4391 = vadd.f32 %v4317, %v840
      %v4392 = vadd.f32 %v4320, %v840
      %v4393 = vadd.f32 %v4323, %v840
      %v4394 = vadd.f32 %v4326, %v840
      %v4395 = vadd.f32 %v4329, %v840
      %v4396 = vadd.f32 %v4332, %v840
      %v4397 = vadd.f32 %v4335, %v840
      %v4398 = vadd.f32 %v4338, %v840
      %v4399 = vadd.f32 %v4341, %v840
      %v4400 = vadd.f32 %v4344, %v840
      %v4401 = vadd.f32 %v4347, %v840
      %v4402 = vadd.f32 %v4350, %v840
      %v4403 = vadd.f32 %v4353, %v840
      %v4404 = vadd.f32 %v4356, %v840
      %v4405 = vadd.f32 %v4359, %v840
      %v4406 = vadd.f32 %v4362, %v840
      %v4407 = vadd.f32 %v4365, %v840
      %v4408 = vadd.f32 %v4368, %v840
      %v4409 = vadd.f32 %v4371, %v840
      %v4410 = vadd.f32 %v4374, %v840
      %v4411 = vadd.f32 %v4377, %v840
      %v4412 = vadd.f32 %v4380, %v840
      %v4445 = vlaneseq
      %v4446 = vshrl.u32 %v4445, 7
      %v4447 = vsub.s32 0, %v4446
      %v4448 = vrot.slane %v4381, %v4447
      %v4449 = vlaneseq
      %v4450 = vshrl.u32 %v4449, 7
      %v4451 = vsub.s32 1, %v4450
      %v4452 = vrot.slane %v4381, %v4451
      %v4453 = vlaneseq
      %v4454 = vshrl.u32 %v4453, 7
      %v4455 = vsub.s32 2, %v4454
      %v4456 = vrot.slane %v4381, %v4455
      %v4457 = vlaneseq
      %v4458 = vshrl.u32 %v4457, 7
      %v4459 = vsub.s32 3, %v4458
      %v4460 = vrot.slane %v4381, %v4459
      %v4461 = vlaneseq
      %v4462 = vshrl.u32 %v4461, 7
      %v4463 = vsub.s32 4, %v4462
      %v4464 = vrot.slane %v4381, %v4463
      %v4465 = vlaneseq
      %v4466 = vshrl.u32 %v4465, 7
      %v4467 = vsub.s32 5, %v4466
      %v4468 = vrot.slane %v4381, %v4467
      %v4469 = vlaneseq
      %v4470 = vshrl.u32 %v4469, 7
      %v4471 = vsub.s32 6, %v4470
      %v4472 = vrot.slane %v4381, %v4471
      %v4473 = vlaneseq
      %v4474 = vshrl.u32 %v4473, 7
      %v4475 = vsub.s32 7, %v4474
      %v4476 = vrot.slane %v4381, %v4475
      %v4477 = vlaneseq
      %v4478 = vshrl.u32 %v4477, 7
      %v4479 = vsub.s32 0, %v4478
      %v4480 = vrot.slane %v4382, %v4479
      %v4481 = vlaneseq
      %v4482 = vshrl.u32 %v4481, 7
      %v4483 = vsub.s32 1, %v4482
      %v4484 = vrot.slane %v4382, %v4483
      %v4485 = vlaneseq
      %v4486 = vshrl.u32 %v4485, 7
      %v4487 = vsub.s32 2, %v4486
      %v4488 = vrot.slane %v4382, %v4487
      %v4489 = vlaneseq
      %v4490 = vshrl.u32 %v4489, 7
      %v4491 = vsub.s32 3, %v4490
      %v4492 = vrot.slane %v4382, %v4491
      %v4493 = vlaneseq
      %v4494 = vshrl.u32 %v4493, 7
      %v4495 = vsub.s32 4, %v4494
      %v4496 = vrot.slane %v4382, %v4495
      %v4497 = vlaneseq
      %v4498 = vshrl.u32 %v4497, 7
      %v4499 = vsub.s32 5, %v4498
      %v4500 = vrot.slane %v4382, %v4499
      %v4501 = vlaneseq
      %v4502 = vshrl.u32 %v4501, 7
      %v4503 = vsub.s32 6, %v4502
      %v4504 = vrot.slane %v4382, %v4503
      %v4505 = vlaneseq
      %v4506 = vshrl.u32 %v4505, 7
      %v4507 = vsub.s32 7, %v4506
      %v4508 = vrot.slane %v4382, %v4507
      %v4509 = vlaneseq
      %v4510 = vshrl.u32 %v4509, 7
      %v4511 = vsub.s32 0, %v4510
      %v4512 = vrot.slane %v4383, %v4511
      %v4513 = vlaneseq
      %v4514 = vshrl.u32 %v4513, 7
      %v4515 = vsub.s32 1, %v4514
      %v4516 = vrot.slane %v4383, %v4515
      %v4517 = vlaneseq
      %v4518 = vshrl.u32 %v4517, 7
      %v4519 = vsub.s32 2, %v4518
      %v4520 = vrot.slane %v4383, %v4519
      %v4521 = vlaneseq
      %v4522 = vshrl.u32 %v4521, 7
      %v4523 = vsub.s32 3, %v4522
      %v4524 = vrot.slane %v4383, %v4523
      %v4525 = vlaneseq
      %v4526 = vshrl.u32 %v4525, 7
      %v4527 = vsub.s32 4, %v4526
      %v4528 = vrot.slane %v4383, %v4527
      %v4529 = vlaneseq
      %v4530 = vshrl.u32 %v4529, 7
      %v4531 = vsub.s32 5, %v4530
      %v4532 = vrot.slane %v4383, %v4531
      %v4533 = vlaneseq
      %v4534 = vshrl.u32 %v4533, 7
      %v4535 = vsub.s32 6, %v4534
      %v4536 = vrot.slane %v4383, %v4535
      %v4537 = vlaneseq
      %v4538 = vshrl.u32 %v4537, 7
      %v4539 = vsub.s32 7, %v4538
      %v4540 = vrot.slane %v4383, %v4539
      %v4541 = vlaneseq
      %v4542 = vshrl.u32 %v4541, 7
      %v4543 = vsub.s32 0, %v4542
      %v4544 = vrot.slane %v4384, %v4543
      %v4545 = vlaneseq
      %v4546 = vshrl.u32 %v4545, 7
      %v4547 = vsub.s32 1, %v4546
      %v4548 = vrot.slane %v4384, %v4547
      %v4549 = vlaneseq
      %v4550 = vshrl.u32 %v4549, 7
      %v4551 = vsub.s32 2, %v4550
      %v4552 = vrot.slane %v4384, %v4551
      %v4553 = vlaneseq
      %v4554 = vshrl.u32 %v4553, 7
      %v4555 = vsub.s32 3, %v4554
      %v4556 = vrot.slane %v4384, %v4555
      %v4557 = vlaneseq
      %v4558 = vshrl.u32 %v4557, 7
      %v4559 = vsub.s32 4, %v4558
      %v4560 = vrot.slane %v4384, %v4559
      %v4561 = vlaneseq
      %v4562 = vshrl.u32 %v4561, 7
      %v4563 = vsub.s32 5, %v4562
      %v4564 = vrot.slane %v4384, %v4563
      %v4565 = vlaneseq
      %v4566 = vshrl.u32 %v4565, 7
      %v4567 = vsub.s32 6, %v4566
      %v4568 = vrot.slane %v4384, %v4567
      %v4569 = vlaneseq
      %v4570 = vshrl.u32 %v4569, 7
      %v4571 = vsub.s32 7, %v4570
      %v4572 = vrot.slane %v4384, %v4571
      %v4573 = vlaneseq
      %v4574 = vshrl.u32 %v4573, 7
      %v4575 = vsub.s32 0, %v4574
      %v4576 = vrot.slane %v4385, %v4575
      %v4577 = vlaneseq
      %v4578 = vshrl.u32 %v4577, 7
      %v4579 = vsub.s32 1, %v4578
      %v4580 = vrot.slane %v4385, %v4579
      %v4581 = vlaneseq
      %v4582 = vshrl.u32 %v4581, 7
      %v4583 = vsub.s32 2, %v4582
      %v4584 = vrot.slane %v4385, %v4583
      %v4585 = vlaneseq
      %v4586 = vshrl.u32 %v4585, 7
      %v4587 = vsub.s32 3, %v4586
      %v4588 = vrot.slane %v4385, %v4587
      %v4589 = vlaneseq
      %v4590 = vshrl.u32 %v4589, 7
      %v4591 = vsub.s32 4, %v4590
      %v4592 = vrot.slane %v4385, %v4591
      %v4593 = vlaneseq
      %v4594 = vshrl.u32 %v4593, 7
      %v4595 = vsub.s32 5, %v4594
      %v4596 = vrot.slane %v4385, %v4595
      %v4597 = vlaneseq
      %v4598 = vshrl.u32 %v4597, 7
      %v4599 = vsub.s32 6, %v4598
      %v4600 = vrot.slane %v4385, %v4599
      %v4601 = vlaneseq
      %v4602 = vshrl.u32 %v4601, 7
      %v4603 = vsub.s32 7, %v4602
      %v4604 = vrot.slane %v4385, %v4603
      %v4605 = vlaneseq
      %v4606 = vshrl.u32 %v4605, 7
      %v4607 = vsub.s32 0, %v4606
      %v4608 = vrot.slane %v4386, %v4607
      %v4609 = vlaneseq
      %v4610 = vshrl.u32 %v4609, 7
      %v4611 = vsub.s32 1, %v4610
      %v4612 = vrot.slane %v4386, %v4611
      %v4613 = vlaneseq
      %v4614 = vshrl.u32 %v4613, 7
      %v4615 = vsub.s32 2, %v4614
      %v4616 = vrot.slane %v4386, %v4615
      %v4617 = vlaneseq
      %v4618 = vshrl.u32 %v4617, 7
      %v4619 = vsub.s32 3, %v4618
      %v4620 = vrot.slane %v4386, %v4619
      %v4621 = vlaneseq
      %v4622 = vshrl.u32 %v4621, 7
      %v4623 = vsub.s32 4, %v4622
      %v4624 = vrot.slane %v4386, %v4623
      %v4625 = vlaneseq
      %v4626 = vshrl.u32 %v4625, 7
      %v4627 = vsub.s32 5, %v4626
      %v4628 = vrot.slane %v4386, %v4627
      %v4629 = vlaneseq
      %v4630 = vshrl.u32 %v4629, 7
      %v4631 = vsub.s32 6, %v4630
      %v4632 = vrot.slane %v4386, %v4631
      %v4633 = vlaneseq
      %v4634 = vshrl.u32 %v4633, 7
      %v4635 = vsub.s32 7, %v4634
      %v4636 = vrot.slane %v4386, %v4635
      %v4637 = vlaneseq
      %v4638 = vshrl.u32 %v4637, 7
      %v4639 = vsub.s32 0, %v4638
      %v4640 = vrot.slane %v4387, %v4639
      %v4641 = vlaneseq
      %v4642 = vshrl.u32 %v4641, 7
      %v4643 = vsub.s32 1, %v4642
      %v4644 = vrot.slane %v4387, %v4643
      %v4645 = vlaneseq
      %v4646 = vshrl.u32 %v4645, 7
      %v4647 = vsub.s32 2, %v4646
      %v4648 = vrot.slane %v4387, %v4647
      %v4649 = vlaneseq
      %v4650 = vshrl.u32 %v4649, 7
      %v4651 = vsub.s32 3, %v4650
      %v4652 = vrot.slane %v4387, %v4651
      %v4653 = vlaneseq
      %v4654 = vshrl.u32 %v4653, 7
      %v4655 = vsub.s32 4, %v4654
      %v4656 = vrot.slane %v4387, %v4655
      %v4657 = vlaneseq
      %v4658 = vshrl.u32 %v4657, 7
      %v4659 = vsub.s32 5, %v4658
      %v4660 = vrot.slane %v4387, %v4659
      %v4661 = vlaneseq
      %v4662 = vshrl.u32 %v4661, 7
      %v4663 = vsub.s32 6, %v4662
      %v4664 = vrot.slane %v4387, %v4663
      %v4665 = vlaneseq
      %v4666 = vshrl.u32 %v4665, 7
      %v4667 = vsub.s32 7, %v4666
      %v4668 = vrot.slane %v4387, %v4667
      %v4669 = vlaneseq
      %v4670 = vshrl.u32 %v4669, 7
      %v4671 = vsub.s32 0, %v4670
      %v4672 = vrot.slane %v4388, %v4671
      %v4673 = vlaneseq
      %v4674 = vshrl.u32 %v4673, 7
      %v4675 = vsub.s32 1, %v4674
      %v4676 = vrot.slane %v4388, %v4675
      %v4677 = vlaneseq
      %v4678 = vshrl.u32 %v4677, 7
      %v4679 = vsub.s32 2, %v4678
      %v4680 = vrot.slane %v4388, %v4679
      %v4681 = vlaneseq
      %v4682 = vshrl.u32 %v4681, 7
      %v4683 = vsub.s32 3, %v4682
      %v4684 = vrot.slane %v4388, %v4683
      %v4685 = vlaneseq
      %v4686 = vshrl.u32 %v4685, 7
      %v4687 = vsub.s32 4, %v4686
      %v4688 = vrot.slane %v4388, %v4687
      %v4689 = vlaneseq
      %v4690 = vshrl.u32 %v4689, 7
      %v4691 = vsub.s32 5, %v4690
      %v4692 = vrot.slane %v4388, %v4691
      %v4693 = vlaneseq
      %v4694 = vshrl.u32 %v4693, 7
      %v4695 = vsub.s32 6, %v4694
      %v4696 = vrot.slane %v4388, %v4695
      %v4697 = vlaneseq
      %v4698 = vshrl.u32 %v4697, 7
      %v4699 = vsub.s32 7, %v4698
      %v4700 = vrot.slane %v4388, %v4699
      %v4701 = vlaneseq
      %v4702 = vshrl.u32 %v4701, 7
      %v4703 = vsub.s32 0, %v4702
      %v4704 = vrot.slane %v4389, %v4703
      %v4705 = vlaneseq
      %v4706 = vshrl.u32 %v4705, 7
      %v4707 = vsub.s32 1, %v4706
      %v4708 = vrot.slane %v4389, %v4707
      %v4709 = vlaneseq
      %v4710 = vshrl.u32 %v4709, 7
      %v4711 = vsub.s32 2, %v4710
      %v4712 = vrot.slane %v4389, %v4711
      %v4713 = vlaneseq
      %v4714 = vshrl.u32 %v4713, 7
      %v4715 = vsub.s32 3, %v4714
      %v4716 = vrot.slane %v4389, %v4715
      %v4717 = vlaneseq
      %v4718 = vshrl.u32 %v4717, 7
      %v4719 = vsub.s32 4, %v4718
      %v4720 = vrot.slane %v4389, %v4719
      %v4721 = vlaneseq
      %v4722 = vshrl.u32 %v4721, 7
      %v4723 = vsub.s32 5, %v4722
      %v4724 = vrot.slane %v4389, %v4723
      %v4725 = vlaneseq
      %v4726 = vshrl.u32 %v4725, 7
      %v4727 = vsub.s32 6, %v4726
      %v4728 = vrot.slane %v4389, %v4727
      %v4729 = vlaneseq
      %v4730 = vshrl.u32 %v4729, 7
      %v4731 = vsub.s32 7, %v4730
      %v4732 = vrot.slane %v4389, %v4731
      %v4733 = vlaneseq
      %v4734 = vshrl.u32 %v4733, 7
      %v4735 = vsub.s32 0, %v4734
      %v4736 = vrot.slane %v4390, %v4735
      %v4737 = vlaneseq
      %v4738 = vshrl.u32 %v4737, 7
      %v4739 = vsub.s32 1, %v4738
      %v4740 = vrot.slane %v4390, %v4739
      %v4741 = vlaneseq
      %v4742 = vshrl.u32 %v4741, 7
      %v4743 = vsub.s32 2, %v4742
      %v4744 = vrot.slane %v4390, %v4743
      %v4745 = vlaneseq
      %v4746 = vshrl.u32 %v4745, 7
      %v4747 = vsub.s32 3, %v4746
      %v4748 = vrot.slane %v4390, %v4747
      %v4749 = vlaneseq
      %v4750 = vshrl.u32 %v4749, 7
      %v4751 = vsub.s32 4, %v4750
      %v4752 = vrot.slane %v4390, %v4751
      %v4753 = vlaneseq
      %v4754 = vshrl.u32 %v4753, 7
      %v4755 = vsub.s32 5, %v4754
      %v4756 = vrot.slane %v4390, %v4755
      %v4757 = vlaneseq
      %v4758 = vshrl.u32 %v4757, 7
      %v4759 = vsub.s32 6, %v4758
      %v4760 = vrot.slane %v4390, %v4759
      %v4761 = vlaneseq
      %v4762 = vshrl.u32 %v4761, 7
      %v4763 = vsub.s32 7, %v4762
      %v4764 = vrot.slane %v4390, %v4763
      %v4765 = vlaneseq
      %v4766 = vshrl.u32 %v4765, 7
      %v4767 = vsub.s32 0, %v4766
      %v4768 = vrot.slane %v4391, %v4767
      %v4769 = vlaneseq
      %v4770 = vshrl.u32 %v4769, 7
      %v4771 = vsub.s32 1, %v4770
      %v4772 = vrot.slane %v4391, %v4771
      %v4773 = vlaneseq
      %v4774 = vshrl.u32 %v4773, 7
      %v4775 = vsub.s32 2, %v4774
      %v4776 = vrot.slane %v4391, %v4775
      %v4777 = vlaneseq
      %v4778 = vshrl.u32 %v4777, 7
      %v4779 = vsub.s32 3, %v4778
      %v4780 = vrot.slane %v4391, %v4779
      %v4781 = vlaneseq
      %v4782 = vshrl.u32 %v4781, 7
      %v4783 = vsub.s32 4, %v4782
      %v4784 = vrot.slane %v4391, %v4783
      %v4785 = vlaneseq
      %v4786 = vshrl.u32 %v4785, 7
      %v4787 = vsub.s32 5, %v4786
      %v4788 = vrot.slane %v4391, %v4787
      %v4789 = vlaneseq
      %v4790 = vshrl.u32 %v4789, 7
      %v4791 = vsub.s32 6, %v4790
      %v4792 = vrot.slane %v4391, %v4791
      %v4793 = vlaneseq
      %v4794 = vshrl.u32 %v4793, 7
      %v4795 = vsub.s32 7, %v4794
      %v4796 = vrot.slane %v4391, %v4795
      %v4797 = vlaneseq
      %v4798 = vshrl.u32 %v4797, 7
      %v4799 = vsub.s32 0, %v4798
      %v4800 = vrot.slane %v4392, %v4799
      %v4801 = vlaneseq
      %v4802 = vshrl.u32 %v4801, 7
      %v4803 = vsub.s32 1, %v4802
      %v4804 = vrot.slane %v4392, %v4803
      %v4805 = vlaneseq
      %v4806 = vshrl.u32 %v4805, 7
      %v4807 = vsub.s32 2, %v4806
      %v4808 = vrot.slane %v4392, %v4807
      %v4809 = vlaneseq
      %v4810 = vshrl.u32 %v4809, 7
      %v4811 = vsub.s32 3, %v4810
      %v4812 = vrot.slane %v4392, %v4811
      %v4813 = vlaneseq
      %v4814 = vshrl.u32 %v4813, 7
      %v4815 = vsub.s32 4, %v4814
      %v4816 = vrot.slane %v4392, %v4815
      %v4817 = vlaneseq
      %v4818 = vshrl.u32 %v4817, 7
      %v4819 = vsub.s32 5, %v4818
      %v4820 = vrot.slane %v4392, %v4819
      %v4821 = vlaneseq
      %v4822 = vshrl.u32 %v4821, 7
      %v4823 = vsub.s32 6, %v4822
      %v4824 = vrot.slane %v4392, %v4823
      %v4825 = vlaneseq
      %v4826 = vshrl.u32 %v4825, 7
      %v4827 = vsub.s32 7, %v4826
      %v4828 = vrot.slane %v4392, %v4827
      %v4829 = vlaneseq
      %v4830 = vshrl.u32 %v4829, 7
      %v4831 = vsub.s32 0, %v4830
      %v4832 = vrot.slane %v4393, %v4831
      %v4833 = vlaneseq
      %v4834 = vshrl.u32 %v4833, 7
      %v4835 = vsub.s32 1, %v4834
      %v4836 = vrot.slane %v4393, %v4835
      %v4837 = vlaneseq
      %v4838 = vshrl.u32 %v4837, 7
      %v4839 = vsub.s32 2, %v4838
      %v4840 = vrot.slane %v4393, %v4839
      %v4841 = vlaneseq
      %v4842 = vshrl.u32 %v4841, 7
      %v4843 = vsub.s32 3, %v4842
      %v4844 = vrot.slane %v4393, %v4843
      %v4845 = vlaneseq
      %v4846 = vshrl.u32 %v4845, 7
      %v4847 = vsub.s32 4, %v4846
      %v4848 = vrot.slane %v4393, %v4847
      %v4849 = vlaneseq
      %v4850 = vshrl.u32 %v4849, 7
      %v4851 = vsub.s32 5, %v4850
      %v4852 = vrot.slane %v4393, %v4851
      %v4853 = vlaneseq
      %v4854 = vshrl.u32 %v4853, 7
      %v4855 = vsub.s32 6, %v4854
      %v4856 = vrot.slane %v4393, %v4855
      %v4857 = vlaneseq
      %v4858 = vshrl.u32 %v4857, 7
      %v4859 = vsub.s32 7, %v4858
      %v4860 = vrot.slane %v4393, %v4859
      %v4861 = vlaneseq
      %v4862 = vshrl.u32 %v4861, 7
      %v4863 = vsub.s32 0, %v4862
      %v4864 = vrot.slane %v4394, %v4863
      %v4865 = vlaneseq
      %v4866 = vshrl.u32 %v4865, 7
      %v4867 = vsub.s32 1, %v4866
      %v4868 = vrot.slane %v4394, %v4867
      %v4869 = vlaneseq
      %v4870 = vshrl.u32 %v4869, 7
      %v4871 = vsub.s32 2, %v4870
      %v4872 = vrot.slane %v4394, %v4871
      %v4873 = vlaneseq
      %v4874 = vshrl.u32 %v4873, 7
      %v4875 = vsub.s32 3, %v4874
      %v4876 = vrot.slane %v4394, %v4875
      %v4877 = vlaneseq
      %v4878 = vshrl.u32 %v4877, 7
      %v4879 = vsub.s32 4, %v4878
      %v4880 = vrot.slane %v4394, %v4879
      %v4881 = vlaneseq
      %v4882 = vshrl.u32 %v4881, 7
      %v4883 = vsub.s32 5, %v4882
      %v4884 = vrot.slane %v4394, %v4883
      %v4885 = vlaneseq
      %v4886 = vshrl.u32 %v4885, 7
      %v4887 = vsub.s32 6, %v4886
      %v4888 = vrot.slane %v4394, %v4887
      %v4889 = vlaneseq
      %v4890 = vshrl.u32 %v4889, 7
      %v4891 = vsub.s32 7, %v4890
      %v4892 = vrot.slane %v4394, %v4891
      %v4893 = vlaneseq
      %v4894 = vshrl.u32 %v4893, 7
      %v4895 = vsub.s32 0, %v4894
      %v4896 = vrot.slane %v4395, %v4895
      %v4897 = vlaneseq
      %v4898 = vshrl.u32 %v4897, 7
      %v4899 = vsub.s32 1, %v4898
      %v4900 = vrot.slane %v4395, %v4899
      %v4901 = vlaneseq
      %v4902 = vshrl.u32 %v4901, 7
      %v4903 = vsub.s32 2, %v4902
      %v4904 = vrot.slane %v4395, %v4903
      %v4905 = vlaneseq
      %v4906 = vshrl.u32 %v4905, 7
      %v4907 = vsub.s32 3, %v4906
      %v4908 = vrot.slane %v4395, %v4907
      %v4909 = vlaneseq
      %v4910 = vshrl.u32 %v4909, 7
      %v4911 = vsub.s32 4, %v4910
      %v4912 = vrot.slane %v4395, %v4911
      %v4913 = vlaneseq
      %v4914 = vshrl.u32 %v4913, 7
      %v4915 = vsub.s32 5, %v4914
      %v4916 = vrot.slane %v4395, %v4915
      %v4917 = vlaneseq
      %v4918 = vshrl.u32 %v4917, 7
      %v4919 = vsub.s32 6, %v4918
      %v4920 = vrot.slane %v4395, %v4919
      %v4921 = vlaneseq
      %v4922 = vshrl.u32 %v4921, 7
      %v4923 = vsub.s32 7, %v4922
      %v4924 = vrot.slane %v4395, %v4923
      %v4925 = vlaneseq
      %v4926 = vshrl.u32 %v4925, 7
      %v4927 = vsub.s32 0, %v4926
      %v4928 = vrot.slane %v4396, %v4927
      %v4929 = vlaneseq
      %v4930 = vshrl.u32 %v4929, 7
      %v4931 = vsub.s32 1, %v4930
      %v4932 = vrot.slane %v4396, %v4931
      %v4933 = vlaneseq
      %v4934 = vshrl.u32 %v4933, 7
      %v4935 = vsub.s32 2, %v4934
      %v4936 = vrot.slane %v4396, %v4935
      %v4937 = vlaneseq
      %v4938 = vshrl.u32 %v4937, 7
      %v4939 = vsub.s32 3, %v4938
      %v4940 = vrot.slane %v4396, %v4939
      %v4941 = vlaneseq
      %v4942 = vshrl.u32 %v4941, 7
      %v4943 = vsub.s32 4, %v4942
      %v4944 = vrot.slane %v4396, %v4943
      %v4945 = vlaneseq
      %v4946 = vshrl.u32 %v4945, 7
      %v4947 = vsub.s32 5, %v4946
      %v4948 = vrot.slane %v4396, %v4947
      %v4949 = vlaneseq
      %v4950 = vshrl.u32 %v4949, 7
      %v4951 = vsub.s32 6, %v4950
      %v4952 = vrot.slane %v4396, %v4951
      %v4953 = vlaneseq
      %v4954 = vshrl.u32 %v4953, 7
      %v4955 = vsub.s32 7, %v4954
      %v4956 = vrot.slane %v4396, %v4955
      %v4957 = vlaneseq
      %v4958 = vshrl.u32 %v4957, 7
      %v4959 = vsub.s32 0, %v4958
      %v4960 = vrot.slane %v4397, %v4959
      %v4961 = vlaneseq
      %v4962 = vshrl.u32 %v4961, 7
      %v4963 = vsub.s32 1, %v4962
      %v4964 = vrot.slane %v4397, %v4963
      %v4965 = vlaneseq
      %v4966 = vshrl.u32 %v4965, 7
      %v4967 = vsub.s32 2, %v4966
      %v4968 = vrot.slane %v4397, %v4967
      %v4969 = vlaneseq
      %v4970 = vshrl.u32 %v4969, 7
      %v4971 = vsub.s32 3, %v4970
      %v4972 = vrot.slane %v4397, %v4971
      %v4973 = vlaneseq
      %v4974 = vshrl.u32 %v4973, 7
      %v4975 = vsub.s32 4, %v4974
      %v4976 = vrot.slane %v4397, %v4975
      %v4977 = vlaneseq
      %v4978 = vshrl.u32 %v4977, 7
      %v4979 = vsub.s32 5, %v4978
      %v4980 = vrot.slane %v4397, %v4979
      %v4981 = vlaneseq
      %v4982 = vshrl.u32 %v4981, 7
      %v4983 = vsub.s32 6, %v4982
      %v4984 = vrot.slane %v4397, %v4983
      %v4985 = vlaneseq
      %v4986 = vshrl.u32 %v4985, 7
      %v4987 = vsub.s32 7, %v4986
      %v4988 = vrot.slane %v4397, %v4987
      %v4989 = vlaneseq
      %v4990 = vshrl.u32 %v4989, 7
      %v4991 = vsub.s32 0, %v4990
      %v4992 = vrot.slane %v4398, %v4991
      %v4993 = vlaneseq
      %v4994 = vshrl.u32 %v4993, 7
      %v4995 = vsub.s32 1, %v4994
      %v4996 = vrot.slane %v4398, %v4995
      %v4997 = vlaneseq
      %v4998 = vshrl.u32 %v4997, 7
      %v4999 = vsub.s32 2, %v4998
      %v5000 = vrot.slane %v4398, %v4999
      %v5001 = vlaneseq
      %v5002 = vshrl.u32 %v5001, 7
      %v5003 = vsub.s32 3, %v5002
      %v5004 = vrot.slane %v4398, %v5003
      %v5005 = vlaneseq
      %v5006 = vshrl.u32 %v5005, 7
      %v5007 = vsub.s32 4, %v5006
      %v5008 = vrot.slane %v4398, %v5007
      %v5009 = vlaneseq
      %v5010 = vshrl.u32 %v5009, 7
      %v5011 = vsub.s32 5, %v5010
      %v5012 = vrot.slane %v4398, %v5011
      %v5013 = vlaneseq
      %v5014 = vshrl.u32 %v5013, 7
      %v5015 = vsub.s32 6, %v5014
      %v5016 = vrot.slane %v4398, %v5015
      %v5017 = vlaneseq
      %v5018 = vshrl.u32 %v5017, 7
      %v5019 = vsub.s32 7, %v5018
      %v5020 = vrot.slane %v4398, %v5019
      %v5021 = vlaneseq
      %v5022 = vshrl.u32 %v5021, 7
      %v5023 = vsub.s32 0, %v5022
      %v5024 = vrot.slane %v4399, %v5023
      %v5025 = vlaneseq
      %v5026 = vshrl.u32 %v5025, 7
      %v5027 = vsub.s32 1, %v5026
      %v5028 = vrot.slane %v4399, %v5027
      %v5029 = vlaneseq
      %v5030 = vshrl.u32 %v5029, 7
      %v5031 = vsub.s32 2, %v5030
      %v5032 = vrot.slane %v4399, %v5031
      %v5033 = vlaneseq
      %v5034 = vshrl.u32 %v5033, 7
      %v5035 = vsub.s32 3, %v5034
      %v5036 = vrot.slane %v4399, %v5035
      %v5037 = vlaneseq
      %v5038 = vshrl.u32 %v5037, 7
      %v5039 = vsub.s32 4, %v5038
      %v5040 = vrot.slane %v4399, %v5039
      %v5041 = vlaneseq
      %v5042 = vshrl.u32 %v5041, 7
      %v5043 = vsub.s32 5, %v5042
      %v5044 = vrot.slane %v4399, %v5043
      %v5045 = vlaneseq
      %v5046 = vshrl.u32 %v5045, 7
      %v5047 = vsub.s32 6, %v5046
      %v5048 = vrot.slane %v4399, %v5047
      %v5049 = vlaneseq
      %v5050 = vshrl.u32 %v5049, 7
      %v5051 = vsub.s32 7, %v5050
      %v5052 = vrot.slane %v4399, %v5051
      %v5053 = vlaneseq
      %v5054 = vshrl.u32 %v5053, 7
      %v5055 = vsub.s32 0, %v5054
      %v5056 = vrot.slane %v4400, %v5055
      %v5057 = vlaneseq
      %v5058 = vshrl.u32 %v5057, 7
      %v5059 = vsub.s32 1, %v5058
      %v5060 = vrot.slane %v4400, %v5059
      %v5061 = vlaneseq
      %v5062 = vshrl.u32 %v5061, 7
      %v5063 = vsub.s32 2, %v5062
      %v5064 = vrot.slane %v4400, %v5063
      %v5065 = vlaneseq
      %v5066 = vshrl.u32 %v5065, 7
      %v5067 = vsub.s32 3, %v5066
      %v5068 = vrot.slane %v4400, %v5067
      %v5069 = vlaneseq
      %v5070 = vshrl.u32 %v5069, 7
      %v5071 = vsub.s32 4, %v5070
      %v5072 = vrot.slane %v4400, %v5071
      %v5073 = vlaneseq
      %v5074 = vshrl.u32 %v5073, 7
      %v5075 = vsub.s32 5, %v5074
      %v5076 = vrot.slane %v4400, %v5075
      %v5077 = vlaneseq
      %v5078 = vshrl.u32 %v5077, 7
      %v5079 = vsub.s32 6, %v5078
      %v5080 = vrot.slane %v4400, %v5079
      %v5081 = vlaneseq
      %v5082 = vshrl.u32 %v5081, 7
      %v5083 = vsub.s32 7, %v5082
      %v5084 = vrot.slane %v4400, %v5083
      %v5085 = vlaneseq
      %v5086 = vshrl.u32 %v5085, 7
      %v5087 = vsub.s32 0, %v5086
      %v5088 = vrot.slane %v4401, %v5087
      %v5089 = vlaneseq
      %v5090 = vshrl.u32 %v5089, 7
      %v5091 = vsub.s32 1, %v5090
      %v5092 = vrot.slane %v4401, %v5091
      %v5093 = vlaneseq
      %v5094 = vshrl.u32 %v5093, 7
      %v5095 = vsub.s32 2, %v5094
      %v5096 = vrot.slane %v4401, %v5095
      %v5097 = vlaneseq
      %v5098 = vshrl.u32 %v5097, 7
      %v5099 = vsub.s32 3, %v5098
      %v5100 = vrot.slane %v4401, %v5099
      %v5101 = vlaneseq
      %v5102 = vshrl.u32 %v5101, 7
      %v5103 = vsub.s32 4, %v5102
      %v5104 = vrot.slane %v4401, %v5103
      %v5105 = vlaneseq
      %v5106 = vshrl.u32 %v5105, 7
      %v5107 = vsub.s32 5, %v5106
      %v5108 = vrot.slane %v4401, %v5107
      %v5109 = vlaneseq
      %v5110 = vshrl.u32 %v5109, 7
      %v5111 = vsub.s32 6, %v5110
      %v5112 = vrot.slane %v4401, %v5111
      %v5113 = vlaneseq
      %v5114 = vshrl.u32 %v5113, 7
      %v5115 = vsub.s32 7, %v5114
      %v5116 = vrot.slane %v4401, %v5115
      %v5117 = vlaneseq
      %v5118 = vshrl.u32 %v5117, 7
      %v5119 = vsub.s32 0, %v5118
      %v5120 = vrot.slane %v4402, %v5119
      %v5121 = vlaneseq
      %v5122 = vshrl.u32 %v5121, 7
      %v5123 = vsub.s32 1, %v5122
      %v5124 = vrot.slane %v4402, %v5123
      %v5125 = vlaneseq
      %v5126 = vshrl.u32 %v5125, 7
      %v5127 = vsub.s32 2, %v5126
      %v5128 = vrot.slane %v4402, %v5127
      %v5129 = vlaneseq
      %v5130 = vshrl.u32 %v5129, 7
      %v5131 = vsub.s32 3, %v5130
      %v5132 = vrot.slane %v4402, %v5131
      %v5133 = vlaneseq
      %v5134 = vshrl.u32 %v5133, 7
      %v5135 = vsub.s32 4, %v5134
      %v5136 = vrot.slane %v4402, %v5135
      %v5137 = vlaneseq
      %v5138 = vshrl.u32 %v5137, 7
      %v5139 = vsub.s32 5, %v5138
      %v5140 = vrot.slane %v4402, %v5139
      %v5141 = vlaneseq
      %v5142 = vshrl.u32 %v5141, 7
      %v5143 = vsub.s32 6, %v5142
      %v5144 = vrot.slane %v4402, %v5143
      %v5145 = vlaneseq
      %v5146 = vshrl.u32 %v5145, 7
      %v5147 = vsub.s32 7, %v5146
      %v5148 = vrot.slane %v4402, %v5147
      %v5149 = vlaneseq
      %v5150 = vshrl.u32 %v5149, 7
      %v5151 = vsub.s32 0, %v5150
      %v5152 = vrot.slane %v4403, %v5151
      %v5153 = vlaneseq
      %v5154 = vshrl.u32 %v5153, 7
      %v5155 = vsub.s32 1, %v5154
      %v5156 = vrot.slane %v4403, %v5155
      %v5157 = vlaneseq
      %v5158 = vshrl.u32 %v5157, 7
      %v5159 = vsub.s32 2, %v5158
      %v5160 = vrot.slane %v4403, %v5159
      %v5161 = vlaneseq
      %v5162 = vshrl.u32 %v5161, 7
      %v5163 = vsub.s32 3, %v5162
      %v5164 = vrot.slane %v4403, %v5163
      %v5165 = vlaneseq
      %v5166 = vshrl.u32 %v5165, 7
      %v5167 = vsub.s32 4, %v5166
      %v5168 = vrot.slane %v4403, %v5167
      %v5169 = vlaneseq
      %v5170 = vshrl.u32 %v5169, 7
      %v5171 = vsub.s32 5, %v5170
      %v5172 = vrot.slane %v4403, %v5171
      %v5173 = vlaneseq
      %v5174 = vshrl.u32 %v5173, 7
      %v5175 = vsub.s32 6, %v5174
      %v5176 = vrot.slane %v4403, %v5175
      %v5177 = vlaneseq
      %v5178 = vshrl.u32 %v5177, 7
      %v5179 = vsub.s32 7, %v5178
      %v5180 = vrot.slane %v4403, %v5179
      %v5181 = vlaneseq
      %v5182 = vshrl.u32 %v5181, 7
      %v5183 = vsub.s32 0, %v5182
      %v5184 = vrot.slane %v4404, %v5183
      %v5185 = vlaneseq
      %v5186 = vshrl.u32 %v5185, 7
      %v5187 = vsub.s32 1, %v5186
      %v5188 = vrot.slane %v4404, %v5187
      %v5189 = vlaneseq
      %v5190 = vshrl.u32 %v5189, 7
      %v5191 = vsub.s32 2, %v5190
      %v5192 = vrot.slane %v4404, %v5191
      %v5193 = vlaneseq
      %v5194 = vshrl.u32 %v5193, 7
      %v5195 = vsub.s32 3, %v5194
      %v5196 = vrot.slane %v4404, %v5195
      %v5197 = vlaneseq
      %v5198 = vshrl.u32 %v5197, 7
      %v5199 = vsub.s32 4, %v5198
      %v5200 = vrot.slane %v4404, %v5199
      %v5201 = vlaneseq
      %v5202 = vshrl.u32 %v5201, 7
      %v5203 = vsub.s32 5, %v5202
      %v5204 = vrot.slane %v4404, %v5203
      %v5205 = vlaneseq
      %v5206 = vshrl.u32 %v5205, 7
      %v5207 = vsub.s32 6, %v5206
      %v5208 = vrot.slane %v4404, %v5207
      %v5209 = vlaneseq
      %v5210 = vshrl.u32 %v5209, 7
      %v5211 = vsub.s32 7, %v5210
      %v5212 = vrot.slane %v4404, %v5211
      %v5213 = vlaneseq
      %v5214 = vshrl.u32 %v5213, 7
      %v5215 = vsub.s32 0, %v5214
      %v5216 = vrot.slane %v4405, %v5215
      %v5217 = vlaneseq
      %v5218 = vshrl.u32 %v5217, 7
      %v5219 = vsub.s32 1, %v5218
      %v5220 = vrot.slane %v4405, %v5219
      %v5221 = vlaneseq
      %v5222 = vshrl.u32 %v5221, 7
      %v5223 = vsub.s32 2, %v5222
      %v5224 = vrot.slane %v4405, %v5223
      %v5225 = vlaneseq
      %v5226 = vshrl.u32 %v5225, 7
      %v5227 = vsub.s32 3, %v5226
      %v5228 = vrot.slane %v4405, %v5227
      %v5229 = vlaneseq
      %v5230 = vshrl.u32 %v5229, 7
      %v5231 = vsub.s32 4, %v5230
      %v5232 = vrot.slane %v4405, %v5231
      %v5233 = vlaneseq
      %v5234 = vshrl.u32 %v5233, 7
      %v5235 = vsub.s32 5, %v5234
      %v5236 = vrot.slane %v4405, %v5235
      %v5237 = vlaneseq
      %v5238 = vshrl.u32 %v5237, 7
      %v5239 = vsub.s32 6, %v5238
      %v5240 = vrot.slane %v4405, %v5239
      %v5241 = vlaneseq
      %v5242 = vshrl.u32 %v5241, 7
      %v5243 = vsub.s32 7, %v5242
      %v5244 = vrot.slane %v4405, %v5243
      %v5245 = vlaneseq
      %v5246 = vshrl.u32 %v5245, 7
      %v5247 = vsub.s32 0, %v5246
      %v5248 = vrot.slane %v4406, %v5247
      %v5249 = vlaneseq
      %v5250 = vshrl.u32 %v5249, 7
      %v5251 = vsub.s32 1, %v5250
      %v5252 = vrot.slane %v4406, %v5251
      %v5253 = vlaneseq
      %v5254 = vshrl.u32 %v5253, 7
      %v5255 = vsub.s32 2, %v5254
      %v5256 = vrot.slane %v4406, %v5255
      %v5257 = vlaneseq
      %v5258 = vshrl.u32 %v5257, 7
      %v5259 = vsub.s32 3, %v5258
      %v5260 = vrot.slane %v4406, %v5259
      %v5261 = vlaneseq
      %v5262 = vshrl.u32 %v5261, 7
      %v5263 = vsub.s32 4, %v5262
      %v5264 = vrot.slane %v4406, %v5263
      %v5265 = vlaneseq
      %v5266 = vshrl.u32 %v5265, 7
      %v5267 = vsub.s32 5, %v5266
      %v5268 = vrot.slane %v4406, %v5267
      %v5269 = vlaneseq
      %v5270 = vshrl.u32 %v5269, 7
      %v5271 = vsub.s32 6, %v5270
      %v5272 = vrot.slane %v4406, %v5271
      %v5273 = vlaneseq
      %v5274 = vshrl.u32 %v5273, 7
      %v5275 = vsub.s32 7, %v5274
      %v5276 = vrot.slane %v4406, %v5275
      %v5277 = vlaneseq
      %v5278 = vshrl.u32 %v5277, 7
      %v5279 = vsub.s32 0, %v5278
      %v5280 = vrot.slane %v4407, %v5279
      %v5281 = vlaneseq
      %v5282 = vshrl.u32 %v5281, 7
      %v5283 = vsub.s32 1, %v5282
      %v5284 = vrot.slane %v4407, %v5283
      %v5285 = vlaneseq
      %v5286 = vshrl.u32 %v5285, 7
      %v5287 = vsub.s32 2, %v5286
      %v5288 = vrot.slane %v4407, %v5287
      %v5289 = vlaneseq
      %v5290 = vshrl.u32 %v5289, 7
      %v5291 = vsub.s32 3, %v5290
      %v5292 = vrot.slane %v4407, %v5291
      %v5293 = vlaneseq
      %v5294 = vshrl.u32 %v5293, 7
      %v5295 = vsub.s32 4, %v5294
      %v5296 = vrot.slane %v4407, %v5295
      %v5297 = vlaneseq
      %v5298 = vshrl.u32 %v5297, 7
      %v5299 = vsub.s32 5, %v5298
      %v5300 = vrot.slane %v4407, %v5299
      %v5301 = vlaneseq
      %v5302 = vshrl.u32 %v5301, 7
      %v5303 = vsub.s32 6, %v5302
      %v5304 = vrot.slane %v4407, %v5303
      %v5305 = vlaneseq
      %v5306 = vshrl.u32 %v5305, 7
      %v5307 = vsub.s32 7, %v5306
      %v5308 = vrot.slane %v4407, %v5307
      %v5309 = vlaneseq
      %v5310 = vshrl.u32 %v5309, 7
      %v5311 = vsub.s32 0, %v5310
      %v5312 = vrot.slane %v4408, %v5311
      %v5313 = vlaneseq
      %v5314 = vshrl.u32 %v5313, 7
      %v5315 = vsub.s32 1, %v5314
      %v5316 = vrot.slane %v4408, %v5315
      %v5317 = vlaneseq
      %v5318 = vshrl.u32 %v5317, 7
      %v5319 = vsub.s32 2, %v5318
      %v5320 = vrot.slane %v4408, %v5319
      %v5321 = vlaneseq
      %v5322 = vshrl.u32 %v5321, 7
      %v5323 = vsub.s32 3, %v5322
      %v5324 = vrot.slane %v4408, %v5323
      %v5325 = vlaneseq
      %v5326 = vshrl.u32 %v5325, 7
      %v5327 = vsub.s32 4, %v5326
      %v5328 = vrot.slane %v4408, %v5327
      %v5329 = vlaneseq
      %v5330 = vshrl.u32 %v5329, 7
      %v5331 = vsub.s32 5, %v5330
      %v5332 = vrot.slane %v4408, %v5331
      %v5333 = vlaneseq
      %v5334 = vshrl.u32 %v5333, 7
      %v5335 = vsub.s32 6, %v5334
      %v5336 = vrot.slane %v4408, %v5335
      %v5337 = vlaneseq
      %v5338 = vshrl.u32 %v5337, 7
      %v5339 = vsub.s32 7, %v5338
      %v5340 = vrot.slane %v4408, %v5339
      %v5341 = vlaneseq
      %v5342 = vshrl.u32 %v5341, 7
      %v5343 = vsub.s32 0, %v5342
      %v5344 = vrot.slane %v4409, %v5343
      %v5345 = vlaneseq
      %v5346 = vshrl.u32 %v5345, 7
      %v5347 = vsub.s32 1, %v5346
      %v5348 = vrot.slane %v4409, %v5347
      %v5349 = vlaneseq
      %v5350 = vshrl.u32 %v5349, 7
      %v5351 = vsub.s32 2, %v5350
      %v5352 = vrot.slane %v4409, %v5351
      %v5353 = vlaneseq
      %v5354 = vshrl.u32 %v5353, 7
      %v5355 = vsub.s32 3, %v5354
      %v5356 = vrot.slane %v4409, %v5355
      %v5357 = vlaneseq
      %v5358 = vshrl.u32 %v5357, 7
      %v5359 = vsub.s32 4, %v5358
      %v5360 = vrot.slane %v4409, %v5359
      %v5361 = vlaneseq
      %v5362 = vshrl.u32 %v5361, 7
      %v5363 = vsub.s32 5, %v5362
      %v5364 = vrot.slane %v4409, %v5363
      %v5365 = vlaneseq
      %v5366 = vshrl.u32 %v5365, 7
      %v5367 = vsub.s32 6, %v5366
      %v5368 = vrot.slane %v4409, %v5367
      %v5369 = vlaneseq
      %v5370 = vshrl.u32 %v5369, 7
      %v5371 = vsub.s32 7, %v5370
      %v5372 = vrot.slane %v4409, %v5371
      %v5373 = vlaneseq
      %v5374 = vshrl.u32 %v5373, 7
      %v5375 = vsub.s32 0, %v5374
      %v5376 = vrot.slane %v4410, %v5375
      %v5377 = vlaneseq
      %v5378 = vshrl.u32 %v5377, 7
      %v5379 = vsub.s32 1, %v5378
      %v5380 = vrot.slane %v4410, %v5379
      %v5381 = vlaneseq
      %v5382 = vshrl.u32 %v5381, 7
      %v5383 = vsub.s32 2, %v5382
      %v5384 = vrot.slane %v4410, %v5383
      %v5385 = vlaneseq
      %v5386 = vshrl.u32 %v5385, 7
      %v5387 = vsub.s32 3, %v5386
      %v5388 = vrot.slane %v4410, %v5387
      %v5389 = vlaneseq
      %v5390 = vshrl.u32 %v5389, 7
      %v5391 = vsub.s32 4, %v5390
      %v5392 = vrot.slane %v4410, %v5391
      %v5393 = vlaneseq
      %v5394 = vshrl.u32 %v5393, 7
      %v5395 = vsub.s32 5, %v5394
      %v5396 = vrot.slane %v4410, %v5395
      %v5397 = vlaneseq
      %v5398 = vshrl.u32 %v5397, 7
      %v5399 = vsub.s32 6, %v5398
      %v5400 = vrot.slane %v4410, %v5399
      %v5401 = vlaneseq
      %v5402 = vshrl.u32 %v5401, 7
      %v5403 = vsub.s32 7, %v5402
      %v5404 = vrot.slane %v4410, %v5403
      %v5405 = vlaneseq
      %v5406 = vshrl.u32 %v5405, 7
      %v5407 = vsub.s32 0, %v5406
      %v5408 = vrot.slane %v4411, %v5407
      %v5409 = vlaneseq
      %v5410 = vshrl.u32 %v5409, 7
      %v5411 = vsub.s32 1, %v5410
      %v5412 = vrot.slane %v4411, %v5411
      %v5413 = vlaneseq
      %v5414 = vshrl.u32 %v5413, 7
      %v5415 = vsub.s32 2, %v5414
      %v5416 = vrot.slane %v4411, %v5415
      %v5417 = vlaneseq
      %v5418 = vshrl.u32 %v5417, 7
      %v5419 = vsub.s32 3, %v5418
      %v5420 = vrot.slane %v4411, %v5419
      %v5421 = vlaneseq
      %v5422 = vshrl.u32 %v5421, 7
      %v5423 = vsub.s32 4, %v5422
      %v5424 = vrot.slane %v4411, %v5423
      %v5425 = vlaneseq
      %v5426 = vshrl.u32 %v5425, 7
      %v5427 = vsub.s32 5, %v5426
      %v5428 = vrot.slane %v4411, %v5427
      %v5429 = vlaneseq
      %v5430 = vshrl.u32 %v5429, 7
      %v5431 = vsub.s32 6, %v5430
      %v5432 = vrot.slane %v4411, %v5431
      %v5433 = vlaneseq
      %v5434 = vshrl.u32 %v5433, 7
      %v5435 = vsub.s32 7, %v5434
      %v5436 = vrot.slane %v4411, %v5435
      %v5437 = vlaneseq
      %v5438 = vshrl.u32 %v5437, 7
      %v5439 = vsub.s32 0, %v5438
      %v5440 = vrot.slane %v4412, %v5439
      %v5441 = vlaneseq
      %v5442 = vshrl.u32 %v5441, 7
      %v5443 = vsub.s32 1, %v5442
      %v5444 = vrot.slane %v4412, %v5443
      %v5445 = vlaneseq
      %v5446 = vshrl.u32 %v5445, 7
      %v5447 = vsub.s32 2, %v5446
      %v5448 = vrot.slane %v4412, %v5447
      %v5449 = vlaneseq
      %v5450 = vshrl.u32 %v5449, 7
      %v5451 = vsub.s32 3, %v5450
      %v5452 = vrot.slane %v4412, %v5451
      %v5453 = vlaneseq
      %v5454 = vshrl.u32 %v5453, 7
      %v5455 = vsub.s32 4, %v5454
      %v5456 = vrot.slane %v4412, %v5455
      %v5457 = vlaneseq
      %v5458 = vshrl.u32 %v5457, 7
      %v5459 = vsub.s32 5, %v5458
      %v5460 = vrot.slane %v4412, %v5459
      %v5461 = vlaneseq
      %v5462 = vshrl.u32 %v5461, 7
      %v5463 = vsub.s32 6, %v5462
      %v5464 = vrot.slane %v4412, %v5463
      %v5465 = vlaneseq
      %v5466 = vshrl.u32 %v5465, 7
      %v5467 = vsub.s32 7, %v5466
      %v5468 = vrot.slane %v4412, %v5467
      %v5469 = vcombine.low %v4448, %v4452
      %v5470 = vcombine.low %v4456, %v4460
      %v5471 = vcombine.low %v4464, %v4468
      %v5472 = vcombine.low %v4472, %v4476
      %v5474 = vunpack.c.l.s4 1966171168
      %v5475 = vunpack.c.0.s8 %v5474
      %v5476 = vlaneseq
      %v5477 = vshrl.u32 %v5476, 7
      %v5478 = vsub.s32 %v5475, %v5477
      %v5479 = vrot.slane %v5469, %v5478
      %v5481 = vunpack.c.l.s4 1966171168
      %v5482 = vunpack.c.0.s8 %v5481
      %v5483 = vlaneseq
      %v5484 = vshrl.u32 %v5483, 7
      %v5485 = vsub.s32 %v5482, %v5484
      %v5486 = vrot.slane %v5470, %v5485
      %v5488 = vunpack.c.l.s4 1966171168
      %v5489 = vunpack.c.0.s8 %v5488
      %v5490 = vlaneseq
      %v5491 = vshrl.u32 %v5490, 7
      %v5492 = vsub.s32 %v5489, %v5491
      %v5493 = vrot.slane %v5471, %v5492
      %v5495 = vunpack.c.l.s4 1966171168
      %v5496 = vunpack.c.0.s8 %v5495
      %v5497 = vlaneseq
      %v5498 = vshrl.u32 %v5497, 7
      %v5499 = vsub.s32 %v5496, %v5498
      %v5500 = vrot.slane %v5472, %v5499
      %v5501 = vcombine.low %v5479, %v5486
      %v5502 = vcombine.low %v5493, %v5500
      %v5504 = vunpack.c.l.s4 1966171168
      %v5505 = vunpack.c.0.s8 %v5504
      %v5506 = vlaneseq
      %v5507 = vshrl.u32 %v5506, 7
      %v5508 = vsub.s32 %v5505, %v5507
      %v5509 = vrot.slane %v5501, %v5508
      %v5511 = vunpack.c.l.s4 1966171168
      %v5512 = vunpack.c.0.s8 %v5511
      %v5513 = vlaneseq
      %v5514 = vshrl.u32 %v5513, 7
      %v5515 = vsub.s32 %v5512, %v5514
      %v5516 = vrot.slane %v5502, %v5515
      %v5517 = vcombine.low %v5509, %v5516
      %v5518 = vcombine.low %v4480, %v4484
      %v5519 = vcombine.low %v4488, %v4492
      %v5520 = vcombine.low %v4496, %v4500
      %v5521 = vcombine.low %v4504, %v4508
      %v5523 = vunpack.c.l.s4 1966171168
      %v5524 = vunpack.c.0.s8 %v5523
      %v5525 = vlaneseq
      %v5526 = vshrl.u32 %v5525, 7
      %v5527 = vsub.s32 %v5524, %v5526
      %v5528 = vrot.slane %v5518, %v5527
      %v5530 = vunpack.c.l.s4 1966171168
      %v5531 = vunpack.c.0.s8 %v5530
      %v5532 = vlaneseq
      %v5533 = vshrl.u32 %v5532, 7
      %v5534 = vsub.s32 %v5531, %v5533
      %v5535 = vrot.slane %v5519, %v5534
      %v5537 = vunpack.c.l.s4 1966171168
      %v5538 = vunpack.c.0.s8 %v5537
      %v5539 = vlaneseq
      %v5540 = vshrl.u32 %v5539, 7
      %v5541 = vsub.s32 %v5538, %v5540
      %v5542 = vrot.slane %v5520, %v5541
      %v5544 = vunpack.c.l.s4 1966171168
      %v5545 = vunpack.c.0.s8 %v5544
      %v5546 = vlaneseq
      %v5547 = vshrl.u32 %v5546, 7
      %v5548 = vsub.s32 %v5545, %v5547
      %v5549 = vrot.slane %v5521, %v5548
      %v5550 = vcombine.low %v5528, %v5535
      %v5551 = vcombine.low %v5542, %v5549
      %v5553 = vunpack.c.l.s4 1966171168
      %v5554 = vunpack.c.0.s8 %v5553
      %v5555 = vlaneseq
      %v5556 = vshrl.u32 %v5555, 7
      %v5557 = vsub.s32 %v5554, %v5556
      %v5558 = vrot.slane %v5550, %v5557
      %v5560 = vunpack.c.l.s4 1966171168
      %v5561 = vunpack.c.0.s8 %v5560
      %v5562 = vlaneseq
      %v5563 = vshrl.u32 %v5562, 7
      %v5564 = vsub.s32 %v5561, %v5563
      %v5565 = vrot.slane %v5551, %v5564
      %v5566 = vcombine.low %v5558, %v5565
      %v5567 = vcombine.low %v4512, %v4516
      %v5568 = vcombine.low %v4520, %v4524
      %v5569 = vcombine.low %v4528, %v4532
      %v5570 = vcombine.low %v4536, %v4540
      %v5572 = vunpack.c.l.s4 1966171168
      %v5573 = vunpack.c.0.s8 %v5572
      %v5574 = vlaneseq
      %v5575 = vshrl.u32 %v5574, 7
      %v5576 = vsub.s32 %v5573, %v5575
      %v5577 = vrot.slane %v5567, %v5576
      %v5579 = vunpack.c.l.s4 1966171168
      %v5580 = vunpack.c.0.s8 %v5579
      %v5581 = vlaneseq
      %v5582 = vshrl.u32 %v5581, 7
      %v5583 = vsub.s32 %v5580, %v5582
      %v5584 = vrot.slane %v5568, %v5583
      %v5586 = vunpack.c.l.s4 1966171168
      %v5587 = vunpack.c.0.s8 %v5586
      %v5588 = vlaneseq
      %v5589 = vshrl.u32 %v5588, 7
      %v5590 = vsub.s32 %v5587, %v5589
      %v5591 = vrot.slane %v5569, %v5590
      %v5593 = vunpack.c.l.s4 1966171168
      %v5594 = vunpack.c.0.s8 %v5593
      %v5595 = vlaneseq
      %v5596 = vshrl.u32 %v5595, 7
      %v5597 = vsub.s32 %v5594, %v5596
      %v5598 = vrot.slane %v5570, %v5597
      %v5599 = vcombine.low %v5577, %v5584
      %v5600 = vcombine.low %v5591, %v5598
      %v5602 = vunpack.c.l.s4 1966171168
      %v5603 = vunpack.c.0.s8 %v5602
      %v5604 = vlaneseq
      %v5605 = vshrl.u32 %v5604, 7
      %v5606 = vsub.s32 %v5603, %v5605
      %v5607 = vrot.slane %v5599, %v5606
      %v5609 = vunpack.c.l.s4 1966171168
      %v5610 = vunpack.c.0.s8 %v5609
      %v5611 = vlaneseq
      %v5612 = vshrl.u32 %v5611, 7
      %v5613 = vsub.s32 %v5610, %v5612
      %v5614 = vrot.slane %v5600, %v5613
      %v5615 = vcombine.low %v5607, %v5614
      %v5616 = vcombine.low %v4544, %v4548
      %v5617 = vcombine.low %v4552, %v4556
      %v5618 = vcombine.low %v4560, %v4564
      %v5619 = vcombine.low %v4568, %v4572
      %v5621 = vunpack.c.l.s4 1966171168
      %v5622 = vunpack.c.0.s8 %v5621
      %v5623 = vlaneseq
      %v5624 = vshrl.u32 %v5623, 7
      %v5625 = vsub.s32 %v5622, %v5624
      %v5626 = vrot.slane %v5616, %v5625
      %v5628 = vunpack.c.l.s4 1966171168
      %v5629 = vunpack.c.0.s8 %v5628
      %v5630 = vlaneseq
      %v5631 = vshrl.u32 %v5630, 7
      %v5632 = vsub.s32 %v5629, %v5631
      %v5633 = vrot.slane %v5617, %v5632
      %v5635 = vunpack.c.l.s4 1966171168
      %v5636 = vunpack.c.0.s8 %v5635
      %v5637 = vlaneseq
      %v5638 = vshrl.u32 %v5637, 7
      %v5639 = vsub.s32 %v5636, %v5638
      %v5640 = vrot.slane %v5618, %v5639
      %v5642 = vunpack.c.l.s4 1966171168
      %v5643 = vunpack.c.0.s8 %v5642
      %v5644 = vlaneseq
      %v5645 = vshrl.u32 %v5644, 7
      %v5646 = vsub.s32 %v5643, %v5645
      %v5647 = vrot.slane %v5619, %v5646
      %v5648 = vcombine.low %v5626, %v5633
      %v5649 = vcombine.low %v5640, %v5647
      %v5651 = vunpack.c.l.s4 1966171168
      %v5652 = vunpack.c.0.s8 %v5651
      %v5653 = vlaneseq
      %v5654 = vshrl.u32 %v5653, 7
      %v5655 = vsub.s32 %v5652, %v5654
      %v5656 = vrot.slane %v5648, %v5655
      %v5658 = vunpack.c.l.s4 1966171168
      %v5659 = vunpack.c.0.s8 %v5658
      %v5660 = vlaneseq
      %v5661 = vshrl.u32 %v5660, 7
      %v5662 = vsub.s32 %v5659, %v5661
      %v5663 = vrot.slane %v5649, %v5662
      %v5664 = vcombine.low %v5656, %v5663
      %v5665 = vcombine.low %v4576, %v4580
      %v5666 = vcombine.low %v4584, %v4588
      %v5667 = vcombine.low %v4592, %v4596
      %v5668 = vcombine.low %v4600, %v4604
      %v5670 = vunpack.c.l.s4 1966171168
      %v5671 = vunpack.c.0.s8 %v5670
      %v5672 = vlaneseq
      %v5673 = vshrl.u32 %v5672, 7
      %v5674 = vsub.s32 %v5671, %v5673
      %v5675 = vrot.slane %v5665, %v5674
      %v5677 = vunpack.c.l.s4 1966171168
      %v5678 = vunpack.c.0.s8 %v5677
      %v5679 = vlaneseq
      %v5680 = vshrl.u32 %v5679, 7
      %v5681 = vsub.s32 %v5678, %v5680
      %v5682 = vrot.slane %v5666, %v5681
      %v5684 = vunpack.c.l.s4 1966171168
      %v5685 = vunpack.c.0.s8 %v5684
      %v5686 = vlaneseq
      %v5687 = vshrl.u32 %v5686, 7
      %v5688 = vsub.s32 %v5685, %v5687
      %v5689 = vrot.slane %v5667, %v5688
      %v5691 = vunpack.c.l.s4 1966171168
      %v5692 = vunpack.c.0.s8 %v5691
      %v5693 = vlaneseq
      %v5694 = vshrl.u32 %v5693, 7
      %v5695 = vsub.s32 %v5692, %v5694
      %v5696 = vrot.slane %v5668, %v5695
      %v5697 = vcombine.low %v5675, %v5682
      %v5698 = vcombine.low %v5689, %v5696
      %v5700 = vunpack.c.l.s4 1966171168
      %v5701 = vunpack.c.0.s8 %v5700
      %v5702 = vlaneseq
      %v5703 = vshrl.u32 %v5702, 7
      %v5704 = vsub.s32 %v5701, %v5703
      %v5705 = vrot.slane %v5697, %v5704
      %v5707 = vunpack.c.l.s4 1966171168
      %v5708 = vunpack.c.0.s8 %v5707
      %v5709 = vlaneseq
      %v5710 = vshrl.u32 %v5709, 7
      %v5711 = vsub.s32 %v5708, %v5710
      %v5712 = vrot.slane %v5698, %v5711
      %v5713 = vcombine.low %v5705, %v5712
      %v5714 = vcombine.low %v4608, %v4612
      %v5715 = vcombine.low %v4616, %v4620
      %v5716 = vcombine.low %v4624, %v4628
      %v5717 = vcombine.low %v4632, %v4636
      %v5719 = vunpack.c.l.s4 1966171168
      %v5720 = vunpack.c.0.s8 %v5719
      %v5721 = vlaneseq
      %v5722 = vshrl.u32 %v5721, 7
      %v5723 = vsub.s32 %v5720, %v5722
      %v5724 = vrot.slane %v5714, %v5723
      %v5726 = vunpack.c.l.s4 1966171168
      %v5727 = vunpack.c.0.s8 %v5726
      %v5728 = vlaneseq
      %v5729 = vshrl.u32 %v5728, 7
      %v5730 = vsub.s32 %v5727, %v5729
      %v5731 = vrot.slane %v5715, %v5730
      %v5733 = vunpack.c.l.s4 1966171168
      %v5734 = vunpack.c.0.s8 %v5733
      %v5735 = vlaneseq
      %v5736 = vshrl.u32 %v5735, 7
      %v5737 = vsub.s32 %v5734, %v5736
      %v5738 = vrot.slane %v5716, %v5737
      %v5740 = vunpack.c.l.s4 1966171168
      %v5741 = vunpack.c.0.s8 %v5740
      %v5742 = vlaneseq
      %v5743 = vshrl.u32 %v5742, 7
      %v5744 = vsub.s32 %v5741, %v5743
      %v5745 = vrot.slane %v5717, %v5744
      %v5746 = vcombine.low %v5724, %v5731
      %v5747 = vcombine.low %v5738, %v5745
      %v5749 = vunpack.c.l.s4 1966171168
      %v5750 = vunpack.c.0.s8 %v5749
      %v5751 = vlaneseq
      %v5752 = vshrl.u32 %v5751, 7
      %v5753 = vsub.s32 %v5750, %v5752
      %v5754 = vrot.slane %v5746, %v5753
      %v5756 = vunpack.c.l.s4 1966171168
      %v5757 = vunpack.c.0.s8 %v5756
      %v5758 = vlaneseq
      %v5759 = vshrl.u32 %v5758, 7
      %v5760 = vsub.s32 %v5757, %v5759
      %v5761 = vrot.slane %v5747, %v5760
      %v5762 = vcombine.low %v5754, %v5761
      %v5763 = vcombine.low %v4640, %v4644
      %v5764 = vcombine.low %v4648, %v4652
      %v5765 = vcombine.low %v4656, %v4660
      %v5766 = vcombine.low %v4664, %v4668
      %v5768 = vunpack.c.l.s4 1966171168
      %v5769 = vunpack.c.0.s8 %v5768
      %v5770 = vlaneseq
      %v5771 = vshrl.u32 %v5770, 7
      %v5772 = vsub.s32 %v5769, %v5771
      %v5773 = vrot.slane %v5763, %v5772
      %v5775 = vunpack.c.l.s4 1966171168
      %v5776 = vunpack.c.0.s8 %v5775
      %v5777 = vlaneseq
      %v5778 = vshrl.u32 %v5777, 7
      %v5779 = vsub.s32 %v5776, %v5778
      %v5780 = vrot.slane %v5764, %v5779
      %v5782 = vunpack.c.l.s4 1966171168
      %v5783 = vunpack.c.0.s8 %v5782
      %v5784 = vlaneseq
      %v5785 = vshrl.u32 %v5784, 7
      %v5786 = vsub.s32 %v5783, %v5785
      %v5787 = vrot.slane %v5765, %v5786
      %v5789 = vunpack.c.l.s4 1966171168
      %v5790 = vunpack.c.0.s8 %v5789
      %v5791 = vlaneseq
      %v5792 = vshrl.u32 %v5791, 7
      %v5793 = vsub.s32 %v5790, %v5792
      %v5794 = vrot.slane %v5766, %v5793
      %v5795 = vcombine.low %v5773, %v5780
      %v5796 = vcombine.low %v5787, %v5794
      %v5798 = vunpack.c.l.s4 1966171168
      %v5799 = vunpack.c.0.s8 %v5798
      %v5800 = vlaneseq
      %v5801 = vshrl.u32 %v5800, 7
      %v5802 = vsub.s32 %v5799, %v5801
      %v5803 = vrot.slane %v5795, %v5802
      %v5805 = vunpack.c.l.s4 1966171168
      %v5806 = vunpack.c.0.s8 %v5805
      %v5807 = vlaneseq
      %v5808 = vshrl.u32 %v5807, 7
      %v5809 = vsub.s32 %v5806, %v5808
      %v5810 = vrot.slane %v5796, %v5809
      %v5811 = vcombine.low %v5803, %v5810
      %v5812 = vcombine.low %v4672, %v4676
      %v5813 = vcombine.low %v4680, %v4684
      %v5814 = vcombine.low %v4688, %v4692
      %v5815 = vcombine.low %v4696, %v4700
      %v5817 = vunpack.c.l.s4 1966171168
      %v5818 = vunpack.c.0.s8 %v5817
      %v5819 = vlaneseq
      %v5820 = vshrl.u32 %v5819, 7
      %v5821 = vsub.s32 %v5818, %v5820
      %v5822 = vrot.slane %v5812, %v5821
      %v5824 = vunpack.c.l.s4 1966171168
      %v5825 = vunpack.c.0.s8 %v5824
      %v5826 = vlaneseq
      %v5827 = vshrl.u32 %v5826, 7
      %v5828 = vsub.s32 %v5825, %v5827
      %v5829 = vrot.slane %v5813, %v5828
      %v5831 = vunpack.c.l.s4 1966171168
      %v5832 = vunpack.c.0.s8 %v5831
      %v5833 = vlaneseq
      %v5834 = vshrl.u32 %v5833, 7
      %v5835 = vsub.s32 %v5832, %v5834
      %v5836 = vrot.slane %v5814, %v5835
      %v5838 = vunpack.c.l.s4 1966171168
      %v5839 = vunpack.c.0.s8 %v5838
      %v5840 = vlaneseq
      %v5841 = vshrl.u32 %v5840, 7
      %v5842 = vsub.s32 %v5839, %v5841
      %v5843 = vrot.slane %v5815, %v5842
      %v5844 = vcombine.low %v5822, %v5829
      %v5845 = vcombine.low %v5836, %v5843
      %v5847 = vunpack.c.l.s4 1966171168
      %v5848 = vunpack.c.0.s8 %v5847
      %v5849 = vlaneseq
      %v5850 = vshrl.u32 %v5849, 7
      %v5851 = vsub.s32 %v5848, %v5850
      %v5852 = vrot.slane %v5844, %v5851
      %v5854 = vunpack.c.l.s4 1966171168
      %v5855 = vunpack.c.0.s8 %v5854
      %v5856 = vlaneseq
      %v5857 = vshrl.u32 %v5856, 7
      %v5858 = vsub.s32 %v5855, %v5857
      %v5859 = vrot.slane %v5845, %v5858
      %v5860 = vcombine.low %v5852, %v5859
      %v5861 = vcombine.low %v4704, %v4708
      %v5862 = vcombine.low %v4712, %v4716
      %v5863 = vcombine.low %v4720, %v4724
      %v5864 = vcombine.low %v4728, %v4732
      %v5866 = vunpack.c.l.s4 1966171168
      %v5867 = vunpack.c.0.s8 %v5866
      %v5868 = vlaneseq
      %v5869 = vshrl.u32 %v5868, 7
      %v5870 = vsub.s32 %v5867, %v5869
      %v5871 = vrot.slane %v5861, %v5870
      %v5873 = vunpack.c.l.s4 1966171168
      %v5874 = vunpack.c.0.s8 %v5873
      %v5875 = vlaneseq
      %v5876 = vshrl.u32 %v5875, 7
      %v5877 = vsub.s32 %v5874, %v5876
      %v5878 = vrot.slane %v5862, %v5877
      %v5880 = vunpack.c.l.s4 1966171168
      %v5881 = vunpack.c.0.s8 %v5880
      %v5882 = vlaneseq
      %v5883 = vshrl.u32 %v5882, 7
      %v5884 = vsub.s32 %v5881, %v5883
      %v5885 = vrot.slane %v5863, %v5884
      %v5887 = vunpack.c.l.s4 1966171168
      %v5888 = vunpack.c.0.s8 %v5887
      %v5889 = vlaneseq
      %v5890 = vshrl.u32 %v5889, 7
      %v5891 = vsub.s32 %v5888, %v5890
      %v5892 = vrot.slane %v5864, %v5891
      %v5893 = vcombine.low %v5871, %v5878
      %v5894 = vcombine.low %v5885, %v5892
      %v5896 = vunpack.c.l.s4 1966171168
      %v5897 = vunpack.c.0.s8 %v5896
      %v5898 = vlaneseq
      %v5899 = vshrl.u32 %v5898, 7
      %v5900 = vsub.s32 %v5897, %v5899
      %v5901 = vrot.slane %v5893, %v5900
      %v5903 = vunpack.c.l.s4 1966171168
      %v5904 = vunpack.c.0.s8 %v5903
      %v5905 = vlaneseq
      %v5906 = vshrl.u32 %v5905, 7
      %v5907 = vsub.s32 %v5904, %v5906
      %v5908 = vrot.slane %v5894, %v5907
      %v5909 = vcombine.low %v5901, %v5908
      %v5910 = vcombine.low %v4736, %v4740
      %v5911 = vcombine.low %v4744, %v4748
      %v5912 = vcombine.low %v4752, %v4756
      %v5913 = vcombine.low %v4760, %v4764
      %v5915 = vunpack.c.l.s4 1966171168
      %v5916 = vunpack.c.0.s8 %v5915
      %v5917 = vlaneseq
      %v5918 = vshrl.u32 %v5917, 7
      %v5919 = vsub.s32 %v5916, %v5918
      %v5920 = vrot.slane %v5910, %v5919
      %v5922 = vunpack.c.l.s4 1966171168
      %v5923 = vunpack.c.0.s8 %v5922
      %v5924 = vlaneseq
      %v5925 = vshrl.u32 %v5924, 7
      %v5926 = vsub.s32 %v5923, %v5925
      %v5927 = vrot.slane %v5911, %v5926
      %v5929 = vunpack.c.l.s4 1966171168
      %v5930 = vunpack.c.0.s8 %v5929
      %v5931 = vlaneseq
      %v5932 = vshrl.u32 %v5931, 7
      %v5933 = vsub.s32 %v5930, %v5932
      %v5934 = vrot.slane %v5912, %v5933
      %v5936 = vunpack.c.l.s4 1966171168
      %v5937 = vunpack.c.0.s8 %v5936
      %v5938 = vlaneseq
      %v5939 = vshrl.u32 %v5938, 7
      %v5940 = vsub.s32 %v5937, %v5939
      %v5941 = vrot.slane %v5913, %v5940
      %v5942 = vcombine.low %v5920, %v5927
      %v5943 = vcombine.low %v5934, %v5941
      %v5945 = vunpack.c.l.s4 1966171168
      %v5946 = vunpack.c.0.s8 %v5945
      %v5947 = vlaneseq
      %v5948 = vshrl.u32 %v5947, 7
      %v5949 = vsub.s32 %v5946, %v5948
      %v5950 = vrot.slane %v5942, %v5949
      %v5952 = vunpack.c.l.s4 1966171168
      %v5953 = vunpack.c.0.s8 %v5952
      %v5954 = vlaneseq
      %v5955 = vshrl.u32 %v5954, 7
      %v5956 = vsub.s32 %v5953, %v5955
      %v5957 = vrot.slane %v5943, %v5956
      %v5958 = vcombine.low %v5950, %v5957
      %v5959 = vcombine.low %v4768, %v4772
      %v5960 = vcombine.low %v4776, %v4780
      %v5961 = vcombine.low %v4784, %v4788
      %v5962 = vcombine.low %v4792, %v4796
      %v5964 = vunpack.c.l.s4 1966171168
      %v5965 = vunpack.c.0.s8 %v5964
      %v5966 = vlaneseq
      %v5967 = vshrl.u32 %v5966, 7
      %v5968 = vsub.s32 %v5965, %v5967
      %v5969 = vrot.slane %v5959, %v5968
      %v5971 = vunpack.c.l.s4 1966171168
      %v5972 = vunpack.c.0.s8 %v5971
      %v5973 = vlaneseq
      %v5974 = vshrl.u32 %v5973, 7
      %v5975 = vsub.s32 %v5972, %v5974
      %v5976 = vrot.slane %v5960, %v5975
      %v5978 = vunpack.c.l.s4 1966171168
      %v5979 = vunpack.c.0.s8 %v5978
      %v5980 = vlaneseq
      %v5981 = vshrl.u32 %v5980, 7
      %v5982 = vsub.s32 %v5979, %v5981
      %v5983 = vrot.slane %v5961, %v5982
      %v5985 = vunpack.c.l.s4 1966171168
      %v5986 = vunpack.c.0.s8 %v5985
      %v5987 = vlaneseq
      %v5988 = vshrl.u32 %v5987, 7
      %v5989 = vsub.s32 %v5986, %v5988
      %v5990 = vrot.slane %v5962, %v5989
      %v5991 = vcombine.low %v5969, %v5976
      %v5992 = vcombine.low %v5983, %v5990
      %v5994 = vunpack.c.l.s4 1966171168
      %v5995 = vunpack.c.0.s8 %v5994
      %v5996 = vlaneseq
      %v5997 = vshrl.u32 %v5996, 7
      %v5998 = vsub.s32 %v5995, %v5997
      %v5999 = vrot.slane %v5991, %v5998
      %v6001 = vunpack.c.l.s4 1966171168
      %v6002 = vunpack.c.0.s8 %v6001
      %v6003 = vlaneseq
      %v6004 = vshrl.u32 %v6003, 7
      %v6005 = vsub.s32 %v6002, %v6004
      %v6006 = vrot.slane %v5992, %v6005
      %v6007 = vcombine.low %v5999, %v6006
      %v6008 = vcombine.low %v4800, %v4804
      %v6009 = vcombine.low %v4808, %v4812
      %v6010 = vcombine.low %v4816, %v4820
      %v6011 = vcombine.low %v4824, %v4828
      %v6013 = vunpack.c.l.s4 1966171168
      %v6014 = vunpack.c.0.s8 %v6013
      %v6015 = vlaneseq
      %v6016 = vshrl.u32 %v6015, 7
      %v6017 = vsub.s32 %v6014, %v6016
      %v6018 = vrot.slane %v6008, %v6017
      %v6020 = vunpack.c.l.s4 1966171168
      %v6021 = vunpack.c.0.s8 %v6020
      %v6022 = vlaneseq
      %v6023 = vshrl.u32 %v6022, 7
      %v6024 = vsub.s32 %v6021, %v6023
      %v6025 = vrot.slane %v6009, %v6024
      %v6027 = vunpack.c.l.s4 1966171168
      %v6028 = vunpack.c.0.s8 %v6027
      %v6029 = vlaneseq
      %v6030 = vshrl.u32 %v6029, 7
      %v6031 = vsub.s32 %v6028, %v6030
      %v6032 = vrot.slane %v6010, %v6031
      %v6034 = vunpack.c.l.s4 1966171168
      %v6035 = vunpack.c.0.s8 %v6034
      %v6036 = vlaneseq
      %v6037 = vshrl.u32 %v6036, 7
      %v6038 = vsub.s32 %v6035, %v6037
      %v6039 = vrot.slane %v6011, %v6038
      %v6040 = vcombine.low %v6018, %v6025
      %v6041 = vcombine.low %v6032, %v6039
      %v6043 = vunpack.c.l.s4 1966171168
      %v6044 = vunpack.c.0.s8 %v6043
      %v6045 = vlaneseq
      %v6046 = vshrl.u32 %v6045, 7
      %v6047 = vsub.s32 %v6044, %v6046
      %v6048 = vrot.slane %v6040, %v6047
      %v6050 = vunpack.c.l.s4 1966171168
      %v6051 = vunpack.c.0.s8 %v6050
      %v6052 = vlaneseq
      %v6053 = vshrl.u32 %v6052, 7
      %v6054 = vsub.s32 %v6051, %v6053
      %v6055 = vrot.slane %v6041, %v6054
      %v6056 = vcombine.low %v6048, %v6055
      %v6057 = vcombine.low %v4832, %v4836
      %v6058 = vcombine.low %v4840, %v4844
      %v6059 = vcombine.low %v4848, %v4852
      %v6060 = vcombine.low %v4856, %v4860
      %v6062 = vunpack.c.l.s4 1966171168
      %v6063 = vunpack.c.0.s8 %v6062
      %v6064 = vlaneseq
      %v6065 = vshrl.u32 %v6064, 7
      %v6066 = vsub.s32 %v6063, %v6065
      %v6067 = vrot.slane %v6057, %v6066
      %v6069 = vunpack.c.l.s4 1966171168
      %v6070 = vunpack.c.0.s8 %v6069
      %v6071 = vlaneseq
      %v6072 = vshrl.u32 %v6071, 7
      %v6073 = vsub.s32 %v6070, %v6072
      %v6074 = vrot.slane %v6058, %v6073
      %v6076 = vunpack.c.l.s4 1966171168
      %v6077 = vunpack.c.0.s8 %v6076
      %v6078 = vlaneseq
      %v6079 = vshrl.u32 %v6078, 7
      %v6080 = vsub.s32 %v6077, %v6079
      %v6081 = vrot.slane %v6059, %v6080
      %v6083 = vunpack.c.l.s4 1966171168
      %v6084 = vunpack.c.0.s8 %v6083
      %v6085 = vlaneseq
      %v6086 = vshrl.u32 %v6085, 7
      %v6087 = vsub.s32 %v6084, %v6086
      %v6088 = vrot.slane %v6060, %v6087
      %v6089 = vcombine.low %v6067, %v6074
      %v6090 = vcombine.low %v6081, %v6088
      %v6092 = vunpack.c.l.s4 1966171168
      %v6093 = vunpack.c.0.s8 %v6092
      %v6094 = vlaneseq
      %v6095 = vshrl.u32 %v6094, 7
      %v6096 = vsub.s32 %v6093, %v6095
      %v6097 = vrot.slane %v6089, %v6096
      %v6099 = vunpack.c.l.s4 1966171168
      %v6100 = vunpack.c.0.s8 %v6099
      %v6101 = vlaneseq
      %v6102 = vshrl.u32 %v6101, 7
      %v6103 = vsub.s32 %v6100, %v6102
      %v6104 = vrot.slane %v6090, %v6103
      %v6105 = vcombine.low %v6097, %v6104
      %v6106 = vcombine.low %v4864, %v4868
      %v6107 = vcombine.low %v4872, %v4876
      %v6108 = vcombine.low %v4880, %v4884
      %v6109 = vcombine.low %v4888, %v4892
      %v6111 = vunpack.c.l.s4 1966171168
      %v6112 = vunpack.c.0.s8 %v6111
      %v6113 = vlaneseq
      %v6114 = vshrl.u32 %v6113, 7
      %v6115 = vsub.s32 %v6112, %v6114
      %v6116 = vrot.slane %v6106, %v6115
      %v6118 = vunpack.c.l.s4 1966171168
      %v6119 = vunpack.c.0.s8 %v6118
      %v6120 = vlaneseq
      %v6121 = vshrl.u32 %v6120, 7
      %v6122 = vsub.s32 %v6119, %v6121
      %v6123 = vrot.slane %v6107, %v6122
      %v6125 = vunpack.c.l.s4 1966171168
      %v6126 = vunpack.c.0.s8 %v6125
      %v6127 = vlaneseq
      %v6128 = vshrl.u32 %v6127, 7
      %v6129 = vsub.s32 %v6126, %v6128
      %v6130 = vrot.slane %v6108, %v6129
      %v6132 = vunpack.c.l.s4 1966171168
      %v6133 = vunpack.c.0.s8 %v6132
      %v6134 = vlaneseq
      %v6135 = vshrl.u32 %v6134, 7
      %v6136 = vsub.s32 %v6133, %v6135
      %v6137 = vrot.slane %v6109, %v6136
      %v6138 = vcombine.low %v6116, %v6123
      %v6139 = vcombine.low %v6130, %v6137
      %v6141 = vunpack.c.l.s4 1966171168
      %v6142 = vunpack.c.0.s8 %v6141
      %v6143 = vlaneseq
      %v6144 = vshrl.u32 %v6143, 7
      %v6145 = vsub.s32 %v6142, %v6144
      %v6146 = vrot.slane %v6138, %v6145
      %v6148 = vunpack.c.l.s4 1966171168
      %v6149 = vunpack.c.0.s8 %v6148
      %v6150 = vlaneseq
      %v6151 = vshrl.u32 %v6150, 7
      %v6152 = vsub.s32 %v6149, %v6151
      %v6153 = vrot.slane %v6139, %v6152
      %v6154 = vcombine.low %v6146, %v6153
      %v6155 = vcombine.low %v4896, %v4900
      %v6156 = vcombine.low %v4904, %v4908
      %v6157 = vcombine.low %v4912, %v4916
      %v6158 = vcombine.low %v4920, %v4924
      %v6160 = vunpack.c.l.s4 1966171168
      %v6161 = vunpack.c.0.s8 %v6160
      %v6162 = vlaneseq
      %v6163 = vshrl.u32 %v6162, 7
      %v6164 = vsub.s32 %v6161, %v6163
      %v6165 = vrot.slane %v6155, %v6164
      %v6167 = vunpack.c.l.s4 1966171168
      %v6168 = vunpack.c.0.s8 %v6167
      %v6169 = vlaneseq
      %v6170 = vshrl.u32 %v6169, 7
      %v6171 = vsub.s32 %v6168, %v6170
      %v6172 = vrot.slane %v6156, %v6171
      %v6174 = vunpack.c.l.s4 1966171168
      %v6175 = vunpack.c.0.s8 %v6174
      %v6176 = vlaneseq
      %v6177 = vshrl.u32 %v6176, 7
      %v6178 = vsub.s32 %v6175, %v6177
      %v6179 = vrot.slane %v6157, %v6178
      %v6181 = vunpack.c.l.s4 1966171168
      %v6182 = vunpack.c.0.s8 %v6181
      %v6183 = vlaneseq
      %v6184 = vshrl.u32 %v6183, 7
      %v6185 = vsub.s32 %v6182, %v6184
      %v6186 = vrot.slane %v6158, %v6185
      %v6187 = vcombine.low %v6165, %v6172
      %v6188 = vcombine.low %v6179, %v6186
      %v6190 = vunpack.c.l.s4 1966171168
      %v6191 = vunpack.c.0.s8 %v6190
      %v6192 = vlaneseq
      %v6193 = vshrl.u32 %v6192, 7
      %v6194 = vsub.s32 %v6191, %v6193
      %v6195 = vrot.slane %v6187, %v6194
      %v6197 = vunpack.c.l.s4 1966171168
      %v6198 = vunpack.c.0.s8 %v6197
      %v6199 = vlaneseq
      %v6200 = vshrl.u32 %v6199, 7
      %v6201 = vsub.s32 %v6198, %v6200
      %v6202 = vrot.slane %v6188, %v6201
      %v6203 = vcombine.low %v6195, %v6202
      %v6204 = vcombine.low %v4928, %v4932
      %v6205 = vcombine.low %v4936, %v4940
      %v6206 = vcombine.low %v4944, %v4948
      %v6207 = vcombine.low %v4952, %v4956
      %v6209 = vunpack.c.l.s4 1966171168
      %v6210 = vunpack.c.0.s8 %v6209
      %v6211 = vlaneseq
      %v6212 = vshrl.u32 %v6211, 7
      %v6213 = vsub.s32 %v6210, %v6212
      %v6214 = vrot.slane %v6204, %v6213
      %v6216 = vunpack.c.l.s4 1966171168
      %v6217 = vunpack.c.0.s8 %v6216
      %v6218 = vlaneseq
      %v6219 = vshrl.u32 %v6218, 7
      %v6220 = vsub.s32 %v6217, %v6219
      %v6221 = vrot.slane %v6205, %v6220
      %v6223 = vunpack.c.l.s4 1966171168
      %v6224 = vunpack.c.0.s8 %v6223
      %v6225 = vlaneseq
      %v6226 = vshrl.u32 %v6225, 7
      %v6227 = vsub.s32 %v6224, %v6226
      %v6228 = vrot.slane %v6206, %v6227
      %v6230 = vunpack.c.l.s4 1966171168
      %v6231 = vunpack.c.0.s8 %v6230
      %v6232 = vlaneseq
      %v6233 = vshrl.u32 %v6232, 7
      %v6234 = vsub.s32 %v6231, %v6233
      %v6235 = vrot.slane %v6207, %v6234
      %v6236 = vcombine.low %v6214, %v6221
      %v6237 = vcombine.low %v6228, %v6235
      %v6239 = vunpack.c.l.s4 1966171168
      %v6240 = vunpack.c.0.s8 %v6239
      %v6241 = vlaneseq
      %v6242 = vshrl.u32 %v6241, 7
      %v6243 = vsub.s32 %v6240, %v6242
      %v6244 = vrot.slane %v6236, %v6243
      %v6246 = vunpack.c.l.s4 1966171168
      %v6247 = vunpack.c.0.s8 %v6246
      %v6248 = vlaneseq
      %v6249 = vshrl.u32 %v6248, 7
      %v6250 = vsub.s32 %v6247, %v6249
      %v6251 = vrot.slane %v6237, %v6250
      %v6252 = vcombine.low %v6244, %v6251
      %v6253 = vcombine.low %v4960, %v4964
      %v6254 = vcombine.low %v4968, %v4972
      %v6255 = vcombine.low %v4976, %v4980
      %v6256 = vcombine.low %v4984, %v4988
      %v6258 = vunpack.c.l.s4 1966171168
      %v6259 = vunpack.c.0.s8 %v6258
      %v6260 = vlaneseq
      %v6261 = vshrl.u32 %v6260, 7
      %v6262 = vsub.s32 %v6259, %v6261
      %v6263 = vrot.slane %v6253, %v6262
      %v6265 = vunpack.c.l.s4 1966171168
      %v6266 = vunpack.c.0.s8 %v6265
      %v6267 = vlaneseq
      %v6268 = vshrl.u32 %v6267, 7
      %v6269 = vsub.s32 %v6266, %v6268
      %v6270 = vrot.slane %v6254, %v6269
      %v6272 = vunpack.c.l.s4 1966171168
      %v6273 = vunpack.c.0.s8 %v6272
      %v6274 = vlaneseq
      %v6275 = vshrl.u32 %v6274, 7
      %v6276 = vsub.s32 %v6273, %v6275
      %v6277 = vrot.slane %v6255, %v6276
      %v6279 = vunpack.c.l.s4 1966171168
      %v6280 = vunpack.c.0.s8 %v6279
      %v6281 = vlaneseq
      %v6282 = vshrl.u32 %v6281, 7
      %v6283 = vsub.s32 %v6280, %v6282
      %v6284 = vrot.slane %v6256, %v6283
      %v6285 = vcombine.low %v6263, %v6270
      %v6286 = vcombine.low %v6277, %v6284
      %v6288 = vunpack.c.l.s4 1966171168
      %v6289 = vunpack.c.0.s8 %v6288
      %v6290 = vlaneseq
      %v6291 = vshrl.u32 %v6290, 7
      %v6292 = vsub.s32 %v6289, %v6291
      %v6293 = vrot.slane %v6285, %v6292
      %v6295 = vunpack.c.l.s4 1966171168
      %v6296 = vunpack.c.0.s8 %v6295
      %v6297 = vlaneseq
      %v6298 = vshrl.u32 %v6297, 7
      %v6299 = vsub.s32 %v6296, %v6298
      %v6300 = vrot.slane %v6286, %v6299
      %v6301 = vcombine.low %v6293, %v6300
      %v6302 = vcombine.low %v4992, %v4996
      %v6303 = vcombine.low %v5000, %v5004
      %v6304 = vcombine.low %v5008, %v5012
      %v6305 = vcombine.low %v5016, %v5020
      %v6307 = vunpack.c.l.s4 1966171168
      %v6308 = vunpack.c.0.s8 %v6307
      %v6309 = vlaneseq
      %v6310 = vshrl.u32 %v6309, 7
      %v6311 = vsub.s32 %v6308, %v6310
      %v6312 = vrot.slane %v6302, %v6311
      %v6314 = vunpack.c.l.s4 1966171168
      %v6315 = vunpack.c.0.s8 %v6314
      %v6316 = vlaneseq
      %v6317 = vshrl.u32 %v6316, 7
      %v6318 = vsub.s32 %v6315, %v6317
      %v6319 = vrot.slane %v6303, %v6318
      %v6321 = vunpack.c.l.s4 1966171168
      %v6322 = vunpack.c.0.s8 %v6321
      %v6323 = vlaneseq
      %v6324 = vshrl.u32 %v6323, 7
      %v6325 = vsub.s32 %v6322, %v6324
      %v6326 = vrot.slane %v6304, %v6325
      %v6328 = vunpack.c.l.s4 1966171168
      %v6329 = vunpack.c.0.s8 %v6328
      %v6330 = vlaneseq
      %v6331 = vshrl.u32 %v6330, 7
      %v6332 = vsub.s32 %v6329, %v6331
      %v6333 = vrot.slane %v6305, %v6332
      %v6334 = vcombine.low %v6312, %v6319
      %v6335 = vcombine.low %v6326, %v6333
      %v6337 = vunpack.c.l.s4 1966171168
      %v6338 = vunpack.c.0.s8 %v6337
      %v6339 = vlaneseq
      %v6340 = vshrl.u32 %v6339, 7
      %v6341 = vsub.s32 %v6338, %v6340
      %v6342 = vrot.slane %v6334, %v6341
      %v6344 = vunpack.c.l.s4 1966171168
      %v6345 = vunpack.c.0.s8 %v6344
      %v6346 = vlaneseq
      %v6347 = vshrl.u32 %v6346, 7
      %v6348 = vsub.s32 %v6345, %v6347
      %v6349 = vrot.slane %v6335, %v6348
      %v6350 = vcombine.low %v6342, %v6349
      %v6351 = vcombine.low %v5024, %v5028
      %v6352 = vcombine.low %v5032, %v5036
      %v6353 = vcombine.low %v5040, %v5044
      %v6354 = vcombine.low %v5048, %v5052
      %v6356 = vunpack.c.l.s4 1966171168
      %v6357 = vunpack.c.0.s8 %v6356
      %v6358 = vlaneseq
      %v6359 = vshrl.u32 %v6358, 7
      %v6360 = vsub.s32 %v6357, %v6359
      %v6361 = vrot.slane %v6351, %v6360
      %v6363 = vunpack.c.l.s4 1966171168
      %v6364 = vunpack.c.0.s8 %v6363
      %v6365 = vlaneseq
      %v6366 = vshrl.u32 %v6365, 7
      %v6367 = vsub.s32 %v6364, %v6366
      %v6368 = vrot.slane %v6352, %v6367
      %v6370 = vunpack.c.l.s4 1966171168
      %v6371 = vunpack.c.0.s8 %v6370
      %v6372 = vlaneseq
      %v6373 = vshrl.u32 %v6372, 7
      %v6374 = vsub.s32 %v6371, %v6373
      %v6375 = vrot.slane %v6353, %v6374
      %v6377 = vunpack.c.l.s4 1966171168
      %v6378 = vunpack.c.0.s8 %v6377
      %v6379 = vlaneseq
      %v6380 = vshrl.u32 %v6379, 7
      %v6381 = vsub.s32 %v6378, %v6380
      %v6382 = vrot.slane %v6354, %v6381
      %v6383 = vcombine.low %v6361, %v6368
      %v6384 = vcombine.low %v6375, %v6382
      %v6386 = vunpack.c.l.s4 1966171168
      %v6387 = vunpack.c.0.s8 %v6386
      %v6388 = vlaneseq
      %v6389 = vshrl.u32 %v6388, 7
      %v6390 = vsub.s32 %v6387, %v6389
      %v6391 = vrot.slane %v6383, %v6390
      %v6393 = vunpack.c.l.s4 1966171168
      %v6394 = vunpack.c.0.s8 %v6393
      %v6395 = vlaneseq
      %v6396 = vshrl.u32 %v6395, 7
      %v6397 = vsub.s32 %v6394, %v6396
      %v6398 = vrot.slane %v6384, %v6397
      %v6399 = vcombine.low %v6391, %v6398
      %v6400 = vcombine.low %v5056, %v5060
      %v6401 = vcombine.low %v5064, %v5068
      %v6402 = vcombine.low %v5072, %v5076
      %v6403 = vcombine.low %v5080, %v5084
      %v6405 = vunpack.c.l.s4 1966171168
      %v6406 = vunpack.c.0.s8 %v6405
      %v6407 = vlaneseq
      %v6408 = vshrl.u32 %v6407, 7
      %v6409 = vsub.s32 %v6406, %v6408
      %v6410 = vrot.slane %v6400, %v6409
      %v6412 = vunpack.c.l.s4 1966171168
      %v6413 = vunpack.c.0.s8 %v6412
      %v6414 = vlaneseq
      %v6415 = vshrl.u32 %v6414, 7
      %v6416 = vsub.s32 %v6413, %v6415
      %v6417 = vrot.slane %v6401, %v6416
      %v6419 = vunpack.c.l.s4 1966171168
      %v6420 = vunpack.c.0.s8 %v6419
      %v6421 = vlaneseq
      %v6422 = vshrl.u32 %v6421, 7
      %v6423 = vsub.s32 %v6420, %v6422
      %v6424 = vrot.slane %v6402, %v6423
      %v6426 = vunpack.c.l.s4 1966171168
      %v6427 = vunpack.c.0.s8 %v6426
      %v6428 = vlaneseq
      %v6429 = vshrl.u32 %v6428, 7
      %v6430 = vsub.s32 %v6427, %v6429
      %v6431 = vrot.slane %v6403, %v6430
      %v6432 = vcombine.low %v6410, %v6417
      %v6433 = vcombine.low %v6424, %v6431
      %v6435 = vunpack.c.l.s4 1966171168
      %v6436 = vunpack.c.0.s8 %v6435
      %v6437 = vlaneseq
      %v6438 = vshrl.u32 %v6437, 7
      %v6439 = vsub.s32 %v6436, %v6438
      %v6440 = vrot.slane %v6432, %v6439
      %v6442 = vunpack.c.l.s4 1966171168
      %v6443 = vunpack.c.0.s8 %v6442
      %v6444 = vlaneseq
      %v6445 = vshrl.u32 %v6444, 7
      %v6446 = vsub.s32 %v6443, %v6445
      %v6447 = vrot.slane %v6433, %v6446
      %v6448 = vcombine.low %v6440, %v6447
      %v6449 = vcombine.low %v5088, %v5092
      %v6450 = vcombine.low %v5096, %v5100
      %v6451 = vcombine.low %v5104, %v5108
      %v6452 = vcombine.low %v5112, %v5116
      %v6454 = vunpack.c.l.s4 1966171168
      %v6455 = vunpack.c.0.s8 %v6454
      %v6456 = vlaneseq
      %v6457 = vshrl.u32 %v6456, 7
      %v6458 = vsub.s32 %v6455, %v6457
      %v6459 = vrot.slane %v6449, %v6458
      %v6461 = vunpack.c.l.s4 1966171168
      %v6462 = vunpack.c.0.s8 %v6461
      %v6463 = vlaneseq
      %v6464 = vshrl.u32 %v6463, 7
      %v6465 = vsub.s32 %v6462, %v6464
      %v6466 = vrot.slane %v6450, %v6465
      %v6468 = vunpack.c.l.s4 1966171168
      %v6469 = vunpack.c.0.s8 %v6468
      %v6470 = vlaneseq
      %v6471 = vshrl.u32 %v6470, 7
      %v6472 = vsub.s32 %v6469, %v6471
      %v6473 = vrot.slane %v6451, %v6472
      %v6475 = vunpack.c.l.s4 1966171168
      %v6476 = vunpack.c.0.s8 %v6475
      %v6477 = vlaneseq
      %v6478 = vshrl.u32 %v6477, 7
      %v6479 = vsub.s32 %v6476, %v6478
      %v6480 = vrot.slane %v6452, %v6479
      %v6481 = vcombine.low %v6459, %v6466
      %v6482 = vcombine.low %v6473, %v6480
      %v6484 = vunpack.c.l.s4 1966171168
      %v6485 = vunpack.c.0.s8 %v6484
      %v6486 = vlaneseq
      %v6487 = vshrl.u32 %v6486, 7
      %v6488 = vsub.s32 %v6485, %v6487
      %v6489 = vrot.slane %v6481, %v6488
      %v6491 = vunpack.c.l.s4 1966171168
      %v6492 = vunpack.c.0.s8 %v6491
      %v6493 = vlaneseq
      %v6494 = vshrl.u32 %v6493, 7
      %v6495 = vsub.s32 %v6492, %v6494
      %v6496 = vrot.slane %v6482, %v6495
      %v6497 = vcombine.low %v6489, %v6496
      %v6498 = vcombine.low %v5120, %v5124
      %v6499 = vcombine.low %v5128, %v5132
      %v6500 = vcombine.low %v5136, %v5140
      %v6501 = vcombine.low %v5144, %v5148
      %v6503 = vunpack.c.l.s4 1966171168
      %v6504 = vunpack.c.0.s8 %v6503
      %v6505 = vlaneseq
      %v6506 = vshrl.u32 %v6505, 7
      %v6507 = vsub.s32 %v6504, %v6506
      %v6508 = vrot.slane %v6498, %v6507
      %v6510 = vunpack.c.l.s4 1966171168
      %v6511 = vunpack.c.0.s8 %v6510
      %v6512 = vlaneseq
      %v6513 = vshrl.u32 %v6512, 7
      %v6514 = vsub.s32 %v6511, %v6513
      %v6515 = vrot.slane %v6499, %v6514
      %v6517 = vunpack.c.l.s4 1966171168
      %v6518 = vunpack.c.0.s8 %v6517
      %v6519 = vlaneseq
      %v6520 = vshrl.u32 %v6519, 7
      %v6521 = vsub.s32 %v6518, %v6520
      %v6522 = vrot.slane %v6500, %v6521
      %v6524 = vunpack.c.l.s4 1966171168
      %v6525 = vunpack.c.0.s8 %v6524
      %v6526 = vlaneseq
      %v6527 = vshrl.u32 %v6526, 7
      %v6528 = vsub.s32 %v6525, %v6527
      %v6529 = vrot.slane %v6501, %v6528
      %v6530 = vcombine.low %v6508, %v6515
      %v6531 = vcombine.low %v6522, %v6529
      %v6533 = vunpack.c.l.s4 1966171168
      %v6534 = vunpack.c.0.s8 %v6533
      %v6535 = vlaneseq
      %v6536 = vshrl.u32 %v6535, 7
      %v6537 = vsub.s32 %v6534, %v6536
      %v6538 = vrot.slane %v6530, %v6537
      %v6540 = vunpack.c.l.s4 1966171168
      %v6541 = vunpack.c.0.s8 %v6540
      %v6542 = vlaneseq
      %v6543 = vshrl.u32 %v6542, 7
      %v6544 = vsub.s32 %v6541, %v6543
      %v6545 = vrot.slane %v6531, %v6544
      %v6546 = vcombine.low %v6538, %v6545
      %v6547 = vcombine.low %v5152, %v5156
      %v6548 = vcombine.low %v5160, %v5164
      %v6549 = vcombine.low %v5168, %v5172
      %v6550 = vcombine.low %v5176, %v5180
      %v6552 = vunpack.c.l.s4 1966171168
      %v6553 = vunpack.c.0.s8 %v6552
      %v6554 = vlaneseq
      %v6555 = vshrl.u32 %v6554, 7
      %v6556 = vsub.s32 %v6553, %v6555
      %v6557 = vrot.slane %v6547, %v6556
      %v6559 = vunpack.c.l.s4 1966171168
      %v6560 = vunpack.c.0.s8 %v6559
      %v6561 = vlaneseq
      %v6562 = vshrl.u32 %v6561, 7
      %v6563 = vsub.s32 %v6560, %v6562
      %v6564 = vrot.slane %v6548, %v6563
      %v6566 = vunpack.c.l.s4 1966171168
      %v6567 = vunpack.c.0.s8 %v6566
      %v6568 = vlaneseq
      %v6569 = vshrl.u32 %v6568, 7
      %v6570 = vsub.s32 %v6567, %v6569
      %v6571 = vrot.slane %v6549, %v6570
      %v6573 = vunpack.c.l.s4 1966171168
      %v6574 = vunpack.c.0.s8 %v6573
      %v6575 = vlaneseq
      %v6576 = vshrl.u32 %v6575, 7
      %v6577 = vsub.s32 %v6574, %v6576
      %v6578 = vrot.slane %v6550, %v6577
      %v6579 = vcombine.low %v6557, %v6564
      %v6580 = vcombine.low %v6571, %v6578
      %v6582 = vunpack.c.l.s4 1966171168
      %v6583 = vunpack.c.0.s8 %v6582
      %v6584 = vlaneseq
      %v6585 = vshrl.u32 %v6584, 7
      %v6586 = vsub.s32 %v6583, %v6585
      %v6587 = vrot.slane %v6579, %v6586
      %v6589 = vunpack.c.l.s4 1966171168
      %v6590 = vunpack.c.0.s8 %v6589
      %v6591 = vlaneseq
      %v6592 = vshrl.u32 %v6591, 7
      %v6593 = vsub.s32 %v6590, %v6592
      %v6594 = vrot.slane %v6580, %v6593
      %v6595 = vcombine.low %v6587, %v6594
      %v6596 = vcombine.low %v5184, %v5188
      %v6597 = vcombine.low %v5192, %v5196
      %v6598 = vcombine.low %v5200, %v5204
      %v6599 = vcombine.low %v5208, %v5212
      %v6601 = vunpack.c.l.s4 1966171168
      %v6602 = vunpack.c.0.s8 %v6601
      %v6603 = vlaneseq
      %v6604 = vshrl.u32 %v6603, 7
      %v6605 = vsub.s32 %v6602, %v6604
      %v6606 = vrot.slane %v6596, %v6605
      %v6608 = vunpack.c.l.s4 1966171168
      %v6609 = vunpack.c.0.s8 %v6608
      %v6610 = vlaneseq
      %v6611 = vshrl.u32 %v6610, 7
      %v6612 = vsub.s32 %v6609, %v6611
      %v6613 = vrot.slane %v6597, %v6612
      %v6615 = vunpack.c.l.s4 1966171168
      %v6616 = vunpack.c.0.s8 %v6615
      %v6617 = vlaneseq
      %v6618 = vshrl.u32 %v6617, 7
      %v6619 = vsub.s32 %v6616, %v6618
      %v6620 = vrot.slane %v6598, %v6619
      %v6622 = vunpack.c.l.s4 1966171168
      %v6623 = vunpack.c.0.s8 %v6622
      %v6624 = vlaneseq
      %v6625 = vshrl.u32 %v6624, 7
      %v6626 = vsub.s32 %v6623, %v6625
      %v6627 = vrot.slane %v6599, %v6626
      %v6628 = vcombine.low %v6606, %v6613
      %v6629 = vcombine.low %v6620, %v6627
      %v6631 = vunpack.c.l.s4 1966171168
      %v6632 = vunpack.c.0.s8 %v6631
      %v6633 = vlaneseq
      %v6634 = vshrl.u32 %v6633, 7
      %v6635 = vsub.s32 %v6632, %v6634
      %v6636 = vrot.slane %v6628, %v6635
      %v6638 = vunpack.c.l.s4 1966171168
      %v6639 = vunpack.c.0.s8 %v6638
      %v6640 = vlaneseq
      %v6641 = vshrl.u32 %v6640, 7
      %v6642 = vsub.s32 %v6639, %v6641
      %v6643 = vrot.slane %v6629, %v6642
      %v6644 = vcombine.low %v6636, %v6643
      %v6645 = vcombine.low %v5216, %v5220
      %v6646 = vcombine.low %v5224, %v5228
      %v6647 = vcombine.low %v5232, %v5236
      %v6648 = vcombine.low %v5240, %v5244
      %v6650 = vunpack.c.l.s4 1966171168
      %v6651 = vunpack.c.0.s8 %v6650
      %v6652 = vlaneseq
      %v6653 = vshrl.u32 %v6652, 7
      %v6654 = vsub.s32 %v6651, %v6653
      %v6655 = vrot.slane %v6645, %v6654
      %v6657 = vunpack.c.l.s4 1966171168
      %v6658 = vunpack.c.0.s8 %v6657
      %v6659 = vlaneseq
      %v6660 = vshrl.u32 %v6659, 7
      %v6661 = vsub.s32 %v6658, %v6660
      %v6662 = vrot.slane %v6646, %v6661
      %v6664 = vunpack.c.l.s4 1966171168
      %v6665 = vunpack.c.0.s8 %v6664
      %v6666 = vlaneseq
      %v6667 = vshrl.u32 %v6666, 7
      %v6668 = vsub.s32 %v6665, %v6667
      %v6669 = vrot.slane %v6647, %v6668
      %v6671 = vunpack.c.l.s4 1966171168
      %v6672 = vunpack.c.0.s8 %v6671
      %v6673 = vlaneseq
      %v6674 = vshrl.u32 %v6673, 7
      %v6675 = vsub.s32 %v6672, %v6674
      %v6676 = vrot.slane %v6648, %v6675
      %v6677 = vcombine.low %v6655, %v6662
      %v6678 = vcombine.low %v6669, %v6676
      %v6680 = vunpack.c.l.s4 1966171168
      %v6681 = vunpack.c.0.s8 %v6680
      %v6682 = vlaneseq
      %v6683 = vshrl.u32 %v6682, 7
      %v6684 = vsub.s32 %v6681, %v6683
      %v6685 = vrot.slane %v6677, %v6684
      %v6687 = vunpack.c.l.s4 1966171168
      %v6688 = vunpack.c.0.s8 %v6687
      %v6689 = vlaneseq
      %v6690 = vshrl.u32 %v6689, 7
      %v6691 = vsub.s32 %v6688, %v6690
      %v6692 = vrot.slane %v6678, %v6691
      %v6693 = vcombine.low %v6685, %v6692
      %v6694 = vcombine.low %v5248, %v5252
      %v6695 = vcombine.low %v5256, %v5260
      %v6696 = vcombine.low %v5264, %v5268
      %v6697 = vcombine.low %v5272, %v5276
      %v6699 = vunpack.c.l.s4 1966171168
      %v6700 = vunpack.c.0.s8 %v6699
      %v6701 = vlaneseq
      %v6702 = vshrl.u32 %v6701, 7
      %v6703 = vsub.s32 %v6700, %v6702
      %v6704 = vrot.slane %v6694, %v6703
      %v6706 = vunpack.c.l.s4 1966171168
      %v6707 = vunpack.c.0.s8 %v6706
      %v6708 = vlaneseq
      %v6709 = vshrl.u32 %v6708, 7
      %v6710 = vsub.s32 %v6707, %v6709
      %v6711 = vrot.slane %v6695, %v6710
      %v6713 = vunpack.c.l.s4 1966171168
      %v6714 = vunpack.c.0.s8 %v6713
      %v6715 = vlaneseq
      %v6716 = vshrl.u32 %v6715, 7
      %v6717 = vsub.s32 %v6714, %v6716
      %v6718 = vrot.slane %v6696, %v6717
      %v6720 = vunpack.c.l.s4 1966171168
      %v6721 = vunpack.c.0.s8 %v6720
      %v6722 = vlaneseq
      %v6723 = vshrl.u32 %v6722, 7
      %v6724 = vsub.s32 %v6721, %v6723
      %v6725 = vrot.slane %v6697, %v6724
      %v6726 = vcombine.low %v6704, %v6711
      %v6727 = vcombine.low %v6718, %v6725
      %v6729 = vunpack.c.l.s4 1966171168
      %v6730 = vunpack.c.0.s8 %v6729
      %v6731 = vlaneseq
      %v6732 = vshrl.u32 %v6731, 7
      %v6733 = vsub.s32 %v6730, %v6732
      %v6734 = vrot.slane %v6726, %v6733
      %v6736 = vunpack.c.l.s4 1966171168
      %v6737 = vunpack.c.0.s8 %v6736
      %v6738 = vlaneseq
      %v6739 = vshrl.u32 %v6738, 7
      %v6740 = vsub.s32 %v6737, %v6739
      %v6741 = vrot.slane %v6727, %v6740
      %v6742 = vcombine.low %v6734, %v6741
      %v6743 = vcombine.low %v5280, %v5284
      %v6744 = vcombine.low %v5288, %v5292
      %v6745 = vcombine.low %v5296, %v5300
      %v6746 = vcombine.low %v5304, %v5308
      %v6748 = vunpack.c.l.s4 1966171168
      %v6749 = vunpack.c.0.s8 %v6748
      %v6750 = vlaneseq
      %v6751 = vshrl.u32 %v6750, 7
      %v6752 = vsub.s32 %v6749, %v6751
      %v6753 = vrot.slane %v6743, %v6752
      %v6755 = vunpack.c.l.s4 1966171168
      %v6756 = vunpack.c.0.s8 %v6755
      %v6757 = vlaneseq
      %v6758 = vshrl.u32 %v6757, 7
      %v6759 = vsub.s32 %v6756, %v6758
      %v6760 = vrot.slane %v6744, %v6759
      %v6762 = vunpack.c.l.s4 1966171168
      %v6763 = vunpack.c.0.s8 %v6762
      %v6764 = vlaneseq
      %v6765 = vshrl.u32 %v6764, 7
      %v6766 = vsub.s32 %v6763, %v6765
      %v6767 = vrot.slane %v6745, %v6766
      %v6769 = vunpack.c.l.s4 1966171168
      %v6770 = vunpack.c.0.s8 %v6769
      %v6771 = vlaneseq
      %v6772 = vshrl.u32 %v6771, 7
      %v6773 = vsub.s32 %v6770, %v6772
      %v6774 = vrot.slane %v6746, %v6773
      %v6775 = vcombine.low %v6753, %v6760
      %v6776 = vcombine.low %v6767, %v6774
      %v6778 = vunpack.c.l.s4 1966171168
      %v6779 = vunpack.c.0.s8 %v6778
      %v6780 = vlaneseq
      %v6781 = vshrl.u32 %v6780, 7
      %v6782 = vsub.s32 %v6779, %v6781
      %v6783 = vrot.slane %v6775, %v6782
      %v6785 = vunpack.c.l.s4 1966171168
      %v6786 = vunpack.c.0.s8 %v6785
      %v6787 = vlaneseq
      %v6788 = vshrl.u32 %v6787, 7
      %v6789 = vsub.s32 %v6786, %v6788
      %v6790 = vrot.slane %v6776, %v6789
      %v6791 = vcombine.low %v6783, %v6790
      %v6792 = vcombine.low %v5312, %v5316
      %v6793 = vcombine.low %v5320, %v5324
      %v6794 = vcombine.low %v5328, %v5332
      %v6795 = vcombine.low %v5336, %v5340
      %v6797 = vunpack.c.l.s4 1966171168
      %v6798 = vunpack.c.0.s8 %v6797
      %v6799 = vlaneseq
      %v6800 = vshrl.u32 %v6799, 7
      %v6801 = vsub.s32 %v6798, %v6800
      %v6802 = vrot.slane %v6792, %v6801
      %v6804 = vunpack.c.l.s4 1966171168
      %v6805 = vunpack.c.0.s8 %v6804
      %v6806 = vlaneseq
      %v6807 = vshrl.u32 %v6806, 7
      %v6808 = vsub.s32 %v6805, %v6807
      %v6809 = vrot.slane %v6793, %v6808
      %v6811 = vunpack.c.l.s4 1966171168
      %v6812 = vunpack.c.0.s8 %v6811
      %v6813 = vlaneseq
      %v6814 = vshrl.u32 %v6813, 7
      %v6815 = vsub.s32 %v6812, %v6814
      %v6816 = vrot.slane %v6794, %v6815
      %v6818 = vunpack.c.l.s4 1966171168
      %v6819 = vunpack.c.0.s8 %v6818
      %v6820 = vlaneseq
      %v6821 = vshrl.u32 %v6820, 7
      %v6822 = vsub.s32 %v6819, %v6821
      %v6823 = vrot.slane %v6795, %v6822
      %v6824 = vcombine.low %v6802, %v6809
      %v6825 = vcombine.low %v6816, %v6823
      %v6827 = vunpack.c.l.s4 1966171168
      %v6828 = vunpack.c.0.s8 %v6827
      %v6829 = vlaneseq
      %v6830 = vshrl.u32 %v6829, 7
      %v6831 = vsub.s32 %v6828, %v6830
      %v6832 = vrot.slane %v6824, %v6831
      %v6834 = vunpack.c.l.s4 1966171168
      %v6835 = vunpack.c.0.s8 %v6834
      %v6836 = vlaneseq
      %v6837 = vshrl.u32 %v6836, 7
      %v6838 = vsub.s32 %v6835, %v6837
      %v6839 = vrot.slane %v6825, %v6838
      %v6840 = vcombine.low %v6832, %v6839
      %v6841 = vcombine.low %v5344, %v5348
      %v6842 = vcombine.low %v5352, %v5356
      %v6843 = vcombine.low %v5360, %v5364
      %v6844 = vcombine.low %v5368, %v5372
      %v6846 = vunpack.c.l.s4 1966171168
      %v6847 = vunpack.c.0.s8 %v6846
      %v6848 = vlaneseq
      %v6849 = vshrl.u32 %v6848, 7
      %v6850 = vsub.s32 %v6847, %v6849
      %v6851 = vrot.slane %v6841, %v6850
      %v6853 = vunpack.c.l.s4 1966171168
      %v6854 = vunpack.c.0.s8 %v6853
      %v6855 = vlaneseq
      %v6856 = vshrl.u32 %v6855, 7
      %v6857 = vsub.s32 %v6854, %v6856
      %v6858 = vrot.slane %v6842, %v6857
      %v6860 = vunpack.c.l.s4 1966171168
      %v6861 = vunpack.c.0.s8 %v6860
      %v6862 = vlaneseq
      %v6863 = vshrl.u32 %v6862, 7
      %v6864 = vsub.s32 %v6861, %v6863
      %v6865 = vrot.slane %v6843, %v6864
      %v6867 = vunpack.c.l.s4 1966171168
      %v6868 = vunpack.c.0.s8 %v6867
      %v6869 = vlaneseq
      %v6870 = vshrl.u32 %v6869, 7
      %v6871 = vsub.s32 %v6868, %v6870
      %v6872 = vrot.slane %v6844, %v6871
      %v6873 = vcombine.low %v6851, %v6858
      %v6874 = vcombine.low %v6865, %v6872
      %v6876 = vunpack.c.l.s4 1966171168
      %v6877 = vunpack.c.0.s8 %v6876
      %v6878 = vlaneseq
      %v6879 = vshrl.u32 %v6878, 7
      %v6880 = vsub.s32 %v6877, %v6879
      %v6881 = vrot.slane %v6873, %v6880
      %v6883 = vunpack.c.l.s4 1966171168
      %v6884 = vunpack.c.0.s8 %v6883
      %v6885 = vlaneseq
      %v6886 = vshrl.u32 %v6885, 7
      %v6887 = vsub.s32 %v6884, %v6886
      %v6888 = vrot.slane %v6874, %v6887
      %v6889 = vcombine.low %v6881, %v6888
      %v6890 = vcombine.low %v5376, %v5380
      %v6891 = vcombine.low %v5384, %v5388
      %v6892 = vcombine.low %v5392, %v5396
      %v6893 = vcombine.low %v5400, %v5404
      %v6895 = vunpack.c.l.s4 1966171168
      %v6896 = vunpack.c.0.s8 %v6895
      %v6897 = vlaneseq
      %v6898 = vshrl.u32 %v6897, 7
      %v6899 = vsub.s32 %v6896, %v6898
      %v6900 = vrot.slane %v6890, %v6899
      %v6902 = vunpack.c.l.s4 1966171168
      %v6903 = vunpack.c.0.s8 %v6902
      %v6904 = vlaneseq
      %v6905 = vshrl.u32 %v6904, 7
      %v6906 = vsub.s32 %v6903, %v6905
      %v6907 = vrot.slane %v6891, %v6906
      %v6909 = vunpack.c.l.s4 1966171168
      %v6910 = vunpack.c.0.s8 %v6909
      %v6911 = vlaneseq
      %v6912 = vshrl.u32 %v6911, 7
      %v6913 = vsub.s32 %v6910, %v6912
      %v6914 = vrot.slane %v6892, %v6913
      %v6916 = vunpack.c.l.s4 1966171168
      %v6917 = vunpack.c.0.s8 %v6916
      %v6918 = vlaneseq
      %v6919 = vshrl.u32 %v6918, 7
      %v6920 = vsub.s32 %v6917, %v6919
      %v6921 = vrot.slane %v6893, %v6920
      %v6922 = vcombine.low %v6900, %v6907
      %v6923 = vcombine.low %v6914, %v6921
      %v6925 = vunpack.c.l.s4 1966171168
      %v6926 = vunpack.c.0.s8 %v6925
      %v6927 = vlaneseq
      %v6928 = vshrl.u32 %v6927, 7
      %v6929 = vsub.s32 %v6926, %v6928
      %v6930 = vrot.slane %v6922, %v6929
      %v6932 = vunpack.c.l.s4 1966171168
      %v6933 = vunpack.c.0.s8 %v6932
      %v6934 = vlaneseq
      %v6935 = vshrl.u32 %v6934, 7
      %v6936 = vsub.s32 %v6933, %v6935
      %v6937 = vrot.slane %v6923, %v6936
      %v6938 = vcombine.low %v6930, %v6937
      %v6939 = vcombine.low %v5408, %v5412
      %v6940 = vcombine.low %v5416, %v5420
      %v6941 = vcombine.low %v5424, %v5428
      %v6942 = vcombine.low %v5432, %v5436
      %v6944 = vunpack.c.l.s4 1966171168
      %v6945 = vunpack.c.0.s8 %v6944
      %v6946 = vlaneseq
      %v6947 = vshrl.u32 %v6946, 7
      %v6948 = vsub.s32 %v6945, %v6947
      %v6949 = vrot.slane %v6939, %v6948
      %v6951 = vunpack.c.l.s4 1966171168
      %v6952 = vunpack.c.0.s8 %v6951
      %v6953 = vlaneseq
      %v6954 = vshrl.u32 %v6953, 7
      %v6955 = vsub.s32 %v6952, %v6954
      %v6956 = vrot.slane %v6940, %v6955
      %v6958 = vunpack.c.l.s4 1966171168
      %v6959 = vunpack.c.0.s8 %v6958
      %v6960 = vlaneseq
      %v6961 = vshrl.u32 %v6960, 7
      %v6962 = vsub.s32 %v6959, %v6961
      %v6963 = vrot.slane %v6941, %v6962
      %v6965 = vunpack.c.l.s4 1966171168
      %v6966 = vunpack.c.0.s8 %v6965
      %v6967 = vlaneseq
      %v6968 = vshrl.u32 %v6967, 7
      %v6969 = vsub.s32 %v6966, %v6968
      %v6970 = vrot.slane %v6942, %v6969
      %v6971 = vcombine.low %v6949, %v6956
      %v6972 = vcombine.low %v6963, %v6970
      %v6974 = vunpack.c.l.s4 1966171168
      %v6975 = vunpack.c.0.s8 %v6974
      %v6976 = vlaneseq
      %v6977 = vshrl.u32 %v6976, 7
      %v6978 = vsub.s32 %v6975, %v6977
      %v6979 = vrot.slane %v6971, %v6978
      %v6981 = vunpack.c.l.s4 1966171168
      %v6982 = vunpack.c.0.s8 %v6981
      %v6983 = vlaneseq
      %v6984 = vshrl.u32 %v6983, 7
      %v6985 = vsub.s32 %v6982, %v6984
      %v6986 = vrot.slane %v6972, %v6985
      %v6987 = vcombine.low %v6979, %v6986
      %v6988 = vcombine.low %v5440, %v5444
      %v6989 = vcombine.low %v5448, %v5452
      %v6990 = vcombine.low %v5456, %v5460
      %v6991 = vcombine.low %v5464, %v5468
      %v6993 = vunpack.c.l.s4 1966171168
      %v6994 = vunpack.c.0.s8 %v6993
      %v6995 = vlaneseq
      %v6996 = vshrl.u32 %v6995, 7
      %v6997 = vsub.s32 %v6994, %v6996
      %v6998 = vrot.slane %v6988, %v6997
      %v7000 = vunpack.c.l.s4 1966171168
      %v7001 = vunpack.c.0.s8 %v7000
      %v7002 = vlaneseq
      %v7003 = vshrl.u32 %v7002, 7
      %v7004 = vsub.s32 %v7001, %v7003
      %v7005 = vrot.slane %v6989, %v7004
      %v7007 = vunpack.c.l.s4 1966171168
      %v7008 = vunpack.c.0.s8 %v7007
      %v7009 = vlaneseq
      %v7010 = vshrl.u32 %v7009, 7
      %v7011 = vsub.s32 %v7008, %v7010
      %v7012 = vrot.slane %v6990, %v7011
      %v7014 = vunpack.c.l.s4 1966171168
      %v7015 = vunpack.c.0.s8 %v7014
      %v7016 = vlaneseq
      %v7017 = vshrl.u32 %v7016, 7
      %v7018 = vsub.s32 %v7015, %v7017
      %v7019 = vrot.slane %v6991, %v7018
      %v7020 = vcombine.low %v6998, %v7005
      %v7021 = vcombine.low %v7012, %v7019
      %v7023 = vunpack.c.l.s4 1966171168
      %v7024 = vunpack.c.0.s8 %v7023
      %v7025 = vlaneseq
      %v7026 = vshrl.u32 %v7025, 7
      %v7027 = vsub.s32 %v7024, %v7026
      %v7028 = vrot.slane %v7020, %v7027
      %v7030 = vunpack.c.l.s4 1966171168
      %v7031 = vunpack.c.0.s8 %v7030
      %v7032 = vlaneseq
      %v7033 = vshrl.u32 %v7032, 7
      %v7034 = vsub.s32 %v7031, %v7033
      %v7035 = vrot.slane %v7021, %v7034
      %v7036 = vcombine.low %v7028, %v7035
      %7037 = vset.pattern.permute.xlu0 0
      %7038 = vperm.xlu0 %7037, %v5517
      %v7039 = vpop.permute.xlu0 %7038
      %7040 = vset.pattern.permute.xlu0 0
      %7041 = vperm.xlu0 %7040, %v5566
      %v7042 = vpop.permute.xlu0 %7041
      %7043 = vset.pattern.permute.xlu0 0
      %7044 = vperm.xlu0 %7043, %v5615
      %v7045 = vpop.permute.xlu0 %7044
      %7046 = vset.pattern.permute.xlu0 0
      %7047 = vperm.xlu0 %7046, %v5664
      %v7048 = vpop.permute.xlu0 %7047
      %7049 = vset.pattern.permute.xlu0 0
      %7050 = vperm.xlu0 %7049, %v5713
      %v7051 = vpop.permute.xlu0 %7050
      %7052 = vset.pattern.permute.xlu0 0
      %7053 = vperm.xlu0 %7052, %v5762
      %v7054 = vpop.permute.xlu0 %7053
      %7055 = vset.pattern.permute.xlu0 0
      %7056 = vperm.xlu0 %7055, %v5811
      %v7057 = vpop.permute.xlu0 %7056
      %7058 = vset.pattern.permute.xlu0 0
      %7059 = vperm.xlu0 %7058, %v5860
      %v7060 = vpop.permute.xlu0 %7059
      %7061 = vset.pattern.permute.xlu0 0
      %7062 = vperm.xlu0 %7061, %v5909
      %v7063 = vpop.permute.xlu0 %7062
      %7064 = vset.pattern.permute.xlu0 0
      %7065 = vperm.xlu0 %7064, %v5958
      %v7066 = vpop.permute.xlu0 %7065
      %7067 = vset.pattern.permute.xlu0 0
      %7068 = vperm.xlu0 %7067, %v6007
      %v7069 = vpop.permute.xlu0 %7068
      %7070 = vset.pattern.permute.xlu0 0
      %7071 = vperm.xlu0 %7070, %v6056
      %v7072 = vpop.permute.xlu0 %7071
      %7073 = vset.pattern.permute.xlu0 0
      %7074 = vperm.xlu0 %7073, %v6105
      %v7075 = vpop.permute.xlu0 %7074
      %7076 = vset.pattern.permute.xlu0 0
      %7077 = vperm.xlu0 %7076, %v6154
      %v7078 = vpop.permute.xlu0 %7077
      %7079 = vset.pattern.permute.xlu0 0
      %7080 = vperm.xlu0 %7079, %v6203
      %v7081 = vpop.permute.xlu0 %7080
      %7082 = vset.pattern.permute.xlu0 0
      %7083 = vperm.xlu0 %7082, %v6252
      %v7084 = vpop.permute.xlu0 %7083
      %7085 = vset.pattern.permute.xlu0 0
      %7086 = vperm.xlu0 %7085, %v6301
      %v7087 = vpop.permute.xlu0 %7086
      %7088 = vset.pattern.permute.xlu0 0
      %7089 = vperm.xlu0 %7088, %v6350
      %v7090 = vpop.permute.xlu0 %7089
      %7091 = vset.pattern.permute.xlu0 0
      %7092 = vperm.xlu0 %7091, %v6399
      %v7093 = vpop.permute.xlu0 %7092
      %7094 = vset.pattern.permute.xlu0 0
      %7095 = vperm.xlu0 %7094, %v6448
      %v7096 = vpop.permute.xlu0 %7095
      %7097 = vset.pattern.permute.xlu0 0
      %7098 = vperm.xlu0 %7097, %v6497
      %v7099 = vpop.permute.xlu0 %7098
      %7100 = vset.pattern.permute.xlu0 0
      %7101 = vperm.xlu0 %7100, %v6546
      %v7102 = vpop.permute.xlu0 %7101
      %7103 = vset.pattern.permute.xlu0 0
      %7104 = vperm.xlu0 %7103, %v6595
      %v7105 = vpop.permute.xlu0 %7104
      %7106 = vset.pattern.permute.xlu0 0
      %7107 = vperm.xlu0 %7106, %v6644
      %v7108 = vpop.permute.xlu0 %7107
      %7109 = vset.pattern.permute.xlu0 0
      %7110 = vperm.xlu0 %7109, %v6693
      %v7111 = vpop.permute.xlu0 %7110
      %7112 = vset.pattern.permute.xlu0 0
      %7113 = vperm.xlu0 %7112, %v6742
      %v7114 = vpop.permute.xlu0 %7113
      %7115 = vset.pattern.permute.xlu0 0
      %7116 = vperm.xlu0 %7115, %v6791
      %v7117 = vpop.permute.xlu0 %7116
      %7118 = vset.pattern.permute.xlu0 0
      %7119 = vperm.xlu0 %7118, %v6840
      %v7120 = vpop.permute.xlu0 %7119
      %7121 = vset.pattern.permute.xlu0 0
      %7122 = vperm.xlu0 %7121, %v6889
      %v7123 = vpop.permute.xlu0 %7122
      %7124 = vset.pattern.permute.xlu0 0
      %7125 = vperm.xlu0 %7124, %v6938
      %v7126 = vpop.permute.xlu0 %7125
      %7127 = vset.pattern.permute.xlu0 0
      %7128 = vperm.xlu0 %7127, %v6987
      %v7129 = vpop.permute.xlu0 %7128
      %7130 = vset.pattern.permute.xlu0 0
      %7131 = vperm.xlu0 %7130, %v7036
      %v7132 = vpop.permute.xlu0 %7131
      %v7133 = vlaneseq
      %v7134 = vshrl.u32 %v7133, 7
      %v7135 = vsub.s32 %v3594, %v7134
      %v7136 = vrot.slane %v7039, %v7135
      %v7137 = vlaneseq
      %v7138 = vshrl.u32 %v7137, 7
      %v7139 = vsub.s32 %v3599, %v7138
      %v7140 = vrot.slane %v7042, %v7139
      %v7141 = vsel %vm3604, %v7140, %v7136
      %v7142 = vlaneseq
      %v7143 = vshrl.u32 %v7142, 7
      %v7144 = vsub.s32 %v3606, %v7143
      %v7145 = vrot.slane %v7045, %v7144
      %v7146 = vsel %vm3611, %v7145, %v7141
      %v7147 = vlaneseq
      %v7148 = vshrl.u32 %v7147, 7
      %v7149 = vsub.s32 %v3613, %v7148
      %v7150 = vrot.slane %v7048, %v7149
      %v7151 = vsel %vm3618, %v7150, %v7146
      %v7152 = vlaneseq
      %v7153 = vshrl.u32 %v7152, 7
      %v7154 = vsub.s32 %v3620, %v7153
      %v7155 = vrot.slane %v7051, %v7154
      %v7156 = vsel %vm3625, %v7155, %v7151
      %v7157 = vlaneseq
      %v7158 = vshrl.u32 %v7157, 7
      %v7159 = vsub.s32 %v3627, %v7158
      %v7160 = vrot.slane %v7054, %v7159
      %v7161 = vsel %vm3632, %v7160, %v7156
      %v7162 = vlaneseq
      %v7163 = vshrl.u32 %v7162, 7
      %v7164 = vsub.s32 %v3634, %v7163
      %v7165 = vrot.slane %v7057, %v7164
      %v7166 = vsel %vm3639, %v7165, %v7161
      %v7167 = vlaneseq
      %v7168 = vshrl.u32 %v7167, 7
      %v7169 = vsub.s32 %v3641, %v7168
      %v7170 = vrot.slane %v7060, %v7169
      %v7171 = vsel %vm3646, %v7170, %v7166
      %v7172 = vlaneseq
      %v7173 = vshrl.u32 %v7172, 7
      %v7174 = vsub.s32 %v3648, %v7173
      %v7175 = vrot.slane %v7063, %v7174
      %v7176 = vsel %vm3653, %v7175, %v7171
      %v7177 = vlaneseq
      %v7178 = vshrl.u32 %v7177, 7
      %v7179 = vsub.s32 %v3655, %v7178
      %v7180 = vrot.slane %v7066, %v7179
      %v7181 = vsel %vm3660, %v7180, %v7176
      %v7182 = vlaneseq
      %v7183 = vshrl.u32 %v7182, 7
      %v7184 = vsub.s32 %v3662, %v7183
      %v7185 = vrot.slane %v7069, %v7184
      %v7186 = vsel %vm3667, %v7185, %v7181
      %v7187 = vlaneseq
      %v7188 = vshrl.u32 %v7187, 7
      %v7189 = vsub.s32 %v3669, %v7188
      %v7190 = vrot.slane %v7072, %v7189
      %v7191 = vsel %vm3674, %v7190, %v7186
      %v7192 = vlaneseq
      %v7193 = vshrl.u32 %v7192, 7
      %v7194 = vsub.s32 %v3676, %v7193
      %v7195 = vrot.slane %v7075, %v7194
      %v7196 = vsel %vm3681, %v7195, %v7191
      %v7197 = vlaneseq
      %v7198 = vshrl.u32 %v7197, 7
      %v7199 = vsub.s32 %v3683, %v7198
      %v7200 = vrot.slane %v7078, %v7199
      %v7201 = vsel %vm3688, %v7200, %v7196
      %v7202 = vlaneseq
      %v7203 = vshrl.u32 %v7202, 7
      %v7204 = vsub.s32 %v3690, %v7203
      %v7205 = vrot.slane %v7081, %v7204
      %v7206 = vsel %vm3695, %v7205, %v7201
      %v7207 = vlaneseq
      %v7208 = vshrl.u32 %v7207, 7
      %v7209 = vsub.s32 %v3697, %v7208
      %v7210 = vrot.slane %v7084, %v7209
      %v7211 = vsel %vm3702, %v7210, %v7206
      %v7212 = vlaneseq
      %v7213 = vshrl.u32 %v7212, 7
      %v7214 = vsub.s32 %v3594, %v7213
      %v7215 = vrot.slane %v7087, %v7214
      %v7216 = vlaneseq
      %v7217 = vshrl.u32 %v7216, 7
      %v7218 = vsub.s32 %v3599, %v7217
      %v7219 = vrot.slane %v7090, %v7218
      %v7220 = vsel %vm3604, %v7219, %v7215
      %v7221 = vlaneseq
      %v7222 = vshrl.u32 %v7221, 7
      %v7223 = vsub.s32 %v3606, %v7222
      %v7224 = vrot.slane %v7093, %v7223
      %v7225 = vsel %vm3611, %v7224, %v7220
      %v7226 = vlaneseq
      %v7227 = vshrl.u32 %v7226, 7
      %v7228 = vsub.s32 %v3613, %v7227
      %v7229 = vrot.slane %v7096, %v7228
      %v7230 = vsel %vm3618, %v7229, %v7225
      %v7231 = vlaneseq
      %v7232 = vshrl.u32 %v7231, 7
      %v7233 = vsub.s32 %v3620, %v7232
      %v7234 = vrot.slane %v7099, %v7233
      %v7235 = vsel %vm3625, %v7234, %v7230
      %v7236 = vlaneseq
      %v7237 = vshrl.u32 %v7236, 7
      %v7238 = vsub.s32 %v3627, %v7237
      %v7239 = vrot.slane %v7102, %v7238
      %v7240 = vsel %vm3632, %v7239, %v7235
      %v7241 = vlaneseq
      %v7242 = vshrl.u32 %v7241, 7
      %v7243 = vsub.s32 %v3634, %v7242
      %v7244 = vrot.slane %v7105, %v7243
      %v7245 = vsel %vm3639, %v7244, %v7240
      %v7246 = vlaneseq
      %v7247 = vshrl.u32 %v7246, 7
      %v7248 = vsub.s32 %v3641, %v7247
      %v7249 = vrot.slane %v7108, %v7248
      %v7250 = vsel %vm3646, %v7249, %v7245
      %v7251 = vlaneseq
      %v7252 = vshrl.u32 %v7251, 7
      %v7253 = vsub.s32 %v3648, %v7252
      %v7254 = vrot.slane %v7111, %v7253
      %v7255 = vsel %vm3653, %v7254, %v7250
      %v7256 = vlaneseq
      %v7257 = vshrl.u32 %v7256, 7
      %v7258 = vsub.s32 %v3655, %v7257
      %v7259 = vrot.slane %v7114, %v7258
      %v7260 = vsel %vm3660, %v7259, %v7255
      %v7261 = vlaneseq
      %v7262 = vshrl.u32 %v7261, 7
      %v7263 = vsub.s32 %v3662, %v7262
      %v7264 = vrot.slane %v7117, %v7263
      %v7265 = vsel %vm3667, %v7264, %v7260
      %v7266 = vlaneseq
      %v7267 = vshrl.u32 %v7266, 7
      %v7268 = vsub.s32 %v3669, %v7267
      %v7269 = vrot.slane %v7120, %v7268
      %v7270 = vsel %vm3674, %v7269, %v7265
      %v7271 = vlaneseq
      %v7272 = vshrl.u32 %v7271, 7
      %v7273 = vsub.s32 %v3676, %v7272
      %v7274 = vrot.slane %v7123, %v7273
      %v7275 = vsel %vm3681, %v7274, %v7270
      %v7276 = vlaneseq
      %v7277 = vshrl.u32 %v7276, 7
      %v7278 = vsub.s32 %v3683, %v7277
      %v7279 = vrot.slane %v7126, %v7278
      %v7280 = vsel %vm3688, %v7279, %v7275
      %v7281 = vlaneseq
      %v7282 = vshrl.u32 %v7281, 7
      %v7283 = vsub.s32 %v3690, %v7282
      %v7284 = vrot.slane %v7129, %v7283
      %v7285 = vsel %vm3695, %v7284, %v7280
      %v7286 = vlaneseq
      %v7287 = vshrl.u32 %v7286, 7
      %v7288 = vsub.s32 %v3697, %v7287
      %v7289 = vrot.slane %v7132, %v7288
      %v7290 = vsel %vm3702, %v7289, %v7285
      %v7291 = vcombine.low %v7211, %v7290
      %v7293 = vunpack.c.l.s4 1966171168
      %v7294 = vunpack.c.0.s8 %v7293
      %v7295 = vlaneseq
      %v7296 = vshrl.u32 %v7295, 7
      %v7297 = vsub.s32 %v7294, %v7296
      %v7298 = vrot.slane %v7291, %v7297
      %v7300 = vunpack.c.l.s4 1966171168
      %v7301 = vunpack.c.0.s8 %v7300
      %v7302 = vlaneseq
      %v7303 = vshrl.u32 %v7302, 7
      %v7304 = vsub.s32 %v7301, %v7303
      %v7305 = vrot.slane %v7298, %v7304
      %7307 = vst.msk [vmem:[%s218 + $0x2] sm:$0x3] %vm3802, %v7305
      %s7308 = smul.u32 4, %s16
      %p7309 = scmp.lt.s32.totalorder %s7308, 7
      %s7310 = scalar_select %p7309, %s7308, 7
      %s7311 = scalar_lea.vmem %s4, %s7310
      // Predicated region
      $region37: #{dssm_pallas.1} parent=35 // pred_check
        %p7312 = pneg %p123
      $region38: #{dssm_pallas.1} parent=35 // pred_check_branch
        %7314 = sbr.rel (%p7312) target = $region40
      $region39: #{dssm_pallas.1} parent=35 // pred_region
        %s7315 = smul.u32 4, %s16
      $region40: #{dssm_pallas.1} parent=35 // pred_fallthru
        _
    $region36: #{dssm_pallas.1} parent=5 // pred_fallthru
      _
    %p7316 = scmp.le.s32.totalorder 2, %s11
    // Predicated region
    $region41: #{dssm_pallas.1} parent=5 // pred_check
      %p7317 = pneg %p7316
    $region42: #{dssm_pallas.1} parent=5 // pred_check_branch
      %7319 = sbr.rel (%p7317) target = $region44
    $region43: #{dssm_pallas.1} parent=5 // pred_region
      %s7320 = ssub.s32 %s11, 2
      // Predicated region
      $region45: #{dssm_pallas.1} parent=43 // pred_check
        %p7321 = pneg %p129
      $region46: #{dssm_pallas.1} parent=43 // pred_check_branch
        %7323 = sbr.rel (%p7321) target = $region48
      $region47: #{dssm_pallas.1} parent=43 // pred_region
        %s7324 = smul.u32 4, %s17
        %p7325 = scmp.lt.s32.totalorder %s7324, 7
        %s7326 = scalar_select %p7325, %s7324, 7
        %s7327 = scalar_lea.vmem %s4, %s7326
      $region48: #{dssm_pallas.1} parent=43 // pred_fallthru
        _
    $region44: #{dssm_pallas.1} parent=5 // pred_fallthru
      _
  $region6: #{dssm_pallas.1} parent=0 // loop_footer
    %s15 = sadd.s32 1, %s11
  $region7: #{dssm_pallas.1} parent=0 // loop_footer_branch
    %10 = sbr.rel target = $region3
  $region8: #{dssm_pallas.1} parent=0 // loop_exit
    _

</llo_original>
